<compile_context>
chip_gen: v6e
topology: v6e:2x2x1
jax: 0.10.0
libtpu: 0.0.40
codegen_flags: <defaults>
</compile_context>

<pallas_src>
import functools

import jax
import jax.numpy as jnp
from jax.experimental import pallas as pl
from jax.experimental.pallas import tpu as pltpu

LANE = 128


# -----------------------------------------------------------------------------
# Per-batch fused kernel (one grid step == one batch)
# -----------------------------------------------------------------------------
def _patchfsl_kernel(hist_ref,    # (N, 288)   bf16  day history (single copy)
                     A_ref,       # (N, N)     f32   physical adjacency
                     mean_ref,    # (1, 128)   f32   per-batch mean (broadcast row)
                     std_ref,     # (1, 128)   f32   per-batch std  (broadcast row)
                     pkblk_ref,   # (288, P*K) bf16  block-diagonal pattern keys
                     gsum_ref,    # (P*K, P)   f32   patch-group sum indicator
                     gbc_ref,     # (P, P*K)   f32   patch-group broadcast indicator
                     pvs_ref,     # (P*K, C)   bf16  tiled pattern values (pre-scaled 1/P)
                     w1_ref,      # (C, C)     bf16  ReconstrucAdjNet
                     w2_ref,      # (C, C)     bf16
                     wh_ref,      # (288, C)   bf16  LT_model history projection
                     wg_ref,      # (C, C)     bf16  LT_model graph projection
                     wt_ref,      # (288, 128) bf16  ST temporal proj (only last 12 rows nonzero)
                     wgc1_ref,    # (128, 128) bf16  ST graph conv (forward adj), padded
                     wgc2_ref,    # (128, 128) bf16  ST graph conv (backward adj), padded
                     fc1a_ref,    # (128, 6C)  bf16  FC layer-1 slice for raw_emb (row-padded)
                     fc1b_ref,    # (C, 6C)    bf16  FC layer-1 slice for pattern
                     fc1c_ref,    # (C, 6C)    bf16  FC layer-1 slice for S
                     b1_ref,      # (1, 6C)    f32
                     fc2_ref,     # (6C, 128)  bf16  FC layer-2, lane-padded
                     b2_ref,      # (1, 128)   f32, lane-padded
                     out_ref,     # (N, 128)   prediction slab (first PRED lanes valid)
                     ax_ref):     # (N, 128)   Ax slab (first C lanes valid)
    f32, bf16 = jnp.float32, jnp.bfloat16
    relu = jax.nn.relu

    def mm(a, w):                               # bf16 MXU operands, f32 accumulation
        return jnp.dot(a.astype(bf16), w.astype(bf16), preferred_element_type=f32)

    def softmax_rows(x):                        # exact f32 softmax (feeds further matmuls)
        x = x - jnp.max(x, axis=-1, keepdims=True)
        ex = jnp.exp(x)
        return ex / jnp.sum(ex, axis=-1, keepdims=True)

    hist = hist_ref[...]                                           # (N, 288)

    # ---- Pattern encoder: grouped (per-patch) attention over K prototypes ------
    # Row-global max subtraction is exact for each K-lane softmax group.
    logits = mm(hist, pkblk_ref[...])                               # (N, P*K)
    e = jnp.exp(logits - jnp.max(logits, axis=-1, keepdims=True))   # f32
    denom = jnp.dot(e, gsum_ref[...], preferred_element_type=f32)   # (N, P) per-patch sums
    inv = pl.reciprocal(denom, approx=True)                         # EUP slot
    probs = e * jnp.dot(inv, gbc_ref[...], preferred_element_type=f32)  # (N, P*K)
    pattern = mm(probs, pvs_ref[...])                               # (N, C) mean over patches folded in

    # ---- per-node projections ---------------------------------------------------
    e1 = relu(mm(pattern, w1_ref[...]))                             # (N, C)
    e2 = relu(mm(pattern, w2_ref[...]))                             # (N, C)
    h_lt = relu(mm(hist, wh_ref[...]))                              # (N, C)
    h_t = relu(mm(hist, wt_ref[...]))                               # (N, 128); lanes >= C are 0
                                                                    # (== relu(raw_hour @ wt))

    # ---- adjacency reconstruction (exact division; feeds 3 downstream matmuls) --
    logits_a = jax.lax.dot_general(e1.astype(bf16), e2.astype(bf16),
                                   (((1,), (1,)), ((), ())),
                                   preferred_element_type=f32)      # e1 @ e2.T  (NT)
    A2 = softmax_rows(softmax_rows(logits_a) + A_ref[...])          # (N, N)

    # ---- long-term graph projection + ST residual graph conv --------------------
    S = relu(mm(mm(A2, h_lt), wg_ref[...]))                         # (N, C)
    fwd = mm(A2, h_t)                                               # (N, 128)  A_list[0] @ h
    bwd = jax.lax.dot_general(A2.astype(bf16), h_t.astype(bf16),
                              (((0,), (0,)), ((), ())),
                              preferred_element_type=f32)           # (N, 128)  A2.T @ h (TN, no transpose)
    raw_emb = relu(mm(fwd, wgc1_ref[...]) + mm(bwd, wgc2_ref[...]) + h_t)

    # ---- FCNet_Res head (concat-free: fc1 pre-split in wrapper) ------------------
    h_fc = relu(mm(raw_emb, fc1a_ref[...]) + mm(pattern, fc1b_ref[...])
                + mm(S, fc1c_ref[...]) + b1_ref[...])               # (N, 6C)
    out = mm(h_fc, fc2_ref[...]) + b2_ref[...]                      # (N, 128)

    # ---- un-normalise; single lane-dense store per output -----------------------
    out_ref[...] = (out * std_ref[...] + mean_ref[...]).astype(out_ref.dtype)
    ax_ref[...] = fwd.astype(ax_ref.dtype)


# -----------------------------------------------------------------------------
# Wrapper (layout plumbing / weight prep stays in plain JAX)
# -----------------------------------------------------------------------------
def patchfsl_forward(x, y, means, stds, A, params):
    """x: (B, N, T, F) with T >= 288; A: (N, N); means/stds: (B, 1, 1)."""
    (pk, pv, w1, w2, wh, wg, wt, wgc1, wgc2, fc1, b1, fc2, b2) = params
    B, N, T, F = x.shape
    K, D = pk.shape
    C = pv.shape[1]
    HIS = wh.shape[0]
    HID = fc1.shape[1]
    PRED = fc2.shape[1]
    P = HIS // D
    f32, bf16 = jnp.float32, jnp.bfloat16

    assert N % 8 == 0, "N must be a multiple of 8 (sublane alignment)"
    assert T >= HIS and HIS == P * D
    assert C <= LANE and PRED <= LANE and fc1.shape[0] == 3 * C

    # ---- inputs: single bf16 copy of the day history per node -------------------
    hist = x[:, :, -HIS:, 0].astype(bf16)                            # (B, N, 288)
    means_r = jnp.broadcast_to(means.reshape(B, 1, 1), (B, 1, LANE)).astype(f32)
    stds_r = jnp.broadcast_to(stds.reshape(B, 1, 1), (B, 1, LANE)).astype(f32)

    # ---- weight prep: bf16 MXU operands, structured matrices, lane padding ------
    eyeP = jnp.eye(P, dtype=f32)
    pk_blk = jnp.kron(eyeP, pk.T.astype(f32)).astype(bf16)           # (288, P*K) block-diag pk.T
    g_sum = jnp.kron(eyeP, jnp.ones((K, 1), f32))                    # (P*K, P) group-sum indicator
    g_bc = g_sum.T                                                   # (P, P*K) group-broadcast
    pv_stk = (jnp.tile(pv, (P, 1)) * (1.0 / P)).astype(bf16)         # (P*K, C) patch-mean folded in
    w1_b, w2_b, wh_b, wg_b = (w.astype(bf16) for w in (w1, w2, wh, wg))
    wt_big = jnp.zeros((HIS, LANE), bf16).at[HIS - D:, :C].set(wt.astype(bf16))
    wgc1_p = jnp.zeros((LANE, LANE), bf16).at[:C, :C].set(wgc1.astype(bf16))
    wgc2_p = jnp.zeros((LANE, LANE), bf16).at[:C, :C].set(wgc2.astype(bf16))
    fc1_a = jnp.zeros((LANE, HID), bf16).at[:C, :].set(fc1[:C].astype(bf16))
    fc1_b = fc1[C:2 * C].astype(bf16)
    fc1_c = fc1[2 * C:].astype(bf16)
    fc2_p = jnp.zeros((HID, LANE), bf16).at[:, :PRED].set(fc2.astype(bf16))
    b1_f = b1.astype(f32).reshape(1, HID)
    b2_p = jnp.zeros((1, LANE), f32).at[:, :PRED].set(b2.astype(f32).reshape(1, PRED))

    def const(shape):                     # weight resident across grid steps
        return pl.BlockSpec(shape, lambda b: tuple(0 for _ in shape))

    grid_spec = pltpu.PrefetchScalarGridSpec(
        num_scalar_prefetch=0,
        grid=(B,),
        in_specs=[
            pl.BlockSpec((None, N, HIS), lambda b: (b, 0, 0)),       # hist (per batch)
            const((N, N)),                                           # A
            pl.BlockSpec((None, 1, LANE), lambda b: (b, 0, 0)),      # mean row
            pl.BlockSpec((None, 1, LANE), lambda b: (b, 0, 0)),      # std row
            const((HIS, P * K)),                                     # pk_blk
            const((P * K, P)),                                       # g_sum
            const((P, P * K)),                                       # g_bc
            const((P * K, C)),                                       # pv_stk
            const((C, C)),                                           # w1
            const((C, C)),                                           # w2
            const((HIS, C)),                                         # wh
            const((C, C)),                                           # wg
            const((HIS, LANE)),                                      # wt_big
            const((LANE, LANE)),                                     # wgc1
            const((LANE, LANE)),                                     # wgc2
            const((LANE, HID)),                                      # fc1a
            const((C, HID)),                                         # fc1b
            const((C, HID)),                                         # fc1c
            const((1, HID)),                                         # b1
            const((HID, LANE)),                                      # fc2
            const((1, LANE)),                                        # b2
        ],
        out_specs=(
            pl.BlockSpec((None, N, LANE), lambda b: (b, 0, 0)),
            pl.BlockSpec((None, N, LANE), lambda b: (b, 0, 0)),
        ),
    )

    out_p, ax_p = pl.pallas_call(
        _patchfsl_kernel,
        out_shape=(
            jax.ShapeDtypeStruct((B, N, LANE), f32),
            jax.ShapeDtypeStruct((B, N, LANE), f32),
        ),
        grid_spec=grid_spec,
        compiler_params=pltpu.CompilerParams(
            dimension_semantics=("parallel",)),      # batches -> both TCs on v7x
    )(hist, A.astype(f32), means_r, stds_r,
      pk_blk, g_sum, g_bc, pv_stk,
      w1_b, w2_b, wh_b, wg_b, wt_big, wgc1_p, wgc2_p,
      fc1_a, fc1_b, fc1_c, b1_f, fc2_p, b2_p)

    return out_p[:, :, :PRED], y, ax_p[:, :, :C]


# -----------------------------------------------------------------------------
# Pure-JAX f32 reference of the same (simplified) forward pass
# -----------------------------------------------------------------------------
def patchfsl_reference(x, y, means, stds, A, params):
    (pk, pv, w1, w2, wh, wg, wt, wgc1, wgc2, fc1, b1, fc2, b2) = params
    B, N, T, F = x.shape
    HIS = wh.shape[0]
    x_p = jnp.transpose(x, (0, 1, 3, 2))
    raw = x_p[:, :, 0, -12:]
    hist = x_p[:, :, 0, -HIS:]
    H = hist.reshape(B, N, HIS // 12, 12)
    attn = jax.nn.softmax(jnp.einsum('bnpd,kd->bnpk', H, pk), axis=-1)
    pattern = jnp.einsum('bnpk,kc->bnpc', attn, pv).mean(axis=2)
    e1 = jax.nn.relu(pattern @ w1)
    e2 = jax.nn.relu(pattern @ w2)
    A_patch = jax.nn.softmax(jnp.einsum('bnc,bmc->bnm', e1, e2), axis=-1)
    A2 = jax.nn.softmax(A_patch + A[None], axis=-1)
    h_lt = jax.nn.relu(hist @ wh)
    S = jax.nn.relu(jnp.einsum('bnm,bmc->bnc', A2, h_lt) @ wg)
    h_t = jax.nn.relu(raw @ wt)
    fwd = jnp.einsum('bnm,bmc->bnc', A2, h_t)
    bwd = jnp.einsum('bmn,bmc->bnc', A2, h_t)
    raw_emb = jax.nn.relu(fwd @ wgc1 + bwd @ wgc2 + h_t)
    feats = jnp.concatenate([raw_emb, pattern, S], axis=-1)
    h_fc = jax.nn.relu(feats @ fc1 + b1)
    out = h_fc @ fc2 + b2
    return out * stds + means, y, fwd


# -----------------------------------------------------------------------------
# Deterministic parameter construction (synthetic; no checkpoint loading)
# -----------------------------------------------------------------------------
def make_params(key, *, C=32, K=16, PRED=12, HIS=288):
    ks = jax.random.split(key, 13)
    s = 0.1
    pk = jax.random.normal(ks[0], (K, 12), jnp.float32) * s
    pv = jax.random.normal(ks[1], (K, C), jnp.float32) * s
    w1 = jax.random.normal(ks[2], (C, C), jnp.float32) * s
    w2 = jax.random.normal(ks[3], (C, C), jnp.float32) * s
    wh = jax.random.normal(ks[4], (HIS, C), jnp.float32) * s
    wg = jax.random.normal(ks[5], (C, C), jnp.float32) * s
    wt = jax.random.normal(ks[6], (12, C), jnp.float32) * s
    wgc1 = jax.random.normal(ks[7], (C, C), jnp.float32) * s
    wgc2 = jax.random.normal(ks[8], (C, C), jnp.float32) * s
    fc1 = jax.random.normal(ks[9], (3 * C, 6 * C), jnp.float32) * s
    b1 = jax.random.normal(ks[10], (1, 6 * C), jnp.float32) * s
    fc2 = jax.random.normal(ks[11], (6 * C, PRED), jnp.float32) * s
    b2 = jax.random.normal(ks[12], (1, PRED), jnp.float32) * s
    return (pk, pv, w1, w2, wh, wg, wt, wgc1, wgc2, fc1, b1, fc2, b2)


if __name__ == "__main__":
    B, N, T, F = 2, 8, 288, 2
    C, K, PRED = 32, 16, 12

    key = jax.random.PRNGKey(0)
    k_x, k_y, k_a, k_p = jax.random.split(key, 4)

    x = jax.random.normal(k_x, (B, N, T, F), jnp.float32)
    y = jax.random.normal(k_y, (B, N, PRED), jnp.float32)
    A = jax.nn.softmax(jax.random.normal(k_a, (N, N), jnp.float32), axis=-1)
    means = jnp.full((B, 1, 1), 5.0, jnp.float32)
    stds = jnp.full((B, 1, 1), 2.0, jnp.float32)
    params = make_params(k_p, C=C, K=K, PRED=PRED, HIS=288)

    fwd_fn = jax.jit(functools.partial(patchfsl_forward, params=params))
    out, y_out, Ax = fwd_fn(x, y, means, stds, A)
    jax.block_until_ready((out, y_out, Ax))

    out_r, _, ax_r = patchfsl_reference(x, y, means, stds, A, params)

    assert out.shape == (B, N, PRED) and Ax.shape == (B, N, C)
    assert jnp.all(jnp.isfinite(out)) and jnp.all(jnp.isfinite(Ax))
    assert jnp.allclose(out, out_r, rtol=5e-2, atol=2e-1), \
        float(jnp.max(jnp.abs(out - out_r)))
    assert jnp.allclose(Ax, ax_r, rtol=5e-2, atol=2e-1), \
        float(jnp.max(jnp.abs(Ax - ax_r)))
    print("KERNEL_OK")
</pallas_src>

<mosaic_0001>
module attributes {stable_mosaic.version = 11 : i64} {
  func.func @_patchfsl_kernel(%arg0: i32, %arg1: memref<1x8x288xbf16, #tpu.memory_space<vmem>>, %arg2: memref<8x8xf32, #tpu.memory_space<vmem>>, %arg3: memref<1x1x128xf32, #tpu.memory_space<vmem>>, %arg4: memref<1x1x128xf32, #tpu.memory_space<vmem>>, %arg5: memref<288x384xbf16, #tpu.memory_space<vmem>>, %arg6: memref<384x24xf32, #tpu.memory_space<vmem>>, %arg7: memref<24x384xf32, #tpu.memory_space<vmem>>, %arg8: memref<384x32xbf16, #tpu.memory_space<vmem>>, %arg9: memref<32x32xbf16, #tpu.memory_space<vmem>>, %arg10: memref<32x32xbf16, #tpu.memory_space<vmem>>, %arg11: memref<288x32xbf16, #tpu.memory_space<vmem>>, %arg12: memref<32x32xbf16, #tpu.memory_space<vmem>>, %arg13: memref<288x128xbf16, #tpu.memory_space<vmem>>, %arg14: memref<128x128xbf16, #tpu.memory_space<vmem>>, %arg15: memref<128x128xbf16, #tpu.memory_space<vmem>>, %arg16: memref<128x192xbf16, #tpu.memory_space<vmem>>, %arg17: memref<32x192xbf16, #tpu.memory_space<vmem>>, %arg18: memref<32x192xbf16, #tpu.memory_space<vmem>>, %arg19: memref<1x192xf32, #tpu.memory_space<vmem>>, %arg20: memref<192x128xbf16, #tpu.memory_space<vmem>>, %arg21: memref<1x128xf32, #tpu.memory_space<vmem>>, %arg22: memref<1x8x128xf32, #tpu.memory_space<vmem>>, %arg23: memref<1x8x128xf32, #tpu.memory_space<vmem>>) attributes {dimension_semantics = [#tpu.dimension_semantics<parallel>], iteration_bounds = array<i64: 2>, scalar_prefetch = 0 : i64, scratch_operands = 0 : i64, tpu.core_type = #tpu.core_type<tc>, window_params = [{transform_indices = @transform_0, window_bounds = array<i64: 1, 8, 288>}, {pipeline_mode = #tpu.pipeline_mode<synchronous>, transform_indices = @transform_1, window_bounds = array<i64: 8, 8>}, {transform_indices = @transform_2, window_bounds = array<i64: 1, 1, 128>}, {transform_indices = @transform_3, window_bounds = array<i64: 1, 1, 128>}, {pipeline_mode = #tpu.pipeline_mode<synchronous>, transform_indices = @transform_4, window_bounds = array<i64: 288, 384>}, {pipeline_mode = #tpu.pipeline_mode<synchronous>, transform_indices = @transform_5, window_bounds = array<i64: 384, 24>}, {pipeline_mode = #tpu.pipeline_mode<synchronous>, transform_indices = @transform_6, window_bounds = array<i64: 24, 384>}, {pipeline_mode = #tpu.pipeline_mode<synchronous>, transform_indices = @transform_7, window_bounds = array<i64: 384, 32>}, {pipeline_mode = #tpu.pipeline_mode<synchronous>, transform_indices = @transform_8, window_bounds = array<i64: 32, 32>}, {pipeline_mode = #tpu.pipeline_mode<synchronous>, transform_indices = @transform_9, window_bounds = array<i64: 32, 32>}, {pipeline_mode = #tpu.pipeline_mode<synchronous>, transform_indices = @transform_10, window_bounds = array<i64: 288, 32>}, {pipeline_mode = #tpu.pipeline_mode<synchronous>, transform_indices = @transform_11, window_bounds = array<i64: 32, 32>}, {pipeline_mode = #tpu.pipeline_mode<synchronous>, transform_indices = @transform_12, window_bounds = array<i64: 288, 128>}, {pipeline_mode = #tpu.pipeline_mode<synchronous>, transform_indices = @transform_13, window_bounds = array<i64: 128, 128>}, {pipeline_mode = #tpu.pipeline_mode<synchronous>, transform_indices = @transform_14, window_bounds = array<i64: 128, 128>}, {pipeline_mode = #tpu.pipeline_mode<synchronous>, transform_indices = @transform_15, window_bounds = array<i64: 128, 192>}, {pipeline_mode = #tpu.pipeline_mode<synchronous>, transform_indices = @transform_16, window_bounds = array<i64: 32, 192>}, {pipeline_mode = #tpu.pipeline_mode<synchronous>, transform_indices = @transform_17, window_bounds = array<i64: 32, 192>}, {pipeline_mode = #tpu.pipeline_mode<synchronous>, transform_indices = @transform_18, window_bounds = array<i64: 1, 192>}, {pipeline_mode = #tpu.pipeline_mode<synchronous>, transform_indices = @transform_19, window_bounds = array<i64: 192, 128>}, {pipeline_mode = #tpu.pipeline_mode<synchronous>, transform_indices = @transform_20, window_bounds = array<i64: 1, 128>}, {transform_indices = @transform_21, window_bounds = array<i64: 1, 8, 128>}, {transform_indices = @transform_22, window_bounds = array<i64: 1, 8, 128>}]} {
    %c0 = arith.constant 0 : index
    %c0_0 = arith.constant 0 : index
    %c0_1 = arith.constant 0 : index
    %0 = vector.load %arg1[%c0, %c0_0, %c0_1] : memref<1x8x288xbf16, #tpu.memory_space<vmem>>, vector<1x8x288xbf16>
    %1 = vector.shape_cast %0 : vector<1x8x288xbf16> to vector<8x288xbf16>
    %c0_2 = arith.constant 0 : index
    %c0_3 = arith.constant 0 : index
    %2 = vector.load %arg5[%c0_2, %c0_3] : memref<288x384xbf16, #tpu.memory_space<vmem>>, vector<288x384xbf16>
    %cst = arith.constant dense<0.000000e+00> : vector<8x384xf32>
    %3 = tpu.matmul %1, %2, %cst {dimension_numbers = #tpu.dot_dimension_numbers<[1], [0], [0], [1], [0, 0, 1, 1], [], []>} : vector<8x288xbf16>, vector<288x384xbf16>, vector<8x384xf32> -> vector<8x384xf32>
    %cst_4 = arith.constant dense<0xFF800000> : vector<8xf32>
    %4 = vector.multi_reduction <maximumf>, %3, %cst_4 [1] : vector<8x384xf32> to vector<8xf32>
    %5 = vector.shape_cast %4 : vector<8xf32> to vector<8x1xf32>
    %6 = vector.broadcast %5 : vector<8x1xf32> to vector<8x384xf32>
    %7 = arith.subf %3, %6 : vector<8x384xf32>
    %8 = math.exp %7 : vector<8x384xf32>
    %c0_5 = arith.constant 0 : index
    %c0_6 = arith.constant 0 : index
    %9 = vector.load %arg6[%c0_5, %c0_6] : memref<384x24xf32, #tpu.memory_space<vmem>>, vector<384x24xf32>
    %cst_7 = arith.constant dense<0.000000e+00> : vector<8x24xf32>
    %10 = tpu.matmul %8, %9, %cst_7 {dimension_numbers = #tpu.dot_dimension_numbers<[1], [0], [0], [1], [0, 0, 1, 1], [], []>} : vector<8x384xf32>, vector<384x24xf32>, vector<8x24xf32> -> vector<8x24xf32>
    %11 = tpu.reciprocal %10 {approx = true} : vector<8x24xf32> -> vector<8x24xf32>
    %c0_8 = arith.constant 0 : index
    %c0_9 = arith.constant 0 : index
    %12 = vector.load %arg7[%c0_8, %c0_9] : memref<24x384xf32, #tpu.memory_space<vmem>>, vector<24x384xf32>
    %cst_10 = arith.constant dense<0.000000e+00> : vector<8x384xf32>
    %13 = tpu.matmul %11, %12, %cst_10 {dimension_numbers = #tpu.dot_dimension_numbers<[1], [0], [0], [1], [0, 0, 1, 1], [], []>} : vector<8x24xf32>, vector<24x384xf32>, vector<8x384xf32> -> vector<8x384xf32>
    %14 = arith.mulf %8, %13 : vector<8x384xf32>
    %c0_11 = arith.constant 0 : index
    %c0_12 = arith.constant 0 : index
    %15 = vector.load %arg8[%c0_11, %c0_12] : memref<384x32xbf16, #tpu.memory_space<vmem>>, vector<384x32xbf16>
    %16 = arith.truncf %14 : vector<8x384xf32> to vector<8x384xbf16>
    %cst_13 = arith.constant dense<0.000000e+00> : vector<8x32xf32>
    %17 = tpu.matmul %16, %15, %cst_13 {dimension_numbers = #tpu.dot_dimension_numbers<[1], [0], [0], [1], [0, 0, 1, 1], [], []>} : vector<8x384xbf16>, vector<384x32xbf16>, vector<8x32xf32> -> vector<8x32xf32>
    %c0_14 = arith.constant 0 : index
    %c0_15 = arith.constant 0 : index
    %18 = vector.load %arg9[%c0_14, %c0_15] : memref<32x32xbf16, #tpu.memory_space<vmem>>, vector<32x32xbf16>
    %19 = arith.truncf %17 : vector<8x32xf32> to vector<8x32xbf16>
    %cst_16 = arith.constant dense<0.000000e+00> : vector<8x32xf32>
    %20 = tpu.matmul %19, %18, %cst_16 {dimension_numbers = #tpu.dot_dimension_numbers<[1], [0], [0], [1], [0, 0, 1, 1], [], []>} : vector<8x32xbf16>, vector<32x32xbf16>, vector<8x32xf32> -> vector<8x32xf32>
    %cst_17 = arith.constant 0.000000e+00 : f32
    %21 = vector.broadcast %cst_17 : f32 to vector<8x32xf32>
    %22 = arith.maximumf %20, %21 : vector<8x32xf32>
    %c0_18 = arith.constant 0 : index
    %c0_19 = arith.constant 0 : index
    %23 = vector.load %arg10[%c0_18, %c0_19] : memref<32x32xbf16, #tpu.memory_space<vmem>>, vector<32x32xbf16>
    %24 = arith.truncf %17 : vector<8x32xf32> to vector<8x32xbf16>
    %cst_20 = arith.constant dense<0.000000e+00> : vector<8x32xf32>
    %25 = tpu.matmul %24, %23, %cst_20 {dimension_numbers = #tpu.dot_dimension_numbers<[1], [0], [0], [1], [0, 0, 1, 1], [], []>} : vector<8x32xbf16>, vector<32x32xbf16>, vector<8x32xf32> -> vector<8x32xf32>
    %cst_21 = arith.constant 0.000000e+00 : f32
    %26 = vector.broadcast %cst_21 : f32 to vector<8x32xf32>
    %27 = arith.maximumf %25, %26 : vector<8x32xf32>
    %c0_22 = arith.constant 0 : index
    %c0_23 = arith.constant 0 : index
    %28 = vector.load %arg11[%c0_22, %c0_23] : memref<288x32xbf16, #tpu.memory_space<vmem>>, vector<288x32xbf16>
    %cst_24 = arith.constant dense<0.000000e+00> : vector<8x32xf32>
    %29 = tpu.matmul %1, %28, %cst_24 {dimension_numbers = #tpu.dot_dimension_numbers<[1], [0], [0], [1], [0, 0, 1, 1], [], []>} : vector<8x288xbf16>, vector<288x32xbf16>, vector<8x32xf32> -> vector<8x32xf32>
    %cst_25 = arith.constant 0.000000e+00 : f32
    %30 = vector.broadcast %cst_25 : f32 to vector<8x32xf32>
    %31 = arith.maximumf %29, %30 : vector<8x32xf32>
    %c0_26 = arith.constant 0 : index
    %c0_27 = arith.constant 0 : index
    %32 = vector.load %arg13[%c0_26, %c0_27] : memref<288x128xbf16, #tpu.memory_space<vmem>>, vector<288x128xbf16>
    %cst_28 = arith.constant dense<0.000000e+00> : vector<8x128xf32>
    %33 = tpu.matmul %1, %32, %cst_28 {dimension_numbers = #tpu.dot_dimension_numbers<[1], [0], [0], [1], [0, 0, 1, 1], [], []>} : vector<8x288xbf16>, vector<288x128xbf16>, vector<8x128xf32> -> vector<8x128xf32>
    %cst_29 = arith.constant 0.000000e+00 : f32
    %34 = vector.broadcast %cst_29 : f32 to vector<8x128xf32>
    %35 = arith.maximumf %33, %34 : vector<8x128xf32>
    %36 = arith.truncf %22 : vector<8x32xf32> to vector<8x32xbf16>
    %37 = arith.truncf %27 : vector<8x32xf32> to vector<8x32xbf16>
    %cst_30 = arith.constant dense<0.000000e+00> : vector<8x8xf32>
    %38 = tpu.matmul %36, %37, %cst_30 {dimension_numbers = #tpu.dot_dimension_numbers<[1], [1], [0], [0], [0, 0, 1, 0], [], []>} : vector<8x32xbf16>, vector<8x32xbf16>, vector<8x8xf32> -> vector<8x8xf32>
    %cst_31 = arith.constant dense<0xFF800000> : vector<8xf32>
    %39 = vector.multi_reduction <maximumf>, %38, %cst_31 [1] : vector<8x8xf32> to vector<8xf32>
    %40 = vector.shape_cast %39 : vector<8xf32> to vector<8x1xf32>
    %41 = vector.broadcast %40 : vector<8x1xf32> to vector<8x8xf32>
    %42 = arith.subf %38, %41 : vector<8x8xf32>
    %43 = math.exp %42 : vector<8x8xf32>
    %cst_32 = arith.constant dense<0.000000e+00> : vector<8xf32>
    %44 = vector.multi_reduction <add>, %43, %cst_32 [1] : vector<8x8xf32> to vector<8xf32>
    %45 = vector.shape_cast %44 : vector<8xf32> to vector<8x1xf32>
    %46 = vector.broadcast %45 : vector<8x1xf32> to vector<8x8xf32>
    %47 = arith.divf %43, %46 : vector<8x8xf32>
    %c0_33 = arith.constant 0 : index
    %c0_34 = arith.constant 0 : index
    %48 = vector.load %arg2[%c0_33, %c0_34] : memref<8x8xf32, #tpu.memory_space<vmem>>, vector<8x8xf32>
    %49 = arith.addf %47, %48 : vector<8x8xf32>
    %cst_35 = arith.constant dense<0xFF800000> : vector<8xf32>
    %50 = vector.multi_reduction <maximumf>, %49, %cst_35 [1] : vector<8x8xf32> to vector<8xf32>
    %51 = vector.shape_cast %50 : vector<8xf32> to vector<8x1xf32>
    %52 = vector.broadcast %51 : vector<8x1xf32> to vector<8x8xf32>
    %53 = arith.subf %49, %52 : vector<8x8xf32>
    %54 = math.exp %53 : vector<8x8xf32>
    %cst_36 = arith.constant dense<0.000000e+00> : vector<8xf32>
    %55 = vector.multi_reduction <add>, %54, %cst_36 [1] : vector<8x8xf32> to vector<8xf32>
    %56 = vector.shape_cast %55 : vector<8xf32> to vector<8x1xf32>
    %57 = vector.broadcast %56 : vector<8x1xf32> to vector<8x8xf32>
    %58 = arith.divf %54, %57 : vector<8x8xf32>
    %59 = arith.truncf %58 : vector<8x8xf32> to vector<8x8xbf16>
    %60 = arith.truncf %31 : vector<8x32xf32> to vector<8x32xbf16>
    %cst_37 = arith.constant dense<0.000000e+00> : vector<8x32xf32>
    %61 = tpu.matmul %59, %60, %cst_37 {dimension_numbers = #tpu.dot_dimension_numbers<[1], [0], [0], [1], [0, 0, 1, 1], [], []>} : vector<8x8xbf16>, vector<8x32xbf16>, vector<8x32xf32> -> vector<8x32xf32>
    %c0_38 = arith.constant 0 : index
    %c0_39 = arith.constant 0 : index
    %62 = vector.load %arg12[%c0_38, %c0_39] : memref<32x32xbf16, #tpu.memory_space<vmem>>, vector<32x32xbf16>
    %63 = arith.truncf %61 : vector<8x32xf32> to vector<8x32xbf16>
    %cst_40 = arith.constant dense<0.000000e+00> : vector<8x32xf32>
    %64 = tpu.matmul %63, %62, %cst_40 {dimension_numbers = #tpu.dot_dimension_numbers<[1], [0], [0], [1], [0, 0, 1, 1], [], []>} : vector<8x32xbf16>, vector<32x32xbf16>, vector<8x32xf32> -> vector<8x32xf32>
    %cst_41 = arith.constant 0.000000e+00 : f32
    %65 = vector.broadcast %cst_41 : f32 to vector<8x32xf32>
    %66 = arith.maximumf %64, %65 : vector<8x32xf32>
    %67 = arith.truncf %58 : vector<8x8xf32> to vector<8x8xbf16>
    %68 = arith.truncf %35 : vector<8x128xf32> to vector<8x128xbf16>
    %cst_42 = arith.constant dense<0.000000e+00> : vector<8x128xf32>
    %69 = tpu.matmul %67, %68, %cst_42 {dimension_numbers = #tpu.dot_dimension_numbers<[1], [0], [0], [1], [0, 0, 1, 1], [], []>} : vector<8x8xbf16>, vector<8x128xbf16>, vector<8x128xf32> -> vector<8x128xf32>
    %70 = arith.truncf %58 : vector<8x8xf32> to vector<8x8xbf16>
    %71 = arith.truncf %35 : vector<8x128xf32> to vector<8x128xbf16>
    %cst_43 = arith.constant dense<0.000000e+00> : vector<8x128xf32>
    %72 = tpu.matmul %70, %71, %cst_43 {dimension_numbers = #tpu.dot_dimension_numbers<[0], [0], [1], [1], [0, 1, 1, 1], [], []>} : vector<8x8xbf16>, vector<8x128xbf16>, vector<8x128xf32> -> vector<8x128xf32>
    %c0_44 = arith.constant 0 : index
    %c0_45 = arith.constant 0 : index
    %73 = vector.load %arg14[%c0_44, %c0_45] : memref<128x128xbf16, #tpu.memory_space<vmem>>, vector<128x128xbf16>
    %74 = arith.truncf %69 : vector<8x128xf32> to vector<8x128xbf16>
    %cst_46 = arith.constant dense<0.000000e+00> : vector<8x128xf32>
    %75 = tpu.matmul %74, %73, %cst_46 {dimension_numbers = #tpu.dot_dimension_numbers<[1], [0], [0], [1], [0, 0, 1, 1], [], []>} : vector<8x128xbf16>, vector<128x128xbf16>, vector<8x128xf32> -> vector<8x128xf32>
    %c0_47 = arith.constant 0 : index
    %c0_48 = arith.constant 0 : index
    %76 = vector.load %arg15[%c0_47, %c0_48] : memref<128x128xbf16, #tpu.memory_space<vmem>>, vector<128x128xbf16>
    %77 = arith.truncf %72 : vector<8x128xf32> to vector<8x128xbf16>
    %cst_49 = arith.constant dense<0.000000e+00> : vector<8x128xf32>
    %78 = tpu.matmul %77, %76, %cst_49 {dimension_numbers = #tpu.dot_dimension_numbers<[1], [0], [0], [1], [0, 0, 1, 1], [], []>} : vector<8x128xbf16>, vector<128x128xbf16>, vector<8x128xf32> -> vector<8x128xf32>
    %79 = arith.addf %75, %78 : vector<8x128xf32>
    %80 = arith.addf %79, %35 : vector<8x128xf32>
    %cst_50 = arith.constant 0.000000e+00 : f32
    %81 = vector.broadcast %cst_50 : f32 to vector<8x128xf32>
    %82 = arith.maximumf %80, %81 : vector<8x128xf32>
    %c0_51 = arith.constant 0 : index
    %c0_52 = arith.constant 0 : index
    %83 = vector.load %arg16[%c0_51, %c0_52] : memref<128x192xbf16, #tpu.memory_space<vmem>>, vector<128x192xbf16>
    %84 = arith.truncf %82 : vector<8x128xf32> to vector<8x128xbf16>
    %cst_53 = arith.constant dense<0.000000e+00> : vector<8x192xf32>
    %85 = tpu.matmul %84, %83, %cst_53 {dimension_numbers = #tpu.dot_dimension_numbers<[1], [0], [0], [1], [0, 0, 1, 1], [], []>} : vector<8x128xbf16>, vector<128x192xbf16>, vector<8x192xf32> -> vector<8x192xf32>
    %c0_54 = arith.constant 0 : index
    %c0_55 = arith.constant 0 : index
    %86 = vector.load %arg17[%c0_54, %c0_55] : memref<32x192xbf16, #tpu.memory_space<vmem>>, vector<32x192xbf16>
    %87 = arith.truncf %17 : vector<8x32xf32> to vector<8x32xbf16>
    %cst_56 = arith.constant dense<0.000000e+00> : vector<8x192xf32>
    %88 = tpu.matmul %87, %86, %cst_56 {dimension_numbers = #tpu.dot_dimension_numbers<[1], [0], [0], [1], [0, 0, 1, 1], [], []>} : vector<8x32xbf16>, vector<32x192xbf16>, vector<8x192xf32> -> vector<8x192xf32>
    %89 = arith.addf %85, %88 : vector<8x192xf32>
    %c0_57 = arith.constant 0 : index
    %c0_58 = arith.constant 0 : index
    %90 = vector.load %arg18[%c0_57, %c0_58] : memref<32x192xbf16, #tpu.memory_space<vmem>>, vector<32x192xbf16>
    %91 = arith.truncf %66 : vector<8x32xf32> to vector<8x32xbf16>
    %cst_59 = arith.constant dense<0.000000e+00> : vector<8x192xf32>
    %92 = tpu.matmul %91, %90, %cst_59 {dimension_numbers = #tpu.dot_dimension_numbers<[1], [0], [0], [1], [0, 0, 1, 1], [], []>} : vector<8x32xbf16>, vector<32x192xbf16>, vector<8x192xf32> -> vector<8x192xf32>
    %93 = arith.addf %89, %92 : vector<8x192xf32>
    %c0_60 = arith.constant 0 : index
    %c0_61 = arith.constant 0 : index
    %94 = vector.load %arg19[%c0_60, %c0_61] : memref<1x192xf32, #tpu.memory_space<vmem>>, vector<1x192xf32>
    %95 = vector.broadcast %94 : vector<1x192xf32> to vector<8x192xf32>
    %96 = arith.addf %93, %95 : vector<8x192xf32>
    %cst_62 = arith.constant 0.000000e+00 : f32
    %97 = vector.broadcast %cst_62 : f32 to vector<8x192xf32>
    %98 = arith.maximumf %96, %97 : vector<8x192xf32>
    %c0_63 = arith.constant 0 : index
    %c0_64 = arith.constant 0 : index
    %99 = vector.load %arg20[%c0_63, %c0_64] : memref<192x128xbf16, #tpu.memory_space<vmem>>, vector<192x128xbf16>
    %100 = arith.truncf %98 : vector<8x192xf32> to vector<8x192xbf16>
    %cst_65 = arith.constant dense<0.000000e+00> : vector<8x128xf32>
    %101 = tpu.matmul %100, %99, %cst_65 {dimension_numbers = #tpu.dot_dimension_numbers<[1], [0], [0], [1], [0, 0, 1, 1], [], []>} : vector<8x192xbf16>, vector<192x128xbf16>, vector<8x128xf32> -> vector<8x128xf32>
    %c0_66 = arith.constant 0 : index
    %c0_67 = arith.constant 0 : index
    %102 = vector.load %arg21[%c0_66, %c0_67] : memref<1x128xf32, #tpu.memory_space<vmem>>, vector<1x128xf32>
    %103 = vector.broadcast %102 : vector<1x128xf32> to vector<8x128xf32>
    %104 = arith.addf %101, %103 : vector<8x128xf32>
    %c0_68 = arith.constant 0 : index
    %c0_69 = arith.constant 0 : index
    %c0_70 = arith.constant 0 : index
    %105 = vector.load %arg4[%c0_68, %c0_69, %c0_70] : memref<1x1x128xf32, #tpu.memory_space<vmem>>, vector<1x1x128xf32>
    %106 = vector.shape_cast %105 : vector<1x1x128xf32> to vector<1x128xf32>
    %107 = vector.broadcast %106 : vector<1x128xf32> to vector<8x128xf32>
    %108 = arith.mulf %104, %107 : vector<8x128xf32>
    %c0_71 = arith.constant 0 : index
    %c0_72 = arith.constant 0 : index
    %c0_73 = arith.constant 0 : index
    %109 = vector.load %arg3[%c0_71, %c0_72, %c0_73] : memref<1x1x128xf32, #tpu.memory_space<vmem>>, vector<1x1x128xf32>
    %110 = vector.shape_cast %109 : vector<1x1x128xf32> to vector<1x128xf32>
    %111 = vector.broadcast %110 : vector<1x128xf32> to vector<8x128xf32>
    %112 = arith.addf %108, %111 : vector<8x128xf32>
    %c0_74 = arith.constant 0 : index
    %c0_75 = arith.constant 0 : index
    %c0_76 = arith.constant 0 : index
    %113 = vector.load %arg22[%c0_74, %c0_75, %c0_76] : memref<1x8x128xf32, #tpu.memory_space<vmem>>, vector<1x8x128xf32>
    %114 = vector.shape_cast %113 : vector<1x8x128xf32> to vector<8x128xf32>
    %115 = vector.shape_cast %112 : vector<8x128xf32> to vector<1x8x128xf32>
    tpu.vector_store %arg22[%c0_74, %c0_75, %c0_76], %115 {strides = array<i32>} : memref<1x8x128xf32, #tpu.memory_space<vmem>>, vector<1x8x128xf32>,
    %c0_77 = arith.constant 0 : index
    %c0_78 = arith.constant 0 : index
    %c0_79 = arith.constant 0 : index
    %116 = vector.load %arg23[%c0_77, %c0_78, %c0_79] : memref<1x8x128xf32, #tpu.memory_space<vmem>>, vector<1x8x128xf32>
    %117 = vector.shape_cast %116 : vector<1x8x128xf32> to vector<8x128xf32>
    %118 = vector.shape_cast %69 : vector<8x128xf32> to vector<1x8x128xf32>
    tpu.vector_store %arg23[%c0_77, %c0_78, %c0_79], %118 {strides = array<i32>} : memref<1x8x128xf32, #tpu.memory_space<vmem>>, vector<1x8x128xf32>,
    return
  }
  func.func @transform_0(%arg0: i32) -> (i32, i32, i32) {
    %c0_i32 = arith.constant 0 : i32
    %c0_i32_0 = arith.constant 0 : i32
    %c0_i32_1 = arith.constant 0 : i32
    return %arg0, %c0_i32, %c0_i32_0 : i32, i32, i32
  }
  func.func @transform_1(%arg0: i32) -> (i32, i32) {
    %c0_i32 = arith.constant 0 : i32
    %c0_i32_0 = arith.constant 0 : i32
    %c0_i32_1 = arith.constant 0 : i32
    return %c0_i32, %c0_i32_0 : i32, i32
  }
  func.func @transform_2(%arg0: i32) -> (i32, i32, i32) {
    %c0_i32 = arith.constant 0 : i32
    %c0_i32_0 = arith.constant 0 : i32
    %c0_i32_1 = arith.constant 0 : i32
    return %arg0, %c0_i32, %c0_i32_0 : i32, i32, i32
  }
  func.func @transform_3(%arg0: i32) -> (i32, i32, i32) {
    %c0_i32 = arith.constant 0 : i32
    %c0_i32_0 = arith.constant 0 : i32
    %c0_i32_1 = arith.constant 0 : i32
    return %arg0, %c0_i32, %c0_i32_0 : i32, i32, i32
  }
  func.func @transform_4(%arg0: i32) -> (i32, i32) {
    %c0_i32 = arith.constant 0 : i32
    %c0_i32_0 = arith.constant 0 : i32
    %c0_i32_1 = arith.constant 0 : i32
    return %c0_i32, %c0_i32_0 : i32, i32
  }
  func.func @transform_5(%arg0: i32) -> (i32, i32) {
    %c0_i32 = arith.constant 0 : i32
    %c0_i32_0 = arith.constant 0 : i32
    %c0_i32_1 = arith.constant 0 : i32
    return %c0_i32, %c0_i32_0 : i32, i32
  }
  func.func @transform_6(%arg0: i32) -> (i32, i32) {
    %c0_i32 = arith.constant 0 : i32
    %c0_i32_0 = arith.constant 0 : i32
    %c0_i32_1 = arith.constant 0 : i32
    return %c0_i32, %c0_i32_0 : i32, i32
  }
  func.func @transform_7(%arg0: i32) -> (i32, i32) {
    %c0_i32 = arith.constant 0 : i32
    %c0_i32_0 = arith.constant 0 : i32
    %c0_i32_1 = arith.constant 0 : i32
    return %c0_i32, %c0_i32_0 : i32, i32
  }
  func.func @transform_8(%arg0: i32) -> (i32, i32) {
    %c0_i32 = arith.constant 0 : i32
    %c0_i32_0 = arith.constant 0 : i32
    %c0_i32_1 = arith.constant 0 : i32
    return %c0_i32, %c0_i32_0 : i32, i32
  }
  func.func @transform_9(%arg0: i32) -> (i32, i32) {
    %c0_i32 = arith.constant 0 : i32
    %c0_i32_0 = arith.constant 0 : i32
    %c0_i32_1 = arith.constant 0 : i32
    return %c0_i32, %c0_i32_0 : i32, i32
  }
  func.func @transform_10(%arg0: i32) -> (i32, i32) {
    %c0_i32 = arith.constant 0 : i32
    %c0_i32_0 = arith.constant 0 : i32
    %c0_i32_1 = arith.constant 0 : i32
    return %c0_i32, %c0_i32_0 : i32, i32
  }
  func.func @transform_11(%arg0: i32) -> (i32, i32) {
    %c0_i32 = arith.constant 0 : i32
    %c0_i32_0 = arith.constant 0 : i32
    %c0_i32_1 = arith.constant 0 : i32
    return %c0_i32, %c0_i32_0 : i32, i32
  }
  func.func @transform_12(%arg0: i32) -> (i32, i32) {
    %c0_i32 = arith.constant 0 : i32
    %c0_i32_0 = arith.constant 0 : i32
    %c0_i32_1 = arith.constant 0 : i32
    return %c0_i32, %c0_i32_0 : i32, i32
  }
  func.func @transform_13(%arg0: i32) -> (i32, i32) {
    %c0_i32 = arith.constant 0 : i32
    %c0_i32_0 = arith.constant 0 : i32
    %c0_i32_1 = arith.constant 0 : i32
    return %c0_i32, %c0_i32_0 : i32, i32
  }
  func.func @transform_14(%arg0: i32) -> (i32, i32) {
    %c0_i32 = arith.constant 0 : i32
    %c0_i32_0 = arith.constant 0 : i32
    %c0_i32_1 = arith.constant 0 : i32
    return %c0_i32, %c0_i32_0 : i32, i32
  }
  func.func @transform_15(%arg0: i32) -> (i32, i32) {
    %c0_i32 = arith.constant 0 : i32
    %c0_i32_0 = arith.constant 0 : i32
    %c0_i32_1 = arith.constant 0 : i32
    return %c0_i32, %c0_i32_0 : i32, i32
  }
  func.func @transform_16(%arg0: i32) -> (i32, i32) {
    %c0_i32 = arith.constant 0 : i32
    %c0_i32_0 = arith.constant 0 : i32
    %c0_i32_1 = arith.constant 0 : i32
    return %c0_i32, %c0_i32_0 : i32, i32
  }
  func.func @transform_17(%arg0: i32) -> (i32, i32) {
    %c0_i32 = arith.constant 0 : i32
    %c0_i32_0 = arith.constant 0 : i32
    %c0_i32_1 = arith.constant 0 : i32
    return %c0_i32, %c0_i32_0 : i32, i32
  }
  func.func @transform_18(%arg0: i32) -> (i32, i32) {
    %c0_i32 = arith.constant 0 : i32
    %c0_i32_0 = arith.constant 0 : i32
    %c0_i32_1 = arith.constant 0 : i32
    return %c0_i32, %c0_i32_0 : i32, i32
  }
  func.func @transform_19(%arg0: i32) -> (i32, i32) {
    %c0_i32 = arith.constant 0 : i32
    %c0_i32_0 = arith.constant 0 : i32
    %c0_i32_1 = arith.constant 0 : i32
    return %c0_i32, %c0_i32_0 : i32, i32
  }
  func.func @transform_20(%arg0: i32) -> (i32, i32) {
    %c0_i32 = arith.constant 0 : i32
    %c0_i32_0 = arith.constant 0 : i32
    %c0_i32_1 = arith.constant 0 : i32
    return %c0_i32, %c0_i32_0 : i32, i32
  }
  func.func @transform_21(%arg0: i32) -> (i32, i32, i32) {
    %c0_i32 = arith.constant 0 : i32
    %c0_i32_0 = arith.constant 0 : i32
    %c0_i32_1 = arith.constant 0 : i32
    return %arg0, %c0_i32, %c0_i32_0 : i32, i32, i32
  }
  func.func @transform_22(%arg0: i32) -> (i32, i32, i32) {
    %c0_i32 = arith.constant 0 : i32
    %c0_i32_0 = arith.constant 0 : i32
    %c0_i32_1 = arith.constant 0 : i32
    return %arg0, %c0_i32, %c0_i32_0 : i32, i32, i32
  }
}

</mosaic_0001>

<llo_original>
// kernel: patchfsl_forward.1
$region0: #{patchfsl_forward.1}
  #allocation0 [shape = 'u32[]', space=smem, size = 0x4, offset = 0x4, fixed_abs, tag = 'smem constant byte address 0x4 - core index']
  #allocation1 [shape = 'u32[144,128]{1,0:T(1,128)}', space=vmem, size = 0x12000, scoped, tag = 'internal scratch']
  %s0 = inlined_call_operand.vmem [shape: bf16[2,8,288], index: 0, kind: input, shape index: {}]
  %s1 = inlined_call_operand.vmem [shape: f32[8,8], index: 1, kind: input, shape index: {}]
  %s2 = inlined_call_operand.vmem [shape: f32[2,1,128], index: 2, kind: input, shape index: {}]
  %s3 = inlined_call_operand.vmem [shape: f32[2,1,128], index: 3, kind: input, shape index: {}]
  %s4 = inlined_call_operand.vmem [shape: bf16[288,384], index: 4, kind: input, shape index: {}]
  %s5 = inlined_call_operand.vmem [shape: f32[384,24], index: 5, kind: input, shape index: {}]
  %s6 = inlined_call_operand.vmem [shape: f32[24,384], index: 6, kind: input, shape index: {}]
  %s7 = inlined_call_operand.vmem [shape: bf16[384,32], index: 7, kind: input, shape index: {}]
  %s8 = inlined_call_operand.vmem [shape: bf16[32,32], index: 8, kind: input, shape index: {}]
  %s9 = inlined_call_operand.vmem [shape: bf16[32,32], index: 9, kind: input, shape index: {}]
  %s10 = inlined_call_operand.vmem [shape: bf16[288,32], index: 10, kind: input, shape index: {}]
  %s11 = inlined_call_operand.vmem [shape: bf16[32,32], index: 11, kind: input, shape index: {}]
  %s12 = inlined_call_operand.vmem [shape: bf16[288,128], index: 12, kind: input, shape index: {}]
  %s13 = inlined_call_operand.vmem [shape: bf16[128,128], index: 13, kind: input, shape index: {}]
  %s14 = inlined_call_operand.vmem [shape: bf16[128,128], index: 14, kind: input, shape index: {}]
  %s15 = inlined_call_operand.vmem [shape: bf16[128,192], index: 15, kind: input, shape index: {}]
  %s16 = inlined_call_operand.vmem [shape: bf16[32,192], index: 16, kind: input, shape index: {}]
  %s17 = inlined_call_operand.vmem [shape: bf16[32,192], index: 17, kind: input, shape index: {}]
  %s18 = inlined_call_operand.vmem [shape: f32[1,192], index: 18, kind: input, shape index: {}]
  %s19 = inlined_call_operand.vmem [shape: bf16[192,128], index: 19, kind: input, shape index: {}]
  %s20 = inlined_call_operand.vmem [shape: f32[1,128], index: 20, kind: input, shape index: {}]
  %s21 = inlined_call_operand.hbm [shape: f32[2,8,128], index: 21, kind: output, shape index: {0}]
  %s22 = inlined_call_operand.hbm [shape: f32[2,8,128], index: 22, kind: output, shape index: {1}]
  %23 = xla_tuple %s21, %s22
  %s24 = sld [smem:[#allocation0]]
  $region125: #{patchfsl_forward.1} parent=0
    _
  %s26 = ssub.s32 1, %s24
  %s27 = scalar_select 0, %s26, %s24
  $region1: #{patchfsl_forward.1} parent=0
    #allocation2 [shape = 'u8[8192]{0}', space=vmem, size = 0x2000, scoped, tag = 'output window, operand 0']
    #allocation3 [shape = 's32[2]{0}', space=sflag, size = 0x8, scoped, tag = 'scoped memory for patchfsl_forward.1']
    #allocation4 [shape = 'u8[8192]{0}', space=vmem, size = 0x2000, scoped, tag = 'output window, operand 1']
    #allocation5 [shape = 's32[2]{0}', space=sflag, size = 0x8, scoped, tag = 'scoped memory for patchfsl_forward.1']
    %28 = vsyncpa [#allocation3], 0
    %s29 = scalar_lea.sflag [#allocation3], 1
    %30 = vsyncpa %s29, 0
    %31 = vsyncpa [#allocation5], 0
    %s32 = scalar_lea.sflag [#allocation5], 1
    %33 = vsyncpa %s32, 0
    loop: start=0, step=1, limit=4
    $region2: #{patchfsl_forward.1} parent=1 // loop_pre_header
      _
    $region3: #{patchfsl_forward.1} parent=1 // loop_header
      %s35 = sphi 0, %s39
      %p36 = scmp.ge.s32.totalorder %s35, 4
      %s45 = sphi 0, %s47
      %s48 = sphi 0, %s45
      %s49 = sphi 0, %s48
      %s65 = sphi 0, %s49
      %s69 = sphi 0, %s69
      %s71 = sphi 0, %s69
      %s72 = sphi 0, %s71
      %s86 = sphi 0, %s72
      %s92 = sphi 0, %s94
      %s95 = sphi 0, %s92
      %s96 = sphi 0, %s95
      %s112 = sphi 0, %s96
      %s118 = sphi 0, %s120
      %s121 = sphi 0, %s118
      %s122 = sphi 0, %s121
      %s138 = sphi 0, %s122
      %s142 = sphi 0, %s142
      %s144 = sphi 0, %s142
      %s145 = sphi 0, %s144
      %s159 = sphi 0, %s145
      %s163 = sphi 0, %s163
      %s165 = sphi 0, %s163
      %s166 = sphi 0, %s165
      %s180 = sphi 0, %s166
      %s184 = sphi 0, %s184
      %s186 = sphi 0, %s184
      %s187 = sphi 0, %s186
      %s201 = sphi 0, %s187
      %s205 = sphi 0, %s205
      %s207 = sphi 0, %s205
      %s208 = sphi 0, %s207
      %s222 = sphi 0, %s208
      %s226 = sphi 0, %s226
      %s228 = sphi 0, %s226
      %s229 = sphi 0, %s228
      %s243 = sphi 0, %s229
      %s247 = sphi 0, %s247
      %s249 = sphi 0, %s247
      %s250 = sphi 0, %s249
      %s264 = sphi 0, %s250
      %s268 = sphi 0, %s268
      %s270 = sphi 0, %s268
      %s271 = sphi 0, %s270
      %s285 = sphi 0, %s271
      %s289 = sphi 0, %s289
      %s291 = sphi 0, %s289
      %s292 = sphi 0, %s291
      %s306 = sphi 0, %s292
      %s310 = sphi 0, %s310
      %s312 = sphi 0, %s310
      %s313 = sphi 0, %s312
      %s327 = sphi 0, %s313
      %s331 = sphi 0, %s331
      %s333 = sphi 0, %s331
      %s334 = sphi 0, %s333
      %s348 = sphi 0, %s334
      %s352 = sphi 0, %s352
      %s354 = sphi 0, %s352
      %s355 = sphi 0, %s354
      %s369 = sphi 0, %s355
      %s373 = sphi 0, %s373
      %s375 = sphi 0, %s373
      %s376 = sphi 0, %s375
      %s390 = sphi 0, %s376
      %s394 = sphi 0, %s394
      %s396 = sphi 0, %s394
      %s397 = sphi 0, %s396
      %s411 = sphi 0, %s397
      %s415 = sphi 0, %s415
      %s417 = sphi 0, %s415
      %s418 = sphi 0, %s417
      %s432 = sphi 0, %s418
      %s436 = sphi 0, %s436
      %s438 = sphi 0, %s436
      %s439 = sphi 0, %s438
      %s453 = sphi 0, %s439
      %s457 = sphi 0, %s457
      %s459 = sphi 0, %s457
      %s460 = sphi 0, %s459
      %s474 = sphi 0, %s460
      %s478 = sphi 0, %s478
      %s480 = sphi 0, %s478
      %s481 = sphi 0, %s480
      %s495 = sphi 0, %s481
      %s501 = sphi 0, %s503
      %s504 = sphi 0, %s501
      %s505 = sphi 0, %s504
      %s521 = sphi 0, %s505
      %s527 = sphi 0, %s529
      %s530 = sphi 0, %s527
      %s531 = sphi 0, %s530
      %s547 = sphi 0, %s531
    $region4: #{patchfsl_forward.1} parent=1 // loop_header_branch
      %38 = sbr.rel (%p36) target = $region8
    $region5: #{patchfsl_forward.1} parent=1 // loop_body
      %s40 = ssub.s32 %s35, 1
      %s41 = ssub.s32 %s35, 2
      %s42 = sadd.s32 %s35, 1
      %s43 = ssub.s32 %s35, %s42
      %p44 = scmp.eq.s32.totalorder %s43, 0
      %s46 = sadd.s32 %s45, 1
      %s47 = scalar_select %p44, %s45, %s46
      %p50 = pneg %p44
      %p51 = scmp.eq.s32.totalorder %s35, 1
      %p52 = por %p50, %p51
      %p53 = scmp.ne.s32.totalorder %s45, %s48
      %p54 = scmp.eq.s32.totalorder %s35, 0
      %p55 = por %p53, %p54
      %p56 = scmp.ne.s32.totalorder %s45, %s48
      %p57 = scmp.eq.s32.totalorder %s40, 1
      %p58 = por %p56, %p57
      %p59 = scmp.ne.s32.totalorder %s48, %s49
      %p60 = scmp.eq.s32.totalorder %s40, 0
      %p61 = por %p59, %p60
      %p62 = scmp.ne.s32.totalorder %s48, %s49
      %p63 = scmp.eq.s32.totalorder %s41, 1
      %p64 = por %p62, %p63
      %p66 = scmp.ne.s32.totalorder %s49, %s65
      %p67 = scmp.eq.s32.totalorder %s41, 0
      %p68 = por %p66, %p67
      %s70 = sadd.s32 %s69, 1
      %p73 = scmp.eq.s32.totalorder %s35, 1
      %p74 = scmp.ne.s32.totalorder %s69, %s71
      %p75 = scmp.eq.s32.totalorder %s35, 0
      %p76 = por %p74, %p75
      %p77 = scmp.ne.s32.totalorder %s69, %s71
      %p78 = scmp.eq.s32.totalorder %s40, 1
      %p79 = por %p77, %p78
      %p80 = scmp.ne.s32.totalorder %s71, %s72
      %p81 = scmp.eq.s32.totalorder %s40, 0
      %p82 = por %p80, %p81
      %p83 = scmp.ne.s32.totalorder %s71, %s72
      %p84 = scmp.eq.s32.totalorder %s41, 1
      %p85 = por %p83, %p84
      %p87 = scmp.ne.s32.totalorder %s72, %s86
      %p88 = scmp.eq.s32.totalorder %s41, 0
      %p89 = por %p87, %p88
      %s90 = ssub.s32 %s35, %s42
      %p91 = scmp.eq.s32.totalorder %s90, 0
      %s93 = sadd.s32 %s92, 1
      %s94 = scalar_select %p91, %s92, %s93
      %p97 = pneg %p91
      %p98 = scmp.eq.s32.totalorder %s35, 1
      %p99 = por %p97, %p98
      %p100 = scmp.ne.s32.totalorder %s92, %s95
      %p101 = scmp.eq.s32.totalorder %s35, 0
      %p102 = por %p100, %p101
      %p103 = scmp.ne.s32.totalorder %s92, %s95
      %p104 = scmp.eq.s32.totalorder %s40, 1
      %p105 = por %p103, %p104
      %p106 = scmp.ne.s32.totalorder %s95, %s96
      %p107 = scmp.eq.s32.totalorder %s40, 0
      %p108 = por %p106, %p107
      %p109 = scmp.ne.s32.totalorder %s95, %s96
      %p110 = scmp.eq.s32.totalorder %s41, 1
      %p111 = por %p109, %p110
      %p113 = scmp.ne.s32.totalorder %s96, %s112
      %p114 = scmp.eq.s32.totalorder %s41, 0
      %p115 = por %p113, %p114
      %s116 = ssub.s32 %s35, %s42
      %p117 = scmp.eq.s32.totalorder %s116, 0
      %s119 = sadd.s32 %s118, 1
      %s120 = scalar_select %p117, %s118, %s119
      %p123 = pneg %p117
      %p124 = scmp.eq.s32.totalorder %s35, 1
      %p125 = por %p123, %p124
      %p126 = scmp.ne.s32.totalorder %s118, %s121
      %p127 = scmp.eq.s32.totalorder %s35, 0
      %p128 = por %p126, %p127
      %p129 = scmp.ne.s32.totalorder %s118, %s121
      %p130 = scmp.eq.s32.totalorder %s40, 1
      %p131 = por %p129, %p130
      %p132 = scmp.ne.s32.totalorder %s121, %s122
      %p133 = scmp.eq.s32.totalorder %s40, 0
      %p134 = por %p132, %p133
      %p135 = scmp.ne.s32.totalorder %s121, %s122
      %p136 = scmp.eq.s32.totalorder %s41, 1
      %p137 = por %p135, %p136
      %p139 = scmp.ne.s32.totalorder %s122, %s138
      %p140 = scmp.eq.s32.totalorder %s41, 0
      %p141 = por %p139, %p140
      %s143 = sadd.s32 %s142, 1
      %p146 = scmp.eq.s32.totalorder %s35, 1
      %p147 = scmp.ne.s32.totalorder %s142, %s144
      %p148 = scmp.eq.s32.totalorder %s35, 0
      %p149 = por %p147, %p148
      %p150 = scmp.ne.s32.totalorder %s142, %s144
      %p151 = scmp.eq.s32.totalorder %s40, 1
      %p152 = por %p150, %p151
      %p153 = scmp.ne.s32.totalorder %s144, %s145
      %p154 = scmp.eq.s32.totalorder %s40, 0
      %p155 = por %p153, %p154
      %p156 = scmp.ne.s32.totalorder %s144, %s145
      %p157 = scmp.eq.s32.totalorder %s41, 1
      %p158 = por %p156, %p157
      %p160 = scmp.ne.s32.totalorder %s145, %s159
      %p161 = scmp.eq.s32.totalorder %s41, 0
      %p162 = por %p160, %p161
      %s164 = sadd.s32 %s163, 1
      %p167 = scmp.eq.s32.totalorder %s35, 1
      %p168 = scmp.ne.s32.totalorder %s163, %s165
      %p169 = scmp.eq.s32.totalorder %s35, 0
      %p170 = por %p168, %p169
      %p171 = scmp.ne.s32.totalorder %s163, %s165
      %p172 = scmp.eq.s32.totalorder %s40, 1
      %p173 = por %p171, %p172
      %p174 = scmp.ne.s32.totalorder %s165, %s166
      %p175 = scmp.eq.s32.totalorder %s40, 0
      %p176 = por %p174, %p175
      %p177 = scmp.ne.s32.totalorder %s165, %s166
      %p178 = scmp.eq.s32.totalorder %s41, 1
      %p179 = por %p177, %p178
      %p181 = scmp.ne.s32.totalorder %s166, %s180
      %p182 = scmp.eq.s32.totalorder %s41, 0
      %p183 = por %p181, %p182
      %s185 = sadd.s32 %s184, 1
      %p188 = scmp.eq.s32.totalorder %s35, 1
      %p189 = scmp.ne.s32.totalorder %s184, %s186
      %p190 = scmp.eq.s32.totalorder %s35, 0
      %p191 = por %p189, %p190
      %p192 = scmp.ne.s32.totalorder %s184, %s186
      %p193 = scmp.eq.s32.totalorder %s40, 1
      %p194 = por %p192, %p193
      %p195 = scmp.ne.s32.totalorder %s186, %s187
      %p196 = scmp.eq.s32.totalorder %s40, 0
      %p197 = por %p195, %p196
      %p198 = scmp.ne.s32.totalorder %s186, %s187
      %p199 = scmp.eq.s32.totalorder %s41, 1
      %p200 = por %p198, %p199
      %p202 = scmp.ne.s32.totalorder %s187, %s201
      %p203 = scmp.eq.s32.totalorder %s41, 0
      %p204 = por %p202, %p203
      %s206 = sadd.s32 %s205, 1
      %p209 = scmp.eq.s32.totalorder %s35, 1
      %p210 = scmp.ne.s32.totalorder %s205, %s207
      %p211 = scmp.eq.s32.totalorder %s35, 0
      %p212 = por %p210, %p211
      %p213 = scmp.ne.s32.totalorder %s205, %s207
      %p214 = scmp.eq.s32.totalorder %s40, 1
      %p215 = por %p213, %p214
      %p216 = scmp.ne.s32.totalorder %s207, %s208
      %p217 = scmp.eq.s32.totalorder %s40, 0
      %p218 = por %p216, %p217
      %p219 = scmp.ne.s32.totalorder %s207, %s208
      %p220 = scmp.eq.s32.totalorder %s41, 1
      %p221 = por %p219, %p220
      %p223 = scmp.ne.s32.totalorder %s208, %s222
      %p224 = scmp.eq.s32.totalorder %s41, 0
      %p225 = por %p223, %p224
      %s227 = sadd.s32 %s226, 1
      %p230 = scmp.eq.s32.totalorder %s35, 1
      %p231 = scmp.ne.s32.totalorder %s226, %s228
      %p232 = scmp.eq.s32.totalorder %s35, 0
      %p233 = por %p231, %p232
      %p234 = scmp.ne.s32.totalorder %s226, %s228
      %p235 = scmp.eq.s32.totalorder %s40, 1
      %p236 = por %p234, %p235
      %p237 = scmp.ne.s32.totalorder %s228, %s229
      %p238 = scmp.eq.s32.totalorder %s40, 0
      %p239 = por %p237, %p238
      %p240 = scmp.ne.s32.totalorder %s228, %s229
      %p241 = scmp.eq.s32.totalorder %s41, 1
      %p242 = por %p240, %p241
      %p244 = scmp.ne.s32.totalorder %s229, %s243
      %p245 = scmp.eq.s32.totalorder %s41, 0
      %p246 = por %p244, %p245
      %s248 = sadd.s32 %s247, 1
      %p251 = scmp.eq.s32.totalorder %s35, 1
      %p252 = scmp.ne.s32.totalorder %s247, %s249
      %p253 = scmp.eq.s32.totalorder %s35, 0
      %p254 = por %p252, %p253
      %p255 = scmp.ne.s32.totalorder %s247, %s249
      %p256 = scmp.eq.s32.totalorder %s40, 1
      %p257 = por %p255, %p256
      %p258 = scmp.ne.s32.totalorder %s249, %s250
      %p259 = scmp.eq.s32.totalorder %s40, 0
      %p260 = por %p258, %p259
      %p261 = scmp.ne.s32.totalorder %s249, %s250
      %p262 = scmp.eq.s32.totalorder %s41, 1
      %p263 = por %p261, %p262
      %p265 = scmp.ne.s32.totalorder %s250, %s264
      %p266 = scmp.eq.s32.totalorder %s41, 0
      %p267 = por %p265, %p266
      %s269 = sadd.s32 %s268, 1
      %p272 = scmp.eq.s32.totalorder %s35, 1
      %p273 = scmp.ne.s32.totalorder %s268, %s270
      %p274 = scmp.eq.s32.totalorder %s35, 0
      %p275 = por %p273, %p274
      %p276 = scmp.ne.s32.totalorder %s268, %s270
      %p277 = scmp.eq.s32.totalorder %s40, 1
      %p278 = por %p276, %p277
      %p279 = scmp.ne.s32.totalorder %s270, %s271
      %p280 = scmp.eq.s32.totalorder %s40, 0
      %p281 = por %p279, %p280
      %p282 = scmp.ne.s32.totalorder %s270, %s271
      %p283 = scmp.eq.s32.totalorder %s41, 1
      %p284 = por %p282, %p283
      %p286 = scmp.ne.s32.totalorder %s271, %s285
      %p287 = scmp.eq.s32.totalorder %s41, 0
      %p288 = por %p286, %p287
      %s290 = sadd.s32 %s289, 1
      %p293 = scmp.eq.s32.totalorder %s35, 1
      %p294 = scmp.ne.s32.totalorder %s289, %s291
      %p295 = scmp.eq.s32.totalorder %s35, 0
      %p296 = por %p294, %p295
      %p297 = scmp.ne.s32.totalorder %s289, %s291
      %p298 = scmp.eq.s32.totalorder %s40, 1
      %p299 = por %p297, %p298
      %p300 = scmp.ne.s32.totalorder %s291, %s292
      %p301 = scmp.eq.s32.totalorder %s40, 0
      %p302 = por %p300, %p301
      %p303 = scmp.ne.s32.totalorder %s291, %s292
      %p304 = scmp.eq.s32.totalorder %s41, 1
      %p305 = por %p303, %p304
      %p307 = scmp.ne.s32.totalorder %s292, %s306
      %p308 = scmp.eq.s32.totalorder %s41, 0
      %p309 = por %p307, %p308
      %s311 = sadd.s32 %s310, 1
      %p314 = scmp.eq.s32.totalorder %s35, 1
      %p315 = scmp.ne.s32.totalorder %s310, %s312
      %p316 = scmp.eq.s32.totalorder %s35, 0
      %p317 = por %p315, %p316
      %p318 = scmp.ne.s32.totalorder %s310, %s312
      %p319 = scmp.eq.s32.totalorder %s40, 1
      %p320 = por %p318, %p319
      %p321 = scmp.ne.s32.totalorder %s312, %s313
      %p322 = scmp.eq.s32.totalorder %s40, 0
      %p323 = por %p321, %p322
      %p324 = scmp.ne.s32.totalorder %s312, %s313
      %p325 = scmp.eq.s32.totalorder %s41, 1
      %p326 = por %p324, %p325
      %p328 = scmp.ne.s32.totalorder %s313, %s327
      %p329 = scmp.eq.s32.totalorder %s41, 0
      %p330 = por %p328, %p329
      %s332 = sadd.s32 %s331, 1
      %p335 = scmp.eq.s32.totalorder %s35, 1
      %p336 = scmp.ne.s32.totalorder %s331, %s333
      %p337 = scmp.eq.s32.totalorder %s35, 0
      %p338 = por %p336, %p337
      %p339 = scmp.ne.s32.totalorder %s331, %s333
      %p340 = scmp.eq.s32.totalorder %s40, 1
      %p341 = por %p339, %p340
      %p342 = scmp.ne.s32.totalorder %s333, %s334
      %p343 = scmp.eq.s32.totalorder %s40, 0
      %p344 = por %p342, %p343
      %p345 = scmp.ne.s32.totalorder %s333, %s334
      %p346 = scmp.eq.s32.totalorder %s41, 1
      %p347 = por %p345, %p346
      %p349 = scmp.ne.s32.totalorder %s334, %s348
      %p350 = scmp.eq.s32.totalorder %s41, 0
      %p351 = por %p349, %p350
      %s353 = sadd.s32 %s352, 1
      %p356 = scmp.eq.s32.totalorder %s35, 1
      %p357 = scmp.ne.s32.totalorder %s352, %s354
      %p358 = scmp.eq.s32.totalorder %s35, 0
      %p359 = por %p357, %p358
      %p360 = scmp.ne.s32.totalorder %s352, %s354
      %p361 = scmp.eq.s32.totalorder %s40, 1
      %p362 = por %p360, %p361
      %p363 = scmp.ne.s32.totalorder %s354, %s355
      %p364 = scmp.eq.s32.totalorder %s40, 0
      %p365 = por %p363, %p364
      %p366 = scmp.ne.s32.totalorder %s354, %s355
      %p367 = scmp.eq.s32.totalorder %s41, 1
      %p368 = por %p366, %p367
      %p370 = scmp.ne.s32.totalorder %s355, %s369
      %p371 = scmp.eq.s32.totalorder %s41, 0
      %p372 = por %p370, %p371
      %s374 = sadd.s32 %s373, 1
      %p377 = scmp.eq.s32.totalorder %s35, 1
      %p378 = scmp.ne.s32.totalorder %s373, %s375
      %p379 = scmp.eq.s32.totalorder %s35, 0
      %p380 = por %p378, %p379
      %p381 = scmp.ne.s32.totalorder %s373, %s375
      %p382 = scmp.eq.s32.totalorder %s40, 1
      %p383 = por %p381, %p382
      %p384 = scmp.ne.s32.totalorder %s375, %s376
      %p385 = scmp.eq.s32.totalorder %s40, 0
      %p386 = por %p384, %p385
      %p387 = scmp.ne.s32.totalorder %s375, %s376
      %p388 = scmp.eq.s32.totalorder %s41, 1
      %p389 = por %p387, %p388
      %p391 = scmp.ne.s32.totalorder %s376, %s390
      %p392 = scmp.eq.s32.totalorder %s41, 0
      %p393 = por %p391, %p392
      %s395 = sadd.s32 %s394, 1
      %p398 = scmp.eq.s32.totalorder %s35, 1
      %p399 = scmp.ne.s32.totalorder %s394, %s396
      %p400 = scmp.eq.s32.totalorder %s35, 0
      %p401 = por %p399, %p400
      %p402 = scmp.ne.s32.totalorder %s394, %s396
      %p403 = scmp.eq.s32.totalorder %s40, 1
      %p404 = por %p402, %p403
      %p405 = scmp.ne.s32.totalorder %s396, %s397
      %p406 = scmp.eq.s32.totalorder %s40, 0
      %p407 = por %p405, %p406
      %p408 = scmp.ne.s32.totalorder %s396, %s397
      %p409 = scmp.eq.s32.totalorder %s41, 1
      %p410 = por %p408, %p409
      %p412 = scmp.ne.s32.totalorder %s397, %s411
      %p413 = scmp.eq.s32.totalorder %s41, 0
      %p414 = por %p412, %p413
      %s416 = sadd.s32 %s415, 1
      %p419 = scmp.eq.s32.totalorder %s35, 1
      %p420 = scmp.ne.s32.totalorder %s415, %s417
      %p421 = scmp.eq.s32.totalorder %s35, 0
      %p422 = por %p420, %p421
      %p423 = scmp.ne.s32.totalorder %s415, %s417
      %p424 = scmp.eq.s32.totalorder %s40, 1
      %p425 = por %p423, %p424
      %p426 = scmp.ne.s32.totalorder %s417, %s418
      %p427 = scmp.eq.s32.totalorder %s40, 0
      %p428 = por %p426, %p427
      %p429 = scmp.ne.s32.totalorder %s417, %s418
      %p430 = scmp.eq.s32.totalorder %s41, 1
      %p431 = por %p429, %p430
      %p433 = scmp.ne.s32.totalorder %s418, %s432
      %p434 = scmp.eq.s32.totalorder %s41, 0
      %p435 = por %p433, %p434
      %s437 = sadd.s32 %s436, 1
      %p440 = scmp.eq.s32.totalorder %s35, 1
      %p441 = scmp.ne.s32.totalorder %s436, %s438
      %p442 = scmp.eq.s32.totalorder %s35, 0
      %p443 = por %p441, %p442
      %p444 = scmp.ne.s32.totalorder %s436, %s438
      %p445 = scmp.eq.s32.totalorder %s40, 1
      %p446 = por %p444, %p445
      %p447 = scmp.ne.s32.totalorder %s438, %s439
      %p448 = scmp.eq.s32.totalorder %s40, 0
      %p449 = por %p447, %p448
      %p450 = scmp.ne.s32.totalorder %s438, %s439
      %p451 = scmp.eq.s32.totalorder %s41, 1
      %p452 = por %p450, %p451
      %p454 = scmp.ne.s32.totalorder %s439, %s453
      %p455 = scmp.eq.s32.totalorder %s41, 0
      %p456 = por %p454, %p455
      %s458 = sadd.s32 %s457, 1
      %p461 = scmp.eq.s32.totalorder %s35, 1
      %p462 = scmp.ne.s32.totalorder %s457, %s459
      %p463 = scmp.eq.s32.totalorder %s35, 0
      %p464 = por %p462, %p463
      %p465 = scmp.ne.s32.totalorder %s457, %s459
      %p466 = scmp.eq.s32.totalorder %s40, 1
      %p467 = por %p465, %p466
      %p468 = scmp.ne.s32.totalorder %s459, %s460
      %p469 = scmp.eq.s32.totalorder %s40, 0
      %p470 = por %p468, %p469
      %p471 = scmp.ne.s32.totalorder %s459, %s460
      %p472 = scmp.eq.s32.totalorder %s41, 1
      %p473 = por %p471, %p472
      %p475 = scmp.ne.s32.totalorder %s460, %s474
      %p476 = scmp.eq.s32.totalorder %s41, 0
      %p477 = por %p475, %p476
      %s479 = sadd.s32 %s478, 1
      %p482 = scmp.eq.s32.totalorder %s35, 1
      %p483 = scmp.ne.s32.totalorder %s478, %s480
      %p484 = scmp.eq.s32.totalorder %s35, 0
      %p485 = por %p483, %p484
      %p486 = scmp.ne.s32.totalorder %s478, %s480
      %p487 = scmp.eq.s32.totalorder %s40, 1
      %p488 = por %p486, %p487
      %p489 = scmp.ne.s32.totalorder %s480, %s481
      %p490 = scmp.eq.s32.totalorder %s40, 0
      %p491 = por %p489, %p490
      %p492 = scmp.ne.s32.totalorder %s480, %s481
      %p493 = scmp.eq.s32.totalorder %s41, 1
      %p494 = por %p492, %p493
      %p496 = scmp.ne.s32.totalorder %s481, %s495
      %p497 = scmp.eq.s32.totalorder %s41, 0
      %p498 = por %p496, %p497
      %s499 = ssub.s32 %s35, %s42
      %p500 = scmp.eq.s32.totalorder %s499, 0
      %s502 = sadd.s32 %s501, 1
      %s503 = scalar_select %p500, %s501, %s502
      %p506 = pneg %p500
      %p507 = scmp.eq.s32.totalorder %s35, 1
      %p508 = por %p506, %p507
      %p509 = scmp.ne.s32.totalorder %s501, %s504
      %p510 = scmp.eq.s32.totalorder %s35, 0
      %p511 = por %p509, %p510
      %p512 = scmp.ne.s32.totalorder %s501, %s504
      %p513 = scmp.eq.s32.totalorder %s40, 1
      %p514 = por %p512, %p513
      %p515 = scmp.ne.s32.totalorder %s504, %s505
      %p516 = scmp.eq.s32.totalorder %s40, 0
      %p517 = por %p515, %p516
      %p518 = scmp.ne.s32.totalorder %s504, %s505
      %p519 = scmp.eq.s32.totalorder %s41, 1
      %p520 = por %p518, %p519
      %p522 = scmp.ne.s32.totalorder %s505, %s521
      %p523 = scmp.eq.s32.totalorder %s41, 0
      %p524 = por %p522, %p523
      %s525 = ssub.s32 %s35, %s42
      %p526 = scmp.eq.s32.totalorder %s525, 0
      %s528 = sadd.s32 %s527, 1
      %s529 = scalar_select %p526, %s527, %s528
      %p532 = pneg %p526
      %p533 = scmp.eq.s32.totalorder %s35, 1
      %p534 = por %p532, %p533
      %p535 = scmp.ne.s32.totalorder %s527, %s530
      %p536 = scmp.eq.s32.totalorder %s35, 0
      %p537 = por %p535, %p536
      %p538 = scmp.ne.s32.totalorder %s527, %s530
      %p539 = scmp.eq.s32.totalorder %s40, 1
      %p540 = por %p538, %p539
      %p541 = scmp.ne.s32.totalorder %s530, %s531
      %p542 = scmp.eq.s32.totalorder %s40, 0
      %p543 = por %p541, %p542
      %p544 = scmp.ne.s32.totalorder %s530, %s531
      %p545 = scmp.eq.s32.totalorder %s41, 1
      %p546 = por %p544, %p545
      %p548 = scmp.ne.s32.totalorder %s531, %s547
      %p549 = scmp.eq.s32.totalorder %s41, 0
      %p550 = por %p548, %p549
      %p551 = scmp.le.s32.totalorder 1, %s35
      %p552 = scmp.lt.s32.totalorder %s35, 3
      %p553 = pnand %p551, %p552
      %p554 = pneg %p553
      // Predicated region
      $region9: #{patchfsl_forward.1} parent=5 // pred_check
        _
      $region10: #{patchfsl_forward.1} parent=5 // pred_check_branch
        %556 = sbr.rel (%p553) target = $region12
      $region11: #{patchfsl_forward.1} parent=5 // pred_region
        %s557 = ssub.s32 %s35, 1
        // Predicated region
        $region13: #{patchfsl_forward.1} parent=11 // pred_check
          %p558 = pneg %p82
        $region14: #{patchfsl_forward.1} parent=11 // pred_check_branch
          %560 = sbr.rel (%p558) target = $region16
        $region15: #{patchfsl_forward.1} parent=11 // pred_region
          _
        $region16: #{patchfsl_forward.1} parent=11 // pred_fallthru
          _
        // Predicated region
        $region17: #{patchfsl_forward.1} parent=11 // pred_check
          %p561 = pneg %p155
        $region18: #{patchfsl_forward.1} parent=11 // pred_check_branch
          %563 = sbr.rel (%p561) target = $region20
        $region19: #{patchfsl_forward.1} parent=11 // pred_region
          _
        $region20: #{patchfsl_forward.1} parent=11 // pred_fallthru
          _
        // Predicated region
        $region21: #{patchfsl_forward.1} parent=11 // pred_check
          %p564 = pneg %p176
        $region22: #{patchfsl_forward.1} parent=11 // pred_check_branch
          %566 = sbr.rel (%p564) target = $region24
        $region23: #{patchfsl_forward.1} parent=11 // pred_region
          _
        $region24: #{patchfsl_forward.1} parent=11 // pred_fallthru
          _
        // Predicated region
        $region25: #{patchfsl_forward.1} parent=11 // pred_check
          %p567 = pneg %p197
        $region26: #{patchfsl_forward.1} parent=11 // pred_check_branch
          %569 = sbr.rel (%p567) target = $region28
        $region27: #{patchfsl_forward.1} parent=11 // pred_region
          _
        $region28: #{patchfsl_forward.1} parent=11 // pred_fallthru
          _
        // Predicated region
        $region29: #{patchfsl_forward.1} parent=11 // pred_check
          %p570 = pneg %p218
        $region30: #{patchfsl_forward.1} parent=11 // pred_check_branch
          %572 = sbr.rel (%p570) target = $region32
        $region31: #{patchfsl_forward.1} parent=11 // pred_region
          _
        $region32: #{patchfsl_forward.1} parent=11 // pred_fallthru
          _
        // Predicated region
        $region33: #{patchfsl_forward.1} parent=11 // pred_check
          %p573 = pneg %p239
        $region34: #{patchfsl_forward.1} parent=11 // pred_check_branch
          %575 = sbr.rel (%p573) target = $region36
        $region35: #{patchfsl_forward.1} parent=11 // pred_region
          _
        $region36: #{patchfsl_forward.1} parent=11 // pred_fallthru
          _
        // Predicated region
        $region37: #{patchfsl_forward.1} parent=11 // pred_check
          %p576 = pneg %p260
        $region38: #{patchfsl_forward.1} parent=11 // pred_check_branch
          %578 = sbr.rel (%p576) target = $region40
        $region39: #{patchfsl_forward.1} parent=11 // pred_region
          _
        $region40: #{patchfsl_forward.1} parent=11 // pred_fallthru
          _
        // Predicated region
        $region41: #{patchfsl_forward.1} parent=11 // pred_check
          %p579 = pneg %p281
        $region42: #{patchfsl_forward.1} parent=11 // pred_check_branch
          %581 = sbr.rel (%p579) target = $region44
        $region43: #{patchfsl_forward.1} parent=11 // pred_region
          _
        $region44: #{patchfsl_forward.1} parent=11 // pred_fallthru
          _
        // Predicated region
        $region45: #{patchfsl_forward.1} parent=11 // pred_check
          %p582 = pneg %p302
        $region46: #{patchfsl_forward.1} parent=11 // pred_check_branch
          %584 = sbr.rel (%p582) target = $region48
        $region47: #{patchfsl_forward.1} parent=11 // pred_region
          _
        $region48: #{patchfsl_forward.1} parent=11 // pred_fallthru
          _
        // Predicated region
        $region49: #{patchfsl_forward.1} parent=11 // pred_check
          %p585 = pneg %p323
        $region50: #{patchfsl_forward.1} parent=11 // pred_check_branch
          %587 = sbr.rel (%p585) target = $region52
        $region51: #{patchfsl_forward.1} parent=11 // pred_region
          _
        $region52: #{patchfsl_forward.1} parent=11 // pred_fallthru
          _
        // Predicated region
        $region53: #{patchfsl_forward.1} parent=11 // pred_check
          %p588 = pneg %p344
        $region54: #{patchfsl_forward.1} parent=11 // pred_check_branch
          %590 = sbr.rel (%p588) target = $region56
        $region55: #{patchfsl_forward.1} parent=11 // pred_region
          _
        $region56: #{patchfsl_forward.1} parent=11 // pred_fallthru
          _
        // Predicated region
        $region57: #{patchfsl_forward.1} parent=11 // pred_check
          %p591 = pneg %p365
        $region58: #{patchfsl_forward.1} parent=11 // pred_check_branch
          %593 = sbr.rel (%p591) target = $region60
        $region59: #{patchfsl_forward.1} parent=11 // pred_region
          _
        $region60: #{patchfsl_forward.1} parent=11 // pred_fallthru
          _
        // Predicated region
        $region61: #{patchfsl_forward.1} parent=11 // pred_check
          %p594 = pneg %p386
        $region62: #{patchfsl_forward.1} parent=11 // pred_check_branch
          %596 = sbr.rel (%p594) target = $region64
        $region63: #{patchfsl_forward.1} parent=11 // pred_region
          _
        $region64: #{patchfsl_forward.1} parent=11 // pred_fallthru
          _
        // Predicated region
        $region65: #{patchfsl_forward.1} parent=11 // pred_check
          %p597 = pneg %p407
        $region66: #{patchfsl_forward.1} parent=11 // pred_check_branch
          %599 = sbr.rel (%p597) target = $region68
        $region67: #{patchfsl_forward.1} parent=11 // pred_region
          _
        $region68: #{patchfsl_forward.1} parent=11 // pred_fallthru
          _
        // Predicated region
        $region69: #{patchfsl_forward.1} parent=11 // pred_check
          %p600 = pneg %p428
        $region70: #{patchfsl_forward.1} parent=11 // pred_check_branch
          %602 = sbr.rel (%p600) target = $region72
        $region71: #{patchfsl_forward.1} parent=11 // pred_region
          _
        $region72: #{patchfsl_forward.1} parent=11 // pred_fallthru
          _
        // Predicated region
        $region73: #{patchfsl_forward.1} parent=11 // pred_check
          %p603 = pneg %p449
        $region74: #{patchfsl_forward.1} parent=11 // pred_check_branch
          %605 = sbr.rel (%p603) target = $region76
        $region75: #{patchfsl_forward.1} parent=11 // pred_region
          _
        $region76: #{patchfsl_forward.1} parent=11 // pred_fallthru
          _
        // Predicated region
        $region77: #{patchfsl_forward.1} parent=11 // pred_check
          %p606 = pneg %p470
        $region78: #{patchfsl_forward.1} parent=11 // pred_check_branch
          %608 = sbr.rel (%p606) target = $region80
        $region79: #{patchfsl_forward.1} parent=11 // pred_region
          _
        $region80: #{patchfsl_forward.1} parent=11 // pred_fallthru
          _
        // Predicated region
        $region81: #{patchfsl_forward.1} parent=11 // pred_check
          %p609 = pneg %p491
        $region82: #{patchfsl_forward.1} parent=11 // pred_check_branch
          %611 = sbr.rel (%p609) target = $region84
        $region83: #{patchfsl_forward.1} parent=11 // pred_region
          _
        $region84: #{patchfsl_forward.1} parent=11 // pred_fallthru
          _
      $region12: #{patchfsl_forward.1} parent=5 // pred_fallthru
        _
      %p612 = scmp.lt.s32.totalorder %s35, 2
      // Predicated region
      $region85: #{patchfsl_forward.1} parent=5 // pred_check
        %p613 = pneg %p612
      $region86: #{patchfsl_forward.1} parent=5 // pred_check_branch
        %615 = sbr.rel (%p613) target = $region88
      $region87: #{patchfsl_forward.1} parent=5 // pred_region
        // Predicated region
        $region89: #{patchfsl_forward.1} parent=87 // pred_check
          %p616 = pneg %p55
        $region90: #{patchfsl_forward.1} parent=87 // pred_check_branch
          %618 = sbr.rel (%p616) target = $region92
        $region91: #{patchfsl_forward.1} parent=87 // pred_region
          %p619 = scmp.lt.s32.totalorder %s35, 1
          %s620 = scalar_select %p619, %s35, 1
          %s621 = smul.addr %s620, 3
          %s622 = smul.addr %s621, 4
          %s623 = scalar_lea.vmem %s0, %s622
        $region92: #{patchfsl_forward.1} parent=87 // pred_fallthru
          _
        // Predicated region
        $region93: #{patchfsl_forward.1} parent=87 // pred_check
          %p624 = pneg %p102
        $region94: #{patchfsl_forward.1} parent=87 // pred_check_branch
          %626 = sbr.rel (%p624) target = $region96
        $region95: #{patchfsl_forward.1} parent=87 // pred_region
          %p627 = scmp.lt.s32.totalorder %s35, 1
          %s628 = scalar_select %p627, %s35, 1
          %s629 = scalar_lea.vmem %s2, %s628
        $region96: #{patchfsl_forward.1} parent=87 // pred_fallthru
          _
        // Predicated region
        $region97: #{patchfsl_forward.1} parent=87 // pred_check
          %p630 = pneg %p128
        $region98: #{patchfsl_forward.1} parent=87 // pred_check_branch
          %632 = sbr.rel (%p630) target = $region100
        $region99: #{patchfsl_forward.1} parent=87 // pred_region
          %p633 = scmp.lt.s32.totalorder %s35, 1
          %s634 = scalar_select %p633, %s35, 1
          %s635 = scalar_lea.vmem %s3, %s634
        $region100: #{patchfsl_forward.1} parent=87 // pred_fallthru
          _
      $region88: #{patchfsl_forward.1} parent=5 // pred_fallthru
        _
      %p636 = scmp.le.s32.totalorder 1, %s35
      %p637 = scmp.lt.s32.totalorder %s35, 3
      %p638 = pnand %p636, %p637
      %p639 = pneg %p638
      // Predicated region
      $region101: #{patchfsl_forward.1} parent=5 // pred_check
        _
      $region102: #{patchfsl_forward.1} parent=5 // pred_check_branch
        %641 = sbr.rel (%p638) target = $region104
      $region103: #{patchfsl_forward.1} parent=5 // pred_region
        %s642 = ssub.s32 %s35, 1
        %p643 = scmp.lt.s32.totalorder %s40, 1
        %s644 = scalar_select %p643, %s40, 1
        %s645 = smul.addr %s644, 3
        %s646 = smul.addr %s645, 4
        %s647 = scalar_lea.vmem %s0, %s646
        %p648 = pneg %p61
        %p649 = pneg %p58
        %p650 = pneg %p82
        %p651 = pneg %p79
        %p652 = scmp.lt.s32.totalorder %s40, 1
        %s653 = scalar_select %p652, %s40, 1
        %s654 = scalar_lea.vmem %s2, %s653
        %p655 = pneg %p108
        %p656 = pneg %p105
        %p657 = scmp.lt.s32.totalorder %s40, 1
        %s658 = scalar_select %p657, %s40, 1
        %s659 = scalar_lea.vmem %s3, %s658
        %p660 = pneg %p134
        %p661 = pneg %p131
        %p662 = pneg %p155
        %p663 = pneg %p152
        %p664 = pneg %p176
        %p665 = pneg %p173
        %p666 = pneg %p197
        %p667 = pneg %p194
        %p668 = pneg %p218
        %p669 = pneg %p215
        %p670 = pneg %p239
        %p671 = pneg %p236
        %p672 = pneg %p260
        %p673 = pneg %p257
        %p674 = pneg %p281
        %p675 = pneg %p278
        %p676 = pneg %p302
        %p677 = pneg %p299
        %p678 = pneg %p323
        %p679 = pneg %p320
        %p680 = pneg %p344
        %p681 = pneg %p341
        %p682 = pneg %p365
        %p683 = pneg %p362
        %p684 = pneg %p386
        %p685 = pneg %p383
        %p686 = pneg %p407
        %p687 = pneg %p404
        %p688 = pneg %p428
        %p689 = pneg %p425
        %p690 = pneg %p449
        %p691 = pneg %p446
        %p692 = pneg %p470
        %p693 = pneg %p467
        %p694 = pneg %p491
        %p695 = pneg %p488
        %p696 = pneg %p517
        %p697 = pneg %p514
        %s698 = sand.u32 %s504, 1
        %s699 = scalar_lea.sflag [#allocation3], %s698
        %s700 = sand.u32 %s504, 1
        %s701 = smul.addr %s700, 8
        %s702 = scalar_lea.vmem [#allocation2], %s701
        %p703 = pneg %p543
        %p704 = pneg %p540
        %s705 = sand.u32 %s530, 1
        %s706 = scalar_lea.sflag [#allocation5], %s705
        %s707 = sand.u32 %s530, 1
        %s708 = smul.addr %s707, 8
        %s709 = scalar_lea.vmem [#allocation4], %s708
        %p710 = scmp.lt.s32.totalorder %s40, 1
        %s711 = scalar_select %p710, %s40, 1
        %s712 = smul.addr %s711, 3
        %s713 = smul.addr %s712, 4
        %s714 = scalar_lea.vmem %s0, %s713
        %p715 = scmp.lt.s32.totalorder %s40, 1
        %s716 = scalar_select %p715, %s40, 1
        %s717 = scalar_lea.vmem %s2, %s716
        %p718 = scmp.lt.s32.totalorder %s40, 1
        %s719 = scalar_select %p718, %s40, 1
        %s720 = scalar_lea.vmem %s3, %s719
        %v722 = vld [vmem:[%s714] sm:$0xff]
        %v723 = vld [vmem:[%s714 + $0x8] sm:$0xf]
        %v724 = vld [vmem:[%s4] sm:$0xff]
        %v725 = vld [vmem:[%s4 + $0x8] sm:$0xf]
        %v726 = vld [vmem:[%s4 + $0xc] sm:$0xff]
        %v727 = vld [vmem:[%s4 + $0x14] sm:$0xf]
        %v728 = vld [vmem:[%s4 + $0x18] sm:$0xff]
        %v729 = vld [vmem:[%s4 + $0x20] sm:$0xf]
        %v730 = vld [vmem:[%s4 + $0x24] sm:$0xff]
        %v731 = vld [vmem:[%s4 + $0x2c] sm:$0xf]
        %v732 = vld [vmem:[%s4 + $0x30] sm:$0xff]
        %v733 = vld [vmem:[%s4 + $0x38] sm:$0xf]
        %v734 = vld [vmem:[%s4 + $0x3c] sm:$0xff]
        %v735 = vld [vmem:[%s4 + $0x44] sm:$0xf]
        %v736 = vld [vmem:[%s4 + $0x48] sm:$0xff]
        %v737 = vld [vmem:[%s4 + $0x50] sm:$0xf]
        %v738 = vld [vmem:[%s4 + $0x54] sm:$0xff]
        %v739 = vld [vmem:[%s4 + $0x5c] sm:$0xf]
        %v740 = vld [vmem:[%s4 + $0x60] sm:$0xff]
        %v741 = vld [vmem:[%s4 + $0x68] sm:$0xf]
        %v742 = vld [vmem:[%s4 + $0x6c] sm:$0xff]
        %v743 = vld [vmem:[%s4 + $0x74] sm:$0xf]
        %v744 = vld [vmem:[%s4 + $0x78] sm:$0xff]
        %v745 = vld [vmem:[%s4 + $0x80] sm:$0xf]
        %v746 = vld [vmem:[%s4 + $0x84] sm:$0xff]
        %v747 = vld [vmem:[%s4 + $0x8c] sm:$0xf]
        %v748 = vld [vmem:[%s4 + $0x90] sm:$0xff]
        %v749 = vld [vmem:[%s4 + $0x98] sm:$0xf]
        %v750 = vld [vmem:[%s4 + $0x9c] sm:$0xff]
        %v751 = vld [vmem:[%s4 + $0xa4] sm:$0xf]
        %v752 = vld [vmem:[%s4 + $0xa8] sm:$0xff]
        %v753 = vld [vmem:[%s4 + $0xb0] sm:$0xf]
        %v754 = vld [vmem:[%s4 + $0xb4] sm:$0xff]
        %v755 = vld [vmem:[%s4 + $0xbc] sm:$0xf]
        %v756 = vld [vmem:[%s4 + $0xc0] sm:$0xff]
        %v757 = vld [vmem:[%s4 + $0xc8] sm:$0xf]
        %v758 = vld [vmem:[%s4 + $0xcc] sm:$0xff]
        %v759 = vld [vmem:[%s4 + $0xd4] sm:$0xf]
        %v760 = vld [vmem:[%s4 + $0xd8] sm:$0xff]
        %v761 = vld [vmem:[%s4 + $0xe0] sm:$0xf]
        %v762 = vld [vmem:[%s4 + $0xe4] sm:$0xff]
        %v763 = vld [vmem:[%s4 + $0xec] sm:$0xf]
        %v764 = vld [vmem:[%s4 + $0xf0] sm:$0xff]
        %v765 = vld [vmem:[%s4 + $0xf8] sm:$0xf]
        %v766 = vld [vmem:[%s4 + $0xfc] sm:$0xff]
        %v767 = vld [vmem:[%s4 + $0x104] sm:$0xf]
        %v768 = vld [vmem:[%s4 + $0x108] sm:$0xff]
        %v769 = vld [vmem:[%s4 + $0x110] sm:$0xf]
        %v770 = vld [vmem:[%s4 + $0x114] sm:$0xff]
        %v771 = vld [vmem:[%s4 + $0x11c] sm:$0xf]
        %v772 = vld [vmem:[%s4 + $0x120] sm:$0xff]
        %v773 = vld [vmem:[%s4 + $0x128] sm:$0xf]
        %v774 = vld [vmem:[%s4 + $0x12c] sm:$0xff]
        %v775 = vld [vmem:[%s4 + $0x134] sm:$0xf]
        %v776 = vld [vmem:[%s4 + $0x138] sm:$0xff]
        %v777 = vld [vmem:[%s4 + $0x140] sm:$0xf]
        %v778 = vld [vmem:[%s4 + $0x144] sm:$0xff]
        %v779 = vld [vmem:[%s4 + $0x14c] sm:$0xf]
        %v780 = vld [vmem:[%s4 + $0x150] sm:$0xff]
        %v781 = vld [vmem:[%s4 + $0x158] sm:$0xf]
        %v782 = vld [vmem:[%s4 + $0x15c] sm:$0xff]
        %v783 = vld [vmem:[%s4 + $0x164] sm:$0xf]
        %v784 = vld [vmem:[%s4 + $0x168] sm:$0xff]
        %v785 = vld [vmem:[%s4 + $0x170] sm:$0xf]
        %v786 = vld [vmem:[%s4 + $0x174] sm:$0xff]
        %v787 = vld [vmem:[%s4 + $0x17c] sm:$0xf]
        %v788 = vld [vmem:[%s4 + $0x180] sm:$0xff]
        %v789 = vld [vmem:[%s4 + $0x188] sm:$0xf]
        %v790 = vld [vmem:[%s4 + $0x18c] sm:$0xff]
        %v791 = vld [vmem:[%s4 + $0x194] sm:$0xf]
        %v792 = vld [vmem:[%s4 + $0x198] sm:$0xff]
        %v793 = vld [vmem:[%s4 + $0x1a0] sm:$0xf]
        %v794 = vld [vmem:[%s4 + $0x1a4] sm:$0xff]
        %v795 = vld [vmem:[%s4 + $0x1ac] sm:$0xf]
        %v798 = vunpack.c.l.b16 %v722
        %v799 = vunpack.c.h.b16 %v722
        %v800 = vunpack.c.l.b16 %v723
        %v801 = vpack.c.b16 %v798, %v798
        %v802 = vpack.c.b16 %v799, %v799
        %v803 = vpack.c.b16 %v800, %v800
        %v878 = vunpack.c.l.b16 %v724
        %v879 = vunpack.c.h.b16 %v724
        %v880 = vunpack.c.l.b16 %v725
        %v881 = vunpack.c.l.b16 %v726
        %v882 = vunpack.c.h.b16 %v726
        %v883 = vunpack.c.l.b16 %v727
        %v884 = vunpack.c.l.b16 %v728
        %v885 = vunpack.c.h.b16 %v728
        %v886 = vunpack.c.l.b16 %v729
        %v887 = vunpack.c.l.b16 %v730
        %v888 = vunpack.c.h.b16 %v730
        %v889 = vunpack.c.l.b16 %v731
        %v890 = vunpack.c.l.b16 %v732
        %v891 = vunpack.c.h.b16 %v732
        %v892 = vunpack.c.l.b16 %v733
        %v893 = vunpack.c.l.b16 %v734
        %v894 = vunpack.c.h.b16 %v734
        %v895 = vunpack.c.l.b16 %v735
        %v896 = vunpack.c.l.b16 %v736
        %v897 = vunpack.c.h.b16 %v736
        %v898 = vunpack.c.l.b16 %v737
        %v899 = vunpack.c.l.b16 %v738
        %v900 = vunpack.c.h.b16 %v738
        %v901 = vunpack.c.l.b16 %v739
        %v902 = vunpack.c.l.b16 %v740
        %v903 = vunpack.c.h.b16 %v740
        %v904 = vunpack.c.l.b16 %v741
        %v905 = vunpack.c.l.b16 %v742
        %v906 = vunpack.c.h.b16 %v742
        %v907 = vunpack.c.l.b16 %v743
        %v908 = vunpack.c.l.b16 %v744
        %v909 = vunpack.c.h.b16 %v744
        %v910 = vunpack.c.l.b16 %v745
        %v911 = vunpack.c.l.b16 %v746
        %v912 = vunpack.c.h.b16 %v746
        %v913 = vunpack.c.l.b16 %v747
        %v914 = vunpack.c.l.b16 %v748
        %v915 = vunpack.c.h.b16 %v748
        %v916 = vunpack.c.l.b16 %v749
        %v917 = vunpack.c.l.b16 %v750
        %v918 = vunpack.c.h.b16 %v750
        %v919 = vunpack.c.l.b16 %v751
        %v920 = vunpack.c.l.b16 %v752
        %v921 = vunpack.c.h.b16 %v752
        %v922 = vunpack.c.l.b16 %v753
        %v923 = vunpack.c.l.b16 %v754
        %v924 = vunpack.c.h.b16 %v754
        %v925 = vunpack.c.l.b16 %v755
        %v926 = vunpack.c.l.b16 %v756
        %v927 = vunpack.c.h.b16 %v756
        %v928 = vunpack.c.l.b16 %v757
        %v929 = vunpack.c.l.b16 %v758
        %v930 = vunpack.c.h.b16 %v758
        %v931 = vunpack.c.l.b16 %v759
        %v932 = vunpack.c.l.b16 %v760
        %v933 = vunpack.c.h.b16 %v760
        %v934 = vunpack.c.l.b16 %v761
        %v935 = vunpack.c.l.b16 %v762
        %v936 = vunpack.c.h.b16 %v762
        %v937 = vunpack.c.l.b16 %v763
        %v938 = vunpack.c.l.b16 %v764
        %v939 = vunpack.c.h.b16 %v764
        %v940 = vunpack.c.l.b16 %v765
        %v941 = vunpack.c.l.b16 %v766
        %v942 = vunpack.c.h.b16 %v766
        %v943 = vunpack.c.l.b16 %v767
        %v944 = vunpack.c.l.b16 %v768
        %v945 = vunpack.c.h.b16 %v768
        %v946 = vunpack.c.l.b16 %v769
        %v947 = vunpack.c.l.b16 %v770
        %v948 = vunpack.c.h.b16 %v770
        %v949 = vunpack.c.l.b16 %v771
        %v950 = vunpack.c.l.b16 %v772
        %v951 = vunpack.c.h.b16 %v772
        %v952 = vunpack.c.l.b16 %v773
        %v953 = vunpack.c.l.b16 %v774
        %v954 = vunpack.c.h.b16 %v774
        %v955 = vunpack.c.l.b16 %v775
        %v956 = vunpack.c.l.b16 %v776
        %v957 = vunpack.c.h.b16 %v776
        %v958 = vunpack.c.l.b16 %v777
        %v959 = vunpack.c.l.b16 %v778
        %v960 = vunpack.c.h.b16 %v778
        %v961 = vunpack.c.l.b16 %v779
        %v962 = vunpack.c.l.b16 %v780
        %v963 = vunpack.c.h.b16 %v780
        %v964 = vunpack.c.l.b16 %v781
        %v965 = vunpack.c.l.b16 %v782
        %v966 = vunpack.c.h.b16 %v782
        %v967 = vunpack.c.l.b16 %v783
        %v968 = vunpack.c.l.b16 %v784
        %v969 = vunpack.c.h.b16 %v784
        %v970 = vunpack.c.l.b16 %v785
        %v971 = vunpack.c.l.b16 %v786
        %v972 = vunpack.c.h.b16 %v786
        %v973 = vunpack.c.l.b16 %v787
        %v974 = vunpack.c.l.b16 %v788
        %v975 = vunpack.c.h.b16 %v788
        %v976 = vunpack.c.l.b16 %v789
        %v977 = vunpack.c.l.b16 %v790
        %v978 = vunpack.c.h.b16 %v790
        %v979 = vunpack.c.l.b16 %v791
        %v980 = vunpack.c.l.b16 %v792
        %v981 = vunpack.c.h.b16 %v792
        %v982 = vunpack.c.l.b16 %v793
        %v983 = vunpack.c.l.b16 %v794
        %v984 = vunpack.c.h.b16 %v794
        %v985 = vunpack.c.l.b16 %v795
        %v986 = vpack.c.b16 %v881, %v878
        %v987 = vpack.c.b16 %v882, %v879
        %v988 = vpack.c.b16 %v883, %v880
        %v989 = vpack.c.b16 %v887, %v884
        %v990 = vpack.c.b16 %v888, %v885
        %v991 = vpack.c.b16 %v889, %v886
        %v992 = vpack.c.b16 %v893, %v890
        %v993 = vpack.c.b16 %v894, %v891
        %v994 = vpack.c.b16 %v895, %v892
        %v995 = vpack.c.b16 %v899, %v896
        %v996 = vpack.c.b16 %v900, %v897
        %v997 = vpack.c.b16 %v901, %v898
        %v998 = vpack.c.b16 %v905, %v902
        %v999 = vpack.c.b16 %v906, %v903
        %v1000 = vpack.c.b16 %v907, %v904
        %v1001 = vpack.c.b16 %v911, %v908
        %v1002 = vpack.c.b16 %v912, %v909
        %v1003 = vpack.c.b16 %v913, %v910
        %v1004 = vpack.c.b16 %v917, %v914
        %v1005 = vpack.c.b16 %v918, %v915
        %v1006 = vpack.c.b16 %v919, %v916
        %v1007 = vpack.c.b16 %v923, %v920
        %v1008 = vpack.c.b16 %v924, %v921
        %v1009 = vpack.c.b16 %v925, %v922
        %v1010 = vpack.c.b16 %v929, %v926
        %v1011 = vpack.c.b16 %v930, %v927
        %v1012 = vpack.c.b16 %v931, %v928
        %v1013 = vpack.c.b16 %v935, %v932
        %v1014 = vpack.c.b16 %v936, %v933
        %v1015 = vpack.c.b16 %v937, %v934
        %v1016 = vpack.c.b16 %v941, %v938
        %v1017 = vpack.c.b16 %v942, %v939
        %v1018 = vpack.c.b16 %v943, %v940
        %v1019 = vpack.c.b16 %v947, %v944
        %v1020 = vpack.c.b16 %v948, %v945
        %v1021 = vpack.c.b16 %v949, %v946
        %v1022 = vpack.c.b16 %v953, %v950
        %v1023 = vpack.c.b16 %v954, %v951
        %v1024 = vpack.c.b16 %v955, %v952
        %v1025 = vpack.c.b16 %v959, %v956
        %v1026 = vpack.c.b16 %v960, %v957
        %v1027 = vpack.c.b16 %v961, %v958
        %v1028 = vpack.c.b16 %v965, %v962
        %v1029 = vpack.c.b16 %v966, %v963
        %v1030 = vpack.c.b16 %v967, %v964
        %v1031 = vpack.c.b16 %v971, %v968
        %v1032 = vpack.c.b16 %v972, %v969
        %v1033 = vpack.c.b16 %v973, %v970
        %v1034 = vpack.c.b16 %v977, %v974
        %v1035 = vpack.c.b16 %v978, %v975
        %v1036 = vpack.c.b16 %v979, %v976
        %v1037 = vpack.c.b16 %v983, %v980
        %v1038 = vpack.c.b16 %v984, %v981
        %v1039 = vpack.c.b16 %v985, %v982
        %vm1094 = vcmask 261120
        %v1096 = vsel %vm1094, %v803, 0
        %1098 = vmatprep.subr.bf16.mxu0 %v1008
        %1099 = vmatpush1.bf16.msra.mxu0 %v1007
        %1100 = vmatprep.subr.bf16.mxu0 %v1005
        %1101 = vmatpush1.bf16.msra.mxu0 %v1004
        %1102 = vmatprep.subr.bf16.mxu0 %v1002
        %1103 = vmatpush1.bf16.msra.mxu0 %v1001
        %1104 = vmatprep.subr.bf16.mxu0 %v999
        %1105 = vmatpush1.bf16.msra.mxu0 %v998
        %1106 = vmatprep.subr.bf16.mxu0 %v996
        %1107 = vmatpush1.bf16.msra.mxu0 %v995
        %1108 = vmatprep.subr.bf16.mxu0 %v993
        %1109 = vmatpush1.bf16.msra.mxu0 %v992
        %1110 = vmatprep.subr.bf16.mxu0 %v990
        %1111 = vmatpush1.bf16.msra.mxu0 %v989
        %1112 = vmatprep.subr.bf16.mxu0 %v987
        %1113 = vmatpush1.bf16.msra.mxu0 %v986
        %1114 = vmatprep.subr.bf16.mxu0 %v1032
        %1115 = vmatpush2.bf16.msra.mxu0 %v1031
        %1116 = vmatprep.subr.bf16.mxu0 %v1029
        %1117 = vmatpush2.bf16.msra.mxu0 %v1028
        %1118 = vmatprep.subr.bf16.mxu0 %v1026
        %1119 = vmatpush2.bf16.msra.mxu0 %v1025
        %1120 = vmatprep.subr.bf16.mxu0 %v1023
        %1121 = vmatpush2.bf16.msra.mxu0 %v1022
        %1122 = vmatprep.subr.bf16.mxu0 %v1020
        %1123 = vmatpush2.bf16.msra.mxu0 %v1019
        %1124 = vmatprep.subr.bf16.mxu0 %v1017
        %1125 = vmatpush2.bf16.msra.mxu0 %v1016
        %1126 = vmatprep.subr.bf16.mxu0 %v1014
        %1127 = vmatpush2.bf16.msra.mxu0 %v1013
        %1128 = vmatprep.subr.bf16.mxu0 %v1011
        %1129 = vmatpush2.bf16.msra.mxu0 %v1010
        %1130 = vmatprep.mubr.bf16.mxu0 %v802
        %1131 = vmatmul.mubr.bf16.gmra.mxu0 %v801
        %v1132 = vpop.f32.mrf.mxu0
        %v1133 = vadd.f32 0.0, %v1132
        %v1134 = vpop.f32.mrf.mxu0
        %v1135 = vadd.f32 0.0, %v1134
        %v1136 = vpop.f32.mrf.mxu0
        %v1137 = vpop.f32.mrf.mxu0
        %1138 = vdwg.mxu0
        %1139 = vmatprep.subr.bf16.mxu0 0
        %1140 = vmatpush1.bf16.msra.mxu0 0
        %1141 = vmatprep.subr.bf16.mxu0 0
        %1142 = vmatpush1.bf16.msra.mxu0 0
        %1143 = vmatprep.subr.bf16.mxu0 0
        %1144 = vmatpush1.bf16.msra.mxu0 0
        %1145 = vmatprep.subr.bf16.mxu0 0
        %1146 = vmatpush1.bf16.msra.mxu0 0
        %1147 = vmatprep.subr.bf16.mxu0 0
        %1148 = vmatpush1.bf16.msra.mxu0 0
        %1149 = vmatprep.subr.bf16.mxu0 0
        %1150 = vmatpush1.bf16.msra.mxu0 0
        %1151 = vmatprep.subr.bf16.mxu0 %v1038
        %1152 = vmatpush1.bf16.msra.mxu0 %v1037
        %1153 = vmatprep.subr.bf16.mxu0 %v1035
        %1154 = vmatpush1.bf16.msra.mxu0 %v1034
        %1155 = vmatprep.subr.bf16.mxu0 0
        %1156 = vmatpush2.bf16.msra.mxu0 0
        %1157 = vmatprep.subr.bf16.mxu0 0
        %1158 = vmatpush2.bf16.msra.mxu0 0
        %1159 = vmatprep.subr.bf16.mxu0 0
        %1160 = vmatpush2.bf16.msra.mxu0 0
        %1161 = vmatprep.subr.bf16.mxu0 0
        %1162 = vmatpush2.bf16.msra.mxu0 0
        %1163 = vmatprep.subr.bf16.mxu0 0
        %1164 = vmatpush2.bf16.msra.mxu0 0
        %1165 = vmatprep.subr.bf16.mxu0 0
        %1166 = vmatpush2.bf16.msra.mxu0 0
        %1167 = vmatprep.subr.bf16.mxu0 0
        %1168 = vmatpush2.bf16.msra.mxu0 0
        %1169 = vmatprep.subr.bf16.mxu0 0
        %1170 = vmatpush2.bf16.msra.mxu0 0
        %1171 = vmatprep.mubr.bf16.mxu0 0
        %1172 = vmatmul.mubr.bf16.gmra.mxu0 %v1096
        %v1173 = vpop.f32.mrf.mxu0
        %v1174 = vadd.f32 %v1133, %v1173
        %v1175 = vpop.f32.mrf.mxu0
        %v1176 = vadd.f32 %v1135, %v1175
        %v1177 = vpop.f32.mrf.mxu0
        %v1178 = vpop.f32.mrf.mxu0
        %1179 = vdwg.mxu0
        %1180 = vmatprep.subr.bf16.mxu0 0
        %1181 = vmatpush1.bf16.msra.mxu0 %v1009
        %1182 = vmatprep.subr.bf16.mxu0 0
        %1183 = vmatpush1.bf16.msra.mxu0 %v1006
        %1184 = vmatprep.subr.bf16.mxu0 0
        %1185 = vmatpush1.bf16.msra.mxu0 %v1003
        %1186 = vmatprep.subr.bf16.mxu0 0
        %1187 = vmatpush1.bf16.msra.mxu0 %v1000
        %1188 = vmatprep.subr.bf16.mxu0 0
        %1189 = vmatpush1.bf16.msra.mxu0 %v997
        %1190 = vmatprep.subr.bf16.mxu0 0
        %1191 = vmatpush1.bf16.msra.mxu0 %v994
        %1192 = vmatprep.subr.bf16.mxu0 0
        %1193 = vmatpush1.bf16.msra.mxu0 %v991
        %1194 = vmatprep.subr.bf16.mxu0 0
        %1195 = vmatpush1.bf16.msra.mxu0 %v988
        %1196 = vmatprep.subr.bf16.mxu0 0
        %1197 = vmatpush2.bf16.msra.mxu0 %v1033
        %1198 = vmatprep.subr.bf16.mxu0 0
        %1199 = vmatpush2.bf16.msra.mxu0 %v1030
        %1200 = vmatprep.subr.bf16.mxu0 0
        %1201 = vmatpush2.bf16.msra.mxu0 %v1027
        %1202 = vmatprep.subr.bf16.mxu0 0
        %1203 = vmatpush2.bf16.msra.mxu0 %v1024
        %1204 = vmatprep.subr.bf16.mxu0 0
        %1205 = vmatpush2.bf16.msra.mxu0 %v1021
        %1206 = vmatprep.subr.bf16.mxu0 0
        %1207 = vmatpush2.bf16.msra.mxu0 %v1018
        %1208 = vmatprep.subr.bf16.mxu0 0
        %1209 = vmatpush2.bf16.msra.mxu0 %v1015
        %1210 = vmatprep.subr.bf16.mxu0 0
        %1211 = vmatpush2.bf16.msra.mxu0 %v1012
        %1212 = vmatprep.mubr.bf16.mxu0 %v802
        %1213 = vmatmul.mubr.bf16.gmra.mxu0 %v801
        %v1214 = vpop.f32.mrf.mxu0
        %v1215 = vadd.f32 0.0, %v1214
        %v1216 = vpop.f32.mrf.mxu0
        %v1217 = vpop.f32.mrf.mxu0
        %v1218 = vpop.f32.mrf.mxu0
        %1219 = vdwg.mxu0
        %1220 = vmatprep.subr.bf16.mxu0 0
        %1221 = vmatpush1.bf16.msra.mxu0 0
        %1222 = vmatprep.subr.bf16.mxu0 0
        %1223 = vmatpush1.bf16.msra.mxu0 0
        %1224 = vmatprep.subr.bf16.mxu0 0
        %1225 = vmatpush1.bf16.msra.mxu0 0
        %1226 = vmatprep.subr.bf16.mxu0 0
        %1227 = vmatpush1.bf16.msra.mxu0 0
        %1228 = vmatprep.subr.bf16.mxu0 0
        %1229 = vmatpush1.bf16.msra.mxu0 0
        %1230 = vmatprep.subr.bf16.mxu0 0
        %1231 = vmatpush1.bf16.msra.mxu0 0
        %1232 = vmatprep.subr.bf16.mxu0 0
        %1233 = vmatpush1.bf16.msra.mxu0 %v1039
        %1234 = vmatprep.subr.bf16.mxu0 0
        %1235 = vmatpush1.bf16.msra.mxu0 %v1036
        %1236 = vmatprep.subr.bf16.mxu0 0
        %1237 = vmatpush2.bf16.msra.mxu0 0
        %1238 = vmatprep.subr.bf16.mxu0 0
        %1239 = vmatpush2.bf16.msra.mxu0 0
        %1240 = vmatprep.subr.bf16.mxu0 0
        %1241 = vmatpush2.bf16.msra.mxu0 0
        %1242 = vmatprep.subr.bf16.mxu0 0
        %1243 = vmatpush2.bf16.msra.mxu0 0
        %1244 = vmatprep.subr.bf16.mxu0 0
        %1245 = vmatpush2.bf16.msra.mxu0 0
        %1246 = vmatprep.subr.bf16.mxu0 0
        %1247 = vmatpush2.bf16.msra.mxu0 0
        %1248 = vmatprep.subr.bf16.mxu0 0
        %1249 = vmatpush2.bf16.msra.mxu0 0
        %1250 = vmatprep.subr.bf16.mxu0 0
        %1251 = vmatpush2.bf16.msra.mxu0 0
        %1252 = vmatprep.mubr.bf16.mxu0 0
        %1253 = vmatmul.mubr.bf16.gmra.mxu0 %v1096
        %v1254 = vpop.f32.mrf.mxu0
        %v1255 = vadd.f32 %v1215, %v1254
        %v1256 = vpop.f32.mrf.mxu0
        %v1257 = vpop.f32.mrf.mxu0
        %v1258 = vpop.f32.mrf.mxu0
        %1259 = vdwg.mxu0
        %v1260 = vmax.f32 %v1174, %v1176
        %v1261 = vmax.f32 %v1260, %v1255
        %1262 = vmax.xlane.f32.xlu0 %v1261
        %v1263 = vpop.xlane.xlu0 %1262
        %v1264 = vsub.f32 %v1174, %v1263
        %v1265 = vsub.f32 %v1176, %v1263
        %v1266 = vsub.f32 %v1255, %v1263
        %v1267 = vmul.f32 %v1264, 1.442695
        %v1268 = vpow.pop %v1267
        %v1269 = vmul.f32 %v1265, 1.442695
        %v1270 = vpow.pop %v1269
        %v1271 = vmul.f32 %v1266, 1.442695
        %v1272 = vpow.pop %v1271
        %v1273 = vld [vmem:[%s5] sm:$0xff]
        %v1274 = vld [vmem:[%s5 + $0x8] sm:$0xff]
        %v1275 = vld [vmem:[%s5 + $0x10] sm:$0xff]
        %v1276 = vld [vmem:[%s5 + $0x18] sm:$0xff]
        %v1277 = vld [vmem:[%s5 + $0x20] sm:$0xff]
        %v1278 = vld [vmem:[%s5 + $0x28] sm:$0xff]
        %v1279 = vld [vmem:[%s5 + $0x30] sm:$0xff]
        %v1280 = vld [vmem:[%s5 + $0x38] sm:$0xff]
        %v1281 = vld [vmem:[%s5 + $0x40] sm:$0xff]
        %v1282 = vld [vmem:[%s5 + $0x48] sm:$0xff]
        %v1283 = vld [vmem:[%s5 + $0x50] sm:$0xff]
        %v1284 = vld [vmem:[%s5 + $0x58] sm:$0xff]
        %v1285 = vld [vmem:[%s5 + $0x60] sm:$0xff]
        %v1286 = vld [vmem:[%s5 + $0x68] sm:$0xff]
        %v1287 = vld [vmem:[%s5 + $0x70] sm:$0xff]
        %v1288 = vld [vmem:[%s5 + $0x78] sm:$0xff]
        %v1289 = vld [vmem:[%s5 + $0x80] sm:$0xff]
        %v1290 = vld [vmem:[%s5 + $0x88] sm:$0xff]
        %v1291 = vld [vmem:[%s5 + $0x90] sm:$0xff]
        %v1292 = vld [vmem:[%s5 + $0x98] sm:$0xff]
        %v1293 = vld [vmem:[%s5 + $0xa0] sm:$0xff]
        %v1294 = vld [vmem:[%s5 + $0xa8] sm:$0xff]
        %v1295 = vld [vmem:[%s5 + $0xb0] sm:$0xff]
        %v1296 = vld [vmem:[%s5 + $0xb8] sm:$0xff]
        %v1297 = vld [vmem:[%s5 + $0xc0] sm:$0xff]
        %v1298 = vld [vmem:[%s5 + $0xc8] sm:$0xff]
        %v1299 = vld [vmem:[%s5 + $0xd0] sm:$0xff]
        %v1300 = vld [vmem:[%s5 + $0xd8] sm:$0xff]
        %v1301 = vld [vmem:[%s5 + $0xe0] sm:$0xff]
        %v1302 = vld [vmem:[%s5 + $0xe8] sm:$0xff]
        %v1303 = vld [vmem:[%s5 + $0xf0] sm:$0xff]
        %v1304 = vld [vmem:[%s5 + $0xf8] sm:$0xff]
        %v1305 = vld [vmem:[%s5 + $0x100] sm:$0xff]
        %v1306 = vld [vmem:[%s5 + $0x108] sm:$0xff]
        %v1307 = vld [vmem:[%s5 + $0x110] sm:$0xff]
        %v1308 = vld [vmem:[%s5 + $0x118] sm:$0xff]
        %v1309 = vld [vmem:[%s5 + $0x120] sm:$0xff]
        %v1310 = vld [vmem:[%s5 + $0x128] sm:$0xff]
        %v1311 = vld [vmem:[%s5 + $0x130] sm:$0xff]
        %v1312 = vld [vmem:[%s5 + $0x138] sm:$0xff]
        %v1313 = vld [vmem:[%s5 + $0x140] sm:$0xff]
        %v1314 = vld [vmem:[%s5 + $0x148] sm:$0xff]
        %v1315 = vld [vmem:[%s5 + $0x150] sm:$0xff]
        %v1316 = vld [vmem:[%s5 + $0x158] sm:$0xff]
        %v1317 = vld [vmem:[%s5 + $0x160] sm:$0xff]
        %v1318 = vld [vmem:[%s5 + $0x168] sm:$0xff]
        %v1319 = vld [vmem:[%s5 + $0x170] sm:$0xff]
        %v1320 = vld [vmem:[%s5 + $0x178] sm:$0xff]
        %1321 = vmatprep.subr.mxu0 0.0
        %1322 = vmatpush1.msra.mxu0 %v1288
        %1323 = vmatprep.subr.mxu0 0.0
        %1324 = vmatpush1.msra.mxu0 %v1287
        %1325 = vmatprep.subr.mxu0 0.0
        %1326 = vmatpush1.msra.mxu0 %v1286
        %1327 = vmatprep.subr.mxu0 0.0
        %1328 = vmatpush1.msra.mxu0 %v1285
        %1329 = vmatprep.subr.mxu0 0.0
        %1330 = vmatpush1.msra.mxu0 %v1284
        %1331 = vmatprep.subr.mxu0 0.0
        %1332 = vmatpush1.msra.mxu0 %v1283
        %1333 = vmatprep.subr.mxu0 0.0
        %1334 = vmatpush1.msra.mxu0 %v1282
        %1335 = vmatprep.subr.mxu0 0.0
        %1336 = vmatpush1.msra.mxu0 %v1281
        %1337 = vmatprep.subr.mxu0 0.0
        %1338 = vmatpush1.msra.mxu0 %v1280
        %1339 = vmatprep.subr.mxu0 0.0
        %1340 = vmatpush1.msra.mxu0 %v1279
        %1341 = vmatprep.subr.mxu0 0.0
        %1342 = vmatpush1.msra.mxu0 %v1278
        %1343 = vmatprep.subr.mxu0 0.0
        %1344 = vmatpush1.msra.mxu0 %v1277
        %1345 = vmatprep.subr.mxu0 0.0
        %1346 = vmatpush1.msra.mxu0 %v1276
        %1347 = vmatprep.subr.mxu0 0.0
        %1348 = vmatpush1.msra.mxu0 %v1275
        %1349 = vmatprep.subr.mxu0 0.0
        %1350 = vmatpush1.msra.mxu0 %v1274
        %1351 = vmatprep.subr.mxu0 0.0
        %1352 = vmatpush1.msra.mxu0 %v1273
        %1353 = vmatprep.subr.mxu0 0.0
        %1354 = vmatpush2.msra.mxu0 %v1304
        %1355 = vmatprep.subr.mxu0 0.0
        %1356 = vmatpush2.msra.mxu0 %v1303
        %1357 = vmatprep.subr.mxu0 0.0
        %1358 = vmatpush2.msra.mxu0 %v1302
        %1359 = vmatprep.subr.mxu0 0.0
        %1360 = vmatpush2.msra.mxu0 %v1301
        %1361 = vmatprep.subr.mxu0 0.0
        %1362 = vmatpush2.msra.mxu0 %v1300
        %1363 = vmatprep.subr.mxu0 0.0
        %1364 = vmatpush2.msra.mxu0 %v1299
        %1365 = vmatprep.subr.mxu0 0.0
        %1366 = vmatpush2.msra.mxu0 %v1298
        %1367 = vmatprep.subr.mxu0 0.0
        %1368 = vmatpush2.msra.mxu0 %v1297
        %1369 = vmatprep.subr.mxu0 0.0
        %1370 = vmatpush2.msra.mxu0 %v1296
        %1371 = vmatprep.subr.mxu0 0.0
        %1372 = vmatpush2.msra.mxu0 %v1295
        %1373 = vmatprep.subr.mxu0 0.0
        %1374 = vmatpush2.msra.mxu0 %v1294
        %1375 = vmatprep.subr.mxu0 0.0
        %1376 = vmatpush2.msra.mxu0 %v1293
        %1377 = vmatprep.subr.mxu0 0.0
        %1378 = vmatpush2.msra.mxu0 %v1292
        %1379 = vmatprep.subr.mxu0 0.0
        %1380 = vmatpush2.msra.mxu0 %v1291
        %1381 = vmatprep.subr.mxu0 0.0
        %1382 = vmatpush2.msra.mxu0 %v1290
        %1383 = vmatprep.subr.mxu0 0.0
        %1384 = vmatpush2.msra.mxu0 %v1289
        %1385 = vmatprep.mubr.f32.mxu0 %v1270
        %1386 = vmatmul.mubr.f32.gmra.mxu0 %v1268
        %v1387 = vpop.f32.mrf.mxu0
        %v1388 = vadd.f32 0.0, %v1387
        %v1389 = vpop.f32.mrf.mxu0
        %1390 = vdwg.mxu0
        %1391 = vmatprep.subr.mxu0 0.0
        %1392 = vmatpush1.msra.mxu0 %v1320
        %1393 = vmatprep.subr.mxu0 0.0
        %1394 = vmatpush1.msra.mxu0 %v1319
        %1395 = vmatprep.subr.mxu0 0.0
        %1396 = vmatpush1.msra.mxu0 %v1318
        %1397 = vmatprep.subr.mxu0 0.0
        %1398 = vmatpush1.msra.mxu0 %v1317
        %1399 = vmatprep.subr.mxu0 0.0
        %1400 = vmatpush1.msra.mxu0 %v1316
        %1401 = vmatprep.subr.mxu0 0.0
        %1402 = vmatpush1.msra.mxu0 %v1315
        %1403 = vmatprep.subr.mxu0 0.0
        %1404 = vmatpush1.msra.mxu0 %v1314
        %1405 = vmatprep.subr.mxu0 0.0
        %1406 = vmatpush1.msra.mxu0 %v1313
        %1407 = vmatprep.subr.mxu0 0.0
        %1408 = vmatpush1.msra.mxu0 %v1312
        %1409 = vmatprep.subr.mxu0 0.0
        %1410 = vmatpush1.msra.mxu0 %v1311
        %1411 = vmatprep.subr.mxu0 0.0
        %1412 = vmatpush1.msra.mxu0 %v1310
        %1413 = vmatprep.subr.mxu0 0.0
        %1414 = vmatpush1.msra.mxu0 %v1309
        %1415 = vmatprep.subr.mxu0 0.0
        %1416 = vmatpush1.msra.mxu0 %v1308
        %1417 = vmatprep.subr.mxu0 0.0
        %1418 = vmatpush1.msra.mxu0 %v1307
        %1419 = vmatprep.subr.mxu0 0.0
        %1420 = vmatpush1.msra.mxu0 %v1306
        %1421 = vmatprep.subr.mxu0 0.0
        %1422 = vmatpush1.msra.mxu0 %v1305
        %1423 = vmatprep.subr.mxu0 0.0
        %1424 = vmatpush2.msra.mxu0 0.0
        %1425 = vmatprep.subr.mxu0 0.0
        %1426 = vmatpush2.msra.mxu0 0.0
        %1427 = vmatprep.subr.mxu0 0.0
        %1428 = vmatpush2.msra.mxu0 0.0
        %1429 = vmatprep.subr.mxu0 0.0
        %1430 = vmatpush2.msra.mxu0 0.0
        %1431 = vmatprep.subr.mxu0 0.0
        %1432 = vmatpush2.msra.mxu0 0.0
        %1433 = vmatprep.subr.mxu0 0.0
        %1434 = vmatpush2.msra.mxu0 0.0
        %1435 = vmatprep.subr.mxu0 0.0
        %1436 = vmatpush2.msra.mxu0 0.0
        %1437 = vmatprep.subr.mxu0 0.0
        %1438 = vmatpush2.msra.mxu0 0.0
        %1439 = vmatprep.subr.mxu0 0.0
        %1440 = vmatpush2.msra.mxu0 0.0
        %1441 = vmatprep.subr.mxu0 0.0
        %1442 = vmatpush2.msra.mxu0 0.0
        %1443 = vmatprep.subr.mxu0 0.0
        %1444 = vmatpush2.msra.mxu0 0.0
        %1445 = vmatprep.subr.mxu0 0.0
        %1446 = vmatpush2.msra.mxu0 0.0
        %1447 = vmatprep.subr.mxu0 0.0
        %1448 = vmatpush2.msra.mxu0 0.0
        %1449 = vmatprep.subr.mxu0 0.0
        %1450 = vmatpush2.msra.mxu0 0.0
        %1451 = vmatprep.subr.mxu0 0.0
        %1452 = vmatpush2.msra.mxu0 0.0
        %1453 = vmatprep.subr.mxu0 0.0
        %1454 = vmatpush2.msra.mxu0 0.0
        %1455 = vmatprep.mubr.f32.mxu0 0.0
        %1456 = vmatmul.mubr.f32.gmra.mxu0 %v1272
        %v1457 = vpop.f32.mrf.mxu0
        %v1458 = vadd.f32 %v1388, %v1457
        %v1459 = vpop.f32.mrf.mxu0
        %1460 = vdwg.mxu0
        %v1461 = vrcp.pop %v1458
        %v1462 = vld [vmem:[%s6] sm:$0xff]
        %v1463 = vld [vmem:[%s6 + $0x8] sm:$0xff]
        %v1464 = vld [vmem:[%s6 + $0x10] sm:$0xff]
        %v1465 = vld [vmem:[%s6 + $0x18] sm:$0xff]
        %v1466 = vld [vmem:[%s6 + $0x20] sm:$0xff]
        %v1467 = vld [vmem:[%s6 + $0x28] sm:$0xff]
        %v1468 = vld [vmem:[%s6 + $0x30] sm:$0xff]
        %v1469 = vld [vmem:[%s6 + $0x38] sm:$0xff]
        %v1470 = vld [vmem:[%s6 + $0x40] sm:$0xff]
        %vm1471 = vcmask 195584
        %v1473 = vsel %vm1471, %v1461, 0
        %1475 = vmatprep.subr.mxu0 0.0
        %1476 = vmatpush1.msra.mxu0 0.0
        %1477 = vmatprep.subr.mxu0 0.0
        %1478 = vmatpush1.msra.mxu0 0.0
        %1479 = vmatprep.subr.mxu0 0.0
        %1480 = vmatpush1.msra.mxu0 0.0
        %1481 = vmatprep.subr.mxu0 0.0
        %1482 = vmatpush1.msra.mxu0 0.0
        %1483 = vmatprep.subr.mxu0 0.0
        %1484 = vmatpush1.msra.mxu0 0.0
        %1485 = vmatprep.subr.mxu0 0.0
        %1486 = vmatpush1.msra.mxu0 0.0
        %1487 = vmatprep.subr.mxu0 0.0
        %1488 = vmatpush1.msra.mxu0 0.0
        %1489 = vmatprep.subr.mxu0 0.0
        %1490 = vmatpush1.msra.mxu0 0.0
        %1491 = vmatprep.subr.mxu0 0.0
        %1492 = vmatpush1.msra.mxu0 0.0
        %1493 = vmatprep.subr.mxu0 0.0
        %1494 = vmatpush1.msra.mxu0 0.0
        %1495 = vmatprep.subr.mxu0 0.0
        %1496 = vmatpush1.msra.mxu0 0.0
        %1497 = vmatprep.subr.mxu0 0.0
        %1498 = vmatpush1.msra.mxu0 0.0
        %1499 = vmatprep.subr.mxu0 0.0
        %1500 = vmatpush1.msra.mxu0 0.0
        %1501 = vmatprep.subr.mxu0 %v1469
        %1502 = vmatpush1.msra.mxu0 %v1468
        %1503 = vmatprep.subr.mxu0 %v1466
        %1504 = vmatpush1.msra.mxu0 %v1465
        %1505 = vmatprep.subr.mxu0 %v1463
        %1506 = vmatpush1.msra.mxu0 %v1462
        %1507 = vmatprep.subr.mxu0 0.0
        %1508 = vmatpush2.msra.mxu0 0.0
        %1509 = vmatprep.subr.mxu0 0.0
        %1510 = vmatpush2.msra.mxu0 0.0
        %1511 = vmatprep.subr.mxu0 0.0
        %1512 = vmatpush2.msra.mxu0 0.0
        %1513 = vmatprep.subr.mxu0 0.0
        %1514 = vmatpush2.msra.mxu0 0.0
        %1515 = vmatprep.subr.mxu0 0.0
        %1516 = vmatpush2.msra.mxu0 0.0
        %1517 = vmatprep.subr.mxu0 0.0
        %1518 = vmatpush2.msra.mxu0 0.0
        %1519 = vmatprep.subr.mxu0 0.0
        %1520 = vmatpush2.msra.mxu0 0.0
        %1521 = vmatprep.subr.mxu0 0.0
        %1522 = vmatpush2.msra.mxu0 0.0
        %1523 = vmatprep.subr.mxu0 0.0
        %1524 = vmatpush2.msra.mxu0 0.0
        %1525 = vmatprep.subr.mxu0 0.0
        %1526 = vmatpush2.msra.mxu0 0.0
        %1527 = vmatprep.subr.mxu0 0.0
        %1528 = vmatpush2.msra.mxu0 0.0
        %1529 = vmatprep.subr.mxu0 0.0
        %1530 = vmatpush2.msra.mxu0 0.0
        %1531 = vmatprep.subr.mxu0 0.0
        %1532 = vmatpush2.msra.mxu0 0.0
        %1533 = vmatprep.subr.mxu0 0.0
        %1534 = vmatpush2.msra.mxu0 0.0
        %1535 = vmatprep.subr.mxu0 0.0
        %1536 = vmatpush2.msra.mxu0 0.0
        %1537 = vmatprep.subr.mxu0 0.0
        %1538 = vmatpush2.msra.mxu0 0.0
        %1539 = vmatprep.mubr.f32.mxu0 0.0
        %1540 = vmatmul.mubr.f32.gmra.mxu0 %v1473
        %v1541 = vpop.f32.mrf.mxu0
        %v1542 = vadd.f32 0.0, %v1541
        %v1543 = vpop.f32.mrf.mxu0
        %v1544 = vadd.f32 0.0, %v1543
        %1545 = vdwg.mxu0
        %1546 = vmatprep.subr.mxu0 0.0
        %1547 = vmatpush1.msra.mxu0 0.0
        %1548 = vmatprep.subr.mxu0 0.0
        %1549 = vmatpush1.msra.mxu0 0.0
        %1550 = vmatprep.subr.mxu0 0.0
        %1551 = vmatpush1.msra.mxu0 0.0
        %1552 = vmatprep.subr.mxu0 0.0
        %1553 = vmatpush1.msra.mxu0 0.0
        %1554 = vmatprep.subr.mxu0 0.0
        %1555 = vmatpush1.msra.mxu0 0.0
        %1556 = vmatprep.subr.mxu0 0.0
        %1557 = vmatpush1.msra.mxu0 0.0
        %1558 = vmatprep.subr.mxu0 0.0
        %1559 = vmatpush1.msra.mxu0 0.0
        %1560 = vmatprep.subr.mxu0 0.0
        %1561 = vmatpush1.msra.mxu0 0.0
        %1562 = vmatprep.subr.mxu0 0.0
        %1563 = vmatpush1.msra.mxu0 0.0
        %1564 = vmatprep.subr.mxu0 0.0
        %1565 = vmatpush1.msra.mxu0 0.0
        %1566 = vmatprep.subr.mxu0 0.0
        %1567 = vmatpush1.msra.mxu0 0.0
        %1568 = vmatprep.subr.mxu0 0.0
        %1569 = vmatpush1.msra.mxu0 0.0
        %1570 = vmatprep.subr.mxu0 0.0
        %1571 = vmatpush1.msra.mxu0 0.0
        %1572 = vmatprep.subr.mxu0 0.0
        %1573 = vmatpush1.msra.mxu0 %v1470
        %1574 = vmatprep.subr.mxu0 0.0
        %1575 = vmatpush1.msra.mxu0 %v1467
        %1576 = vmatprep.subr.mxu0 0.0
        %1577 = vmatpush1.msra.mxu0 %v1464
        %1578 = vmatprep.subr.mxu0 0.0
        %1579 = vmatpush2.msra.mxu0 0.0
        %1580 = vmatprep.subr.mxu0 0.0
        %1581 = vmatpush2.msra.mxu0 0.0
        %1582 = vmatprep.subr.mxu0 0.0
        %1583 = vmatpush2.msra.mxu0 0.0
        %1584 = vmatprep.subr.mxu0 0.0
        %1585 = vmatpush2.msra.mxu0 0.0
        %1586 = vmatprep.subr.mxu0 0.0
        %1587 = vmatpush2.msra.mxu0 0.0
        %1588 = vmatprep.subr.mxu0 0.0
        %1589 = vmatpush2.msra.mxu0 0.0
        %1590 = vmatprep.subr.mxu0 0.0
        %1591 = vmatpush2.msra.mxu0 0.0
        %1592 = vmatprep.subr.mxu0 0.0
        %1593 = vmatpush2.msra.mxu0 0.0
        %1594 = vmatprep.subr.mxu0 0.0
        %1595 = vmatpush2.msra.mxu0 0.0
        %1596 = vmatprep.subr.mxu0 0.0
        %1597 = vmatpush2.msra.mxu0 0.0
        %1598 = vmatprep.subr.mxu0 0.0
        %1599 = vmatpush2.msra.mxu0 0.0
        %1600 = vmatprep.subr.mxu0 0.0
        %1601 = vmatpush2.msra.mxu0 0.0
        %1602 = vmatprep.subr.mxu0 0.0
        %1603 = vmatpush2.msra.mxu0 0.0
        %1604 = vmatprep.subr.mxu0 0.0
        %1605 = vmatpush2.msra.mxu0 0.0
        %1606 = vmatprep.subr.mxu0 0.0
        %1607 = vmatpush2.msra.mxu0 0.0
        %1608 = vmatprep.subr.mxu0 0.0
        %1609 = vmatpush2.msra.mxu0 0.0
        %1610 = vmatprep.mubr.f32.mxu0 0.0
        %1611 = vmatmul.mubr.f32.gmra.mxu0 %v1473
        %v1612 = vpop.f32.mrf.mxu0
        %v1613 = vadd.f32 0.0, %v1612
        %v1614 = vpop.f32.mrf.mxu0
        %1615 = vdwg.mxu0
        %v1616 = vmul.f32 %v1268, %v1542
        %v1617 = vmul.f32 %v1270, %v1544
        %v1618 = vmul.f32 %v1272, %v1613
        %v1619 = vld [vmem:[%s7] sm:$0xf]
        %v1620 = vld [vmem:[%s7 + $0x4] sm:$0xf]
        %v1621 = vld [vmem:[%s7 + $0x8] sm:$0xf]
        %v1622 = vld [vmem:[%s7 + $0xc] sm:$0xf]
        %v1623 = vld [vmem:[%s7 + $0x10] sm:$0xf]
        %v1624 = vld [vmem:[%s7 + $0x14] sm:$0xf]
        %v1625 = vld [vmem:[%s7 + $0x18] sm:$0xf]
        %v1626 = vld [vmem:[%s7 + $0x1c] sm:$0xf]
        %v1627 = vld [vmem:[%s7 + $0x20] sm:$0xf]
        %v1628 = vld [vmem:[%s7 + $0x24] sm:$0xf]
        %v1629 = vld [vmem:[%s7 + $0x28] sm:$0xf]
        %v1630 = vld [vmem:[%s7 + $0x2c] sm:$0xf]
        %v1631 = vld [vmem:[%s7 + $0x30] sm:$0xf]
        %v1632 = vld [vmem:[%s7 + $0x34] sm:$0xf]
        %v1633 = vld [vmem:[%s7 + $0x38] sm:$0xf]
        %v1634 = vld [vmem:[%s7 + $0x3c] sm:$0xf]
        %v1635 = vld [vmem:[%s7 + $0x40] sm:$0xf]
        %v1636 = vld [vmem:[%s7 + $0x44] sm:$0xf]
        %v1637 = vld [vmem:[%s7 + $0x48] sm:$0xf]
        %v1638 = vld [vmem:[%s7 + $0x4c] sm:$0xf]
        %v1639 = vld [vmem:[%s7 + $0x50] sm:$0xf]
        %v1640 = vld [vmem:[%s7 + $0x54] sm:$0xf]
        %v1641 = vld [vmem:[%s7 + $0x58] sm:$0xf]
        %v1642 = vld [vmem:[%s7 + $0x5c] sm:$0xf]
        %v1643 = vld [vmem:[%s7 + $0x60] sm:$0xf]
        %v1644 = vld [vmem:[%s7 + $0x64] sm:$0xf]
        %v1645 = vld [vmem:[%s7 + $0x68] sm:$0xf]
        %v1646 = vld [vmem:[%s7 + $0x6c] sm:$0xf]
        %v1647 = vld [vmem:[%s7 + $0x70] sm:$0xf]
        %v1648 = vld [vmem:[%s7 + $0x74] sm:$0xf]
        %v1649 = vld [vmem:[%s7 + $0x78] sm:$0xf]
        %v1650 = vld [vmem:[%s7 + $0x7c] sm:$0xf]
        %v1651 = vld [vmem:[%s7 + $0x80] sm:$0xf]
        %v1652 = vld [vmem:[%s7 + $0x84] sm:$0xf]
        %v1653 = vld [vmem:[%s7 + $0x88] sm:$0xf]
        %v1654 = vld [vmem:[%s7 + $0x8c] sm:$0xf]
        %v1655 = vld [vmem:[%s7 + $0x90] sm:$0xf]
        %v1656 = vld [vmem:[%s7 + $0x94] sm:$0xf]
        %v1657 = vld [vmem:[%s7 + $0x98] sm:$0xf]
        %v1658 = vld [vmem:[%s7 + $0x9c] sm:$0xf]
        %v1659 = vld [vmem:[%s7 + $0xa0] sm:$0xf]
        %v1660 = vld [vmem:[%s7 + $0xa4] sm:$0xf]
        %v1661 = vld [vmem:[%s7 + $0xa8] sm:$0xf]
        %v1662 = vld [vmem:[%s7 + $0xac] sm:$0xf]
        %v1663 = vld [vmem:[%s7 + $0xb0] sm:$0xf]
        %v1664 = vld [vmem:[%s7 + $0xb4] sm:$0xf]
        %v1665 = vld [vmem:[%s7 + $0xb8] sm:$0xf]
        %v1666 = vld [vmem:[%s7 + $0xbc] sm:$0xf]
        %v1667 = vpack.c.bf16 %v1616, %v1616
        %v1668 = vpack.c.bf16 %v1617, %v1617
        %v1669 = vpack.c.bf16 %v1618, %v1618
        %v1718 = vunpack.c.l.b16 %v1619
        %v1719 = vunpack.c.l.b16 %v1620
        %v1720 = vunpack.c.l.b16 %v1621
        %v1721 = vunpack.c.l.b16 %v1622
        %v1722 = vunpack.c.l.b16 %v1623
        %v1723 = vunpack.c.l.b16 %v1624
        %v1724 = vunpack.c.l.b16 %v1625
        %v1725 = vunpack.c.l.b16 %v1626
        %v1726 = vunpack.c.l.b16 %v1627
        %v1727 = vunpack.c.l.b16 %v1628
        %v1728 = vunpack.c.l.b16 %v1629
        %v1729 = vunpack.c.l.b16 %v1630
        %v1730 = vunpack.c.l.b16 %v1631
        %v1731 = vunpack.c.l.b16 %v1632
        %v1732 = vunpack.c.l.b16 %v1633
        %v1733 = vunpack.c.l.b16 %v1634
        %v1734 = vunpack.c.l.b16 %v1635
        %v1735 = vunpack.c.l.b16 %v1636
        %v1736 = vunpack.c.l.b16 %v1637
        %v1737 = vunpack.c.l.b16 %v1638
        %v1738 = vunpack.c.l.b16 %v1639
        %v1739 = vunpack.c.l.b16 %v1640
        %v1740 = vunpack.c.l.b16 %v1641
        %v1741 = vunpack.c.l.b16 %v1642
        %v1742 = vunpack.c.l.b16 %v1643
        %v1743 = vunpack.c.l.b16 %v1644
        %v1744 = vunpack.c.l.b16 %v1645
        %v1745 = vunpack.c.l.b16 %v1646
        %v1746 = vunpack.c.l.b16 %v1647
        %v1747 = vunpack.c.l.b16 %v1648
        %v1748 = vunpack.c.l.b16 %v1649
        %v1749 = vunpack.c.l.b16 %v1650
        %v1750 = vunpack.c.l.b16 %v1651
        %v1751 = vunpack.c.l.b16 %v1652
        %v1752 = vunpack.c.l.b16 %v1653
        %v1753 = vunpack.c.l.b16 %v1654
        %v1754 = vunpack.c.l.b16 %v1655
        %v1755 = vunpack.c.l.b16 %v1656
        %v1756 = vunpack.c.l.b16 %v1657
        %v1757 = vunpack.c.l.b16 %v1658
        %v1758 = vunpack.c.l.b16 %v1659
        %v1759 = vunpack.c.l.b16 %v1660
        %v1760 = vunpack.c.l.b16 %v1661
        %v1761 = vunpack.c.l.b16 %v1662
        %v1762 = vunpack.c.l.b16 %v1663
        %v1763 = vunpack.c.l.b16 %v1664
        %v1764 = vunpack.c.l.b16 %v1665
        %v1765 = vunpack.c.l.b16 %v1666
        %v1766 = vpack.c.b16 %v1719, %v1718
        %v1767 = vpack.c.b16 %v1721, %v1720
        %v1768 = vpack.c.b16 %v1723, %v1722
        %v1769 = vpack.c.b16 %v1725, %v1724
        %v1770 = vpack.c.b16 %v1727, %v1726
        %v1771 = vpack.c.b16 %v1729, %v1728
        %v1772 = vpack.c.b16 %v1731, %v1730
        %v1773 = vpack.c.b16 %v1733, %v1732
        %v1774 = vpack.c.b16 %v1735, %v1734
        %v1775 = vpack.c.b16 %v1737, %v1736
        %v1776 = vpack.c.b16 %v1739, %v1738
        %v1777 = vpack.c.b16 %v1741, %v1740
        %v1778 = vpack.c.b16 %v1743, %v1742
        %v1779 = vpack.c.b16 %v1745, %v1744
        %v1780 = vpack.c.b16 %v1747, %v1746
        %v1781 = vpack.c.b16 %v1749, %v1748
        %v1782 = vpack.c.b16 %v1751, %v1750
        %v1783 = vpack.c.b16 %v1753, %v1752
        %v1784 = vpack.c.b16 %v1755, %v1754
        %v1785 = vpack.c.b16 %v1757, %v1756
        %v1786 = vpack.c.b16 %v1759, %v1758
        %v1787 = vpack.c.b16 %v1761, %v1760
        %v1788 = vpack.c.b16 %v1763, %v1762
        %v1789 = vpack.c.b16 %v1765, %v1764
        %1814 = vmatprep.subr.bf16.mxu0 0
        %1815 = vmatpush1.bf16.msra.mxu0 %v1773
        %1816 = vmatprep.subr.bf16.mxu0 0
        %1817 = vmatpush1.bf16.msra.mxu0 %v1772
        %1818 = vmatprep.subr.bf16.mxu0 0
        %1819 = vmatpush1.bf16.msra.mxu0 %v1771
        %1820 = vmatprep.subr.bf16.mxu0 0
        %1821 = vmatpush1.bf16.msra.mxu0 %v1770
        %1822 = vmatprep.subr.bf16.mxu0 0
        %1823 = vmatpush1.bf16.msra.mxu0 %v1769
        %1824 = vmatprep.subr.bf16.mxu0 0
        %1825 = vmatpush1.bf16.msra.mxu0 %v1768
        %1826 = vmatprep.subr.bf16.mxu0 0
        %1827 = vmatpush1.bf16.msra.mxu0 %v1767
        %1828 = vmatprep.subr.bf16.mxu0 0
        %1829 = vmatpush1.bf16.msra.mxu0 %v1766
        %1830 = vmatprep.subr.bf16.mxu0 0
        %1831 = vmatpush2.bf16.msra.mxu0 %v1781
        %1832 = vmatprep.subr.bf16.mxu0 0
        %1833 = vmatpush2.bf16.msra.mxu0 %v1780
        %1834 = vmatprep.subr.bf16.mxu0 0
        %1835 = vmatpush2.bf16.msra.mxu0 %v1779
        %1836 = vmatprep.subr.bf16.mxu0 0
        %1837 = vmatpush2.bf16.msra.mxu0 %v1778
        %1838 = vmatprep.subr.bf16.mxu0 0
        %1839 = vmatpush2.bf16.msra.mxu0 %v1777
        %1840 = vmatprep.subr.bf16.mxu0 0
        %1841 = vmatpush2.bf16.msra.mxu0 %v1776
        %1842 = vmatprep.subr.bf16.mxu0 0
        %1843 = vmatpush2.bf16.msra.mxu0 %v1775
        %1844 = vmatprep.subr.bf16.mxu0 0
        %1845 = vmatpush2.bf16.msra.mxu0 %v1774
        %1846 = vmatprep.mubr.bf16.mxu0 %v1668
        %1847 = vmatmul.mubr.bf16.gmra.mxu0 %v1667
        %v1848 = vpop.f32.mrf.mxu0
        %v1849 = vadd.f32 0.0, %v1848
        %v1850 = vpop.f32.mrf.mxu0
        %v1851 = vpop.f32.mrf.mxu0
        %v1852 = vpop.f32.mrf.mxu0
        %1853 = vdwg.mxu0
        %1854 = vmatprep.subr.bf16.mxu0 0
        %1855 = vmatpush1.bf16.msra.mxu0 %v1789
        %1856 = vmatprep.subr.bf16.mxu0 0
        %1857 = vmatpush1.bf16.msra.mxu0 %v1788
        %1858 = vmatprep.subr.bf16.mxu0 0
        %1859 = vmatpush1.bf16.msra.mxu0 %v1787
        %1860 = vmatprep.subr.bf16.mxu0 0
        %1861 = vmatpush1.bf16.msra.mxu0 %v1786
        %1862 = vmatprep.subr.bf16.mxu0 0
        %1863 = vmatpush1.bf16.msra.mxu0 %v1785
        %1864 = vmatprep.subr.bf16.mxu0 0
        %1865 = vmatpush1.bf16.msra.mxu0 %v1784
        %1866 = vmatprep.subr.bf16.mxu0 0
        %1867 = vmatpush1.bf16.msra.mxu0 %v1783
        %1868 = vmatprep.subr.bf16.mxu0 0
        %1869 = vmatpush1.bf16.msra.mxu0 %v1782
        %1870 = vmatprep.subr.bf16.mxu0 0
        %1871 = vmatpush2.bf16.msra.mxu0 0
        %1872 = vmatprep.subr.bf16.mxu0 0
        %1873 = vmatpush2.bf16.msra.mxu0 0
        %1874 = vmatprep.subr.bf16.mxu0 0
        %1875 = vmatpush2.bf16.msra.mxu0 0
        %1876 = vmatprep.subr.bf16.mxu0 0
        %1877 = vmatpush2.bf16.msra.mxu0 0
        %1878 = vmatprep.subr.bf16.mxu0 0
        %1879 = vmatpush2.bf16.msra.mxu0 0
        %1880 = vmatprep.subr.bf16.mxu0 0
        %1881 = vmatpush2.bf16.msra.mxu0 0
        %1882 = vmatprep.subr.bf16.mxu0 0
        %1883 = vmatpush2.bf16.msra.mxu0 0
        %1884 = vmatprep.subr.bf16.mxu0 0
        %1885 = vmatpush2.bf16.msra.mxu0 0
        %1886 = vmatprep.mubr.bf16.mxu0 0
        %1887 = vmatmul.mubr.bf16.gmra.mxu0 %v1669
        %v1888 = vpop.f32.mrf.mxu0
        %v1889 = vadd.f32 %v1849, %v1888
        %v1890 = vpop.f32.mrf.mxu0
        %v1891 = vpop.f32.mrf.mxu0
        %v1892 = vpop.f32.mrf.mxu0
        %1893 = vdwg.mxu0
        %v1894 = vld [vmem:[%s8] sm:$0xf]
        %v1895 = vld [vmem:[%s8 + $0x4] sm:$0xf]
        %v1896 = vld [vmem:[%s8 + $0x8] sm:$0xf]
        %v1897 = vld [vmem:[%s8 + $0xc] sm:$0xf]
        %v1898 = vpack.c.bf16 %v1889, %v1889
        %v1903 = vunpack.c.l.b16 %v1894
        %v1904 = vunpack.c.l.b16 %v1895
        %v1905 = vunpack.c.l.b16 %v1896
        %v1906 = vunpack.c.l.b16 %v1897
        %v1907 = vpack.c.b16 %v1904, %v1903
        %v1908 = vpack.c.b16 %v1906, %v1905
        %v1912 = vsel %vm1094, %v1898, 0
        %1914 = vmatprep.subr.bf16.mxu0 0
        %1915 = vmatpush1.bf16.msra.mxu0 0
        %1916 = vmatprep.subr.bf16.mxu0 0
        %1917 = vmatpush1.bf16.msra.mxu0 0
        %1918 = vmatprep.subr.bf16.mxu0 0
        %1919 = vmatpush1.bf16.msra.mxu0 0
        %1920 = vmatprep.subr.bf16.mxu0 0
        %1921 = vmatpush1.bf16.msra.mxu0 0
        %1922 = vmatprep.subr.bf16.mxu0 0
        %1923 = vmatpush1.bf16.msra.mxu0 0
        %1924 = vmatprep.subr.bf16.mxu0 0
        %1925 = vmatpush1.bf16.msra.mxu0 0
        %1926 = vmatprep.subr.bf16.mxu0 0
        %1927 = vmatpush1.bf16.msra.mxu0 %v1908
        %1928 = vmatprep.subr.bf16.mxu0 0
        %1929 = vmatpush1.bf16.msra.mxu0 %v1907
        %1930 = vmatprep.subr.bf16.mxu0 0
        %1931 = vmatpush2.bf16.msra.mxu0 0
        %1932 = vmatprep.subr.bf16.mxu0 0
        %1933 = vmatpush2.bf16.msra.mxu0 0
        %1934 = vmatprep.subr.bf16.mxu0 0
        %1935 = vmatpush2.bf16.msra.mxu0 0
        %1936 = vmatprep.subr.bf16.mxu0 0
        %1937 = vmatpush2.bf16.msra.mxu0 0
        %1938 = vmatprep.subr.bf16.mxu0 0
        %1939 = vmatpush2.bf16.msra.mxu0 0
        %1940 = vmatprep.subr.bf16.mxu0 0
        %1941 = vmatpush2.bf16.msra.mxu0 0
        %1942 = vmatprep.subr.bf16.mxu0 0
        %1943 = vmatpush2.bf16.msra.mxu0 0
        %1944 = vmatprep.subr.bf16.mxu0 0
        %1945 = vmatpush2.bf16.msra.mxu0 0
        %1946 = vmatprep.mubr.bf16.mxu0 0
        %1947 = vmatmul.mubr.bf16.gmra.mxu0 %v1912
        %v1948 = vpop.f32.mrf.mxu0
        %v1949 = vadd.f32 0.0, %v1948
        %v1950 = vpop.f32.mrf.mxu0
        %v1951 = vpop.f32.mrf.mxu0
        %v1952 = vpop.f32.mrf.mxu0
        %1953 = vdwg.mxu0
        %v1954 = vmax.f32 %v1949, 0.0
        %v1955 = vld [vmem:[%s9] sm:$0xf]
        %v1956 = vld [vmem:[%s9 + $0x4] sm:$0xf]
        %v1957 = vld [vmem:[%s9 + $0x8] sm:$0xf]
        %v1958 = vld [vmem:[%s9 + $0xc] sm:$0xf]
        %v1963 = vunpack.c.l.b16 %v1955
        %v1964 = vunpack.c.l.b16 %v1956
        %v1965 = vunpack.c.l.b16 %v1957
        %v1966 = vunpack.c.l.b16 %v1958
        %v1967 = vpack.c.b16 %v1964, %v1963
        %v1968 = vpack.c.b16 %v1966, %v1965
        %1971 = vmatprep.subr.bf16.mxu0 0
        %1972 = vmatpush1.bf16.msra.mxu0 0
        %1973 = vmatprep.subr.bf16.mxu0 0
        %1974 = vmatpush1.bf16.msra.mxu0 0
        %1975 = vmatprep.subr.bf16.mxu0 0
        %1976 = vmatpush1.bf16.msra.mxu0 0
        %1977 = vmatprep.subr.bf16.mxu0 0
        %1978 = vmatpush1.bf16.msra.mxu0 0
        %1979 = vmatprep.subr.bf16.mxu0 0
        %1980 = vmatpush1.bf16.msra.mxu0 0
        %1981 = vmatprep.subr.bf16.mxu0 0
        %1982 = vmatpush1.bf16.msra.mxu0 0
        %1983 = vmatprep.subr.bf16.mxu0 0
        %1984 = vmatpush1.bf16.msra.mxu0 %v1968
        %1985 = vmatprep.subr.bf16.mxu0 0
        %1986 = vmatpush1.bf16.msra.mxu0 %v1967
        %1987 = vmatprep.subr.bf16.mxu0 0
        %1988 = vmatpush2.bf16.msra.mxu0 0
        %1989 = vmatprep.subr.bf16.mxu0 0
        %1990 = vmatpush2.bf16.msra.mxu0 0
        %1991 = vmatprep.subr.bf16.mxu0 0
        %1992 = vmatpush2.bf16.msra.mxu0 0
        %1993 = vmatprep.subr.bf16.mxu0 0
        %1994 = vmatpush2.bf16.msra.mxu0 0
        %1995 = vmatprep.subr.bf16.mxu0 0
        %1996 = vmatpush2.bf16.msra.mxu0 0
        %1997 = vmatprep.subr.bf16.mxu0 0
        %1998 = vmatpush2.bf16.msra.mxu0 0
        %1999 = vmatprep.subr.bf16.mxu0 0
        %2000 = vmatpush2.bf16.msra.mxu0 0
        %2001 = vmatprep.subr.bf16.mxu0 0
        %2002 = vmatpush2.bf16.msra.mxu0 0
        %2003 = vmatprep.mubr.bf16.mxu0 0
        %2004 = vmatmul.mubr.bf16.gmra.mxu0 %v1912
        %v2005 = vpop.f32.mrf.mxu0
        %v2006 = vadd.f32 0.0, %v2005
        %v2007 = vpop.f32.mrf.mxu0
        %v2008 = vpop.f32.mrf.mxu0
        %v2009 = vpop.f32.mrf.mxu0
        %2010 = vdwg.mxu0
        %v2011 = vmax.f32 %v2006, 0.0
        %v2012 = vld [vmem:[%s10] sm:$0xf]
        %v2013 = vld [vmem:[%s10 + $0x4] sm:$0xf]
        %v2014 = vld [vmem:[%s10 + $0x8] sm:$0xf]
        %v2015 = vld [vmem:[%s10 + $0xc] sm:$0xf]
        %v2016 = vld [vmem:[%s10 + $0x10] sm:$0xf]
        %v2017 = vld [vmem:[%s10 + $0x14] sm:$0xf]
        %v2018 = vld [vmem:[%s10 + $0x18] sm:$0xf]
        %v2019 = vld [vmem:[%s10 + $0x1c] sm:$0xf]
        %v2020 = vld [vmem:[%s10 + $0x20] sm:$0xf]
        %v2021 = vld [vmem:[%s10 + $0x24] sm:$0xf]
        %v2022 = vld [vmem:[%s10 + $0x28] sm:$0xf]
        %v2023 = vld [vmem:[%s10 + $0x2c] sm:$0xf]
        %v2024 = vld [vmem:[%s10 + $0x30] sm:$0xf]
        %v2025 = vld [vmem:[%s10 + $0x34] sm:$0xf]
        %v2026 = vld [vmem:[%s10 + $0x38] sm:$0xf]
        %v2027 = vld [vmem:[%s10 + $0x3c] sm:$0xf]
        %v2028 = vld [vmem:[%s10 + $0x40] sm:$0xf]
        %v2029 = vld [vmem:[%s10 + $0x44] sm:$0xf]
        %v2030 = vld [vmem:[%s10 + $0x48] sm:$0xf]
        %v2031 = vld [vmem:[%s10 + $0x4c] sm:$0xf]
        %v2032 = vld [vmem:[%s10 + $0x50] sm:$0xf]
        %v2033 = vld [vmem:[%s10 + $0x54] sm:$0xf]
        %v2034 = vld [vmem:[%s10 + $0x58] sm:$0xf]
        %v2035 = vld [vmem:[%s10 + $0x5c] sm:$0xf]
        %v2036 = vld [vmem:[%s10 + $0x60] sm:$0xf]
        %v2037 = vld [vmem:[%s10 + $0x64] sm:$0xf]
        %v2038 = vld [vmem:[%s10 + $0x68] sm:$0xf]
        %v2039 = vld [vmem:[%s10 + $0x6c] sm:$0xf]
        %v2040 = vld [vmem:[%s10 + $0x70] sm:$0xf]
        %v2041 = vld [vmem:[%s10 + $0x74] sm:$0xf]
        %v2042 = vld [vmem:[%s10 + $0x78] sm:$0xf]
        %v2043 = vld [vmem:[%s10 + $0x7c] sm:$0xf]
        %v2044 = vld [vmem:[%s10 + $0x80] sm:$0xf]
        %v2045 = vld [vmem:[%s10 + $0x84] sm:$0xf]
        %v2046 = vld [vmem:[%s10 + $0x88] sm:$0xf]
        %v2047 = vld [vmem:[%s10 + $0x8c] sm:$0xf]
        %v2084 = vunpack.c.l.b16 %v2012
        %v2085 = vunpack.c.l.b16 %v2013
        %v2086 = vunpack.c.l.b16 %v2014
        %v2087 = vunpack.c.l.b16 %v2015
        %v2088 = vunpack.c.l.b16 %v2016
        %v2089 = vunpack.c.l.b16 %v2017
        %v2090 = vunpack.c.l.b16 %v2018
        %v2091 = vunpack.c.l.b16 %v2019
        %v2092 = vunpack.c.l.b16 %v2020
        %v2093 = vunpack.c.l.b16 %v2021
        %v2094 = vunpack.c.l.b16 %v2022
        %v2095 = vunpack.c.l.b16 %v2023
        %v2096 = vunpack.c.l.b16 %v2024
        %v2097 = vunpack.c.l.b16 %v2025
        %v2098 = vunpack.c.l.b16 %v2026
        %v2099 = vunpack.c.l.b16 %v2027
        %v2100 = vunpack.c.l.b16 %v2028
        %v2101 = vunpack.c.l.b16 %v2029
        %v2102 = vunpack.c.l.b16 %v2030
        %v2103 = vunpack.c.l.b16 %v2031
        %v2104 = vunpack.c.l.b16 %v2032
        %v2105 = vunpack.c.l.b16 %v2033
        %v2106 = vunpack.c.l.b16 %v2034
        %v2107 = vunpack.c.l.b16 %v2035
        %v2108 = vunpack.c.l.b16 %v2036
        %v2109 = vunpack.c.l.b16 %v2037
        %v2110 = vunpack.c.l.b16 %v2038
        %v2111 = vunpack.c.l.b16 %v2039
        %v2112 = vunpack.c.l.b16 %v2040
        %v2113 = vunpack.c.l.b16 %v2041
        %v2114 = vunpack.c.l.b16 %v2042
        %v2115 = vunpack.c.l.b16 %v2043
        %v2116 = vunpack.c.l.b16 %v2044
        %v2117 = vunpack.c.l.b16 %v2045
        %v2118 = vunpack.c.l.b16 %v2046
        %v2119 = vunpack.c.l.b16 %v2047
        %v2120 = vpack.c.b16 %v2085, %v2084
        %v2121 = vpack.c.b16 %v2087, %v2086
        %v2122 = vpack.c.b16 %v2089, %v2088
        %v2123 = vpack.c.b16 %v2091, %v2090
        %v2124 = vpack.c.b16 %v2093, %v2092
        %v2125 = vpack.c.b16 %v2095, %v2094
        %v2126 = vpack.c.b16 %v2097, %v2096
        %v2127 = vpack.c.b16 %v2099, %v2098
        %v2128 = vpack.c.b16 %v2101, %v2100
        %v2129 = vpack.c.b16 %v2103, %v2102
        %v2130 = vpack.c.b16 %v2105, %v2104
        %v2131 = vpack.c.b16 %v2107, %v2106
        %v2132 = vpack.c.b16 %v2109, %v2108
        %v2133 = vpack.c.b16 %v2111, %v2110
        %v2134 = vpack.c.b16 %v2113, %v2112
        %v2135 = vpack.c.b16 %v2115, %v2114
        %v2136 = vpack.c.b16 %v2117, %v2116
        %v2137 = vpack.c.b16 %v2119, %v2118
        %2156 = vmatprep.subr.bf16.mxu0 0
        %2157 = vmatpush1.bf16.msra.mxu0 %v2127
        %2158 = vmatprep.subr.bf16.mxu0 0
        %2159 = vmatpush1.bf16.msra.mxu0 %v2126
        %2160 = vmatprep.subr.bf16.mxu0 0
        %2161 = vmatpush1.bf16.msra.mxu0 %v2125
        %2162 = vmatprep.subr.bf16.mxu0 0
        %2163 = vmatpush1.bf16.msra.mxu0 %v2124
        %2164 = vmatprep.subr.bf16.mxu0 0
        %2165 = vmatpush1.bf16.msra.mxu0 %v2123
        %2166 = vmatprep.subr.bf16.mxu0 0
        %2167 = vmatpush1.bf16.msra.mxu0 %v2122
        %2168 = vmatprep.subr.bf16.mxu0 0
        %2169 = vmatpush1.bf16.msra.mxu0 %v2121
        %2170 = vmatprep.subr.bf16.mxu0 0
        %2171 = vmatpush1.bf16.msra.mxu0 %v2120
        %2172 = vmatprep.subr.bf16.mxu0 0
        %2173 = vmatpush2.bf16.msra.mxu0 %v2135
        %2174 = vmatprep.subr.bf16.mxu0 0
        %2175 = vmatpush2.bf16.msra.mxu0 %v2134
        %2176 = vmatprep.subr.bf16.mxu0 0
        %2177 = vmatpush2.bf16.msra.mxu0 %v2133
        %2178 = vmatprep.subr.bf16.mxu0 0
        %2179 = vmatpush2.bf16.msra.mxu0 %v2132
        %2180 = vmatprep.subr.bf16.mxu0 0
        %2181 = vmatpush2.bf16.msra.mxu0 %v2131
        %2182 = vmatprep.subr.bf16.mxu0 0
        %2183 = vmatpush2.bf16.msra.mxu0 %v2130
        %2184 = vmatprep.subr.bf16.mxu0 0
        %2185 = vmatpush2.bf16.msra.mxu0 %v2129
        %2186 = vmatprep.subr.bf16.mxu0 0
        %2187 = vmatpush2.bf16.msra.mxu0 %v2128
        %2188 = vmatprep.mubr.bf16.mxu0 %v802
        %2189 = vmatmul.mubr.bf16.gmra.mxu0 %v801
        %v2190 = vpop.f32.mrf.mxu0
        %v2191 = vadd.f32 0.0, %v2190
        %v2192 = vpop.f32.mrf.mxu0
        %v2193 = vpop.f32.mrf.mxu0
        %v2194 = vpop.f32.mrf.mxu0
        %2195 = vdwg.mxu0
        %2196 = vmatprep.subr.bf16.mxu0 0
        %2197 = vmatpush1.bf16.msra.mxu0 0
        %2198 = vmatprep.subr.bf16.mxu0 0
        %2199 = vmatpush1.bf16.msra.mxu0 0
        %2200 = vmatprep.subr.bf16.mxu0 0
        %2201 = vmatpush1.bf16.msra.mxu0 0
        %2202 = vmatprep.subr.bf16.mxu0 0
        %2203 = vmatpush1.bf16.msra.mxu0 0
        %2204 = vmatprep.subr.bf16.mxu0 0
        %2205 = vmatpush1.bf16.msra.mxu0 0
        %2206 = vmatprep.subr.bf16.mxu0 0
        %2207 = vmatpush1.bf16.msra.mxu0 0
        %2208 = vmatprep.subr.bf16.mxu0 0
        %2209 = vmatpush1.bf16.msra.mxu0 %v2137
        %2210 = vmatprep.subr.bf16.mxu0 0
        %2211 = vmatpush1.bf16.msra.mxu0 %v2136
        %2212 = vmatprep.subr.bf16.mxu0 0
        %2213 = vmatpush2.bf16.msra.mxu0 0
        %2214 = vmatprep.subr.bf16.mxu0 0
        %2215 = vmatpush2.bf16.msra.mxu0 0
        %2216 = vmatprep.subr.bf16.mxu0 0
        %2217 = vmatpush2.bf16.msra.mxu0 0
        %2218 = vmatprep.subr.bf16.mxu0 0
        %2219 = vmatpush2.bf16.msra.mxu0 0
        %2220 = vmatprep.subr.bf16.mxu0 0
        %2221 = vmatpush2.bf16.msra.mxu0 0
        %2222 = vmatprep.subr.bf16.mxu0 0
        %2223 = vmatpush2.bf16.msra.mxu0 0
        %2224 = vmatprep.subr.bf16.mxu0 0
        %2225 = vmatpush2.bf16.msra.mxu0 0
        %2226 = vmatprep.subr.bf16.mxu0 0
        %2227 = vmatpush2.bf16.msra.mxu0 0
        %2228 = vmatprep.mubr.bf16.mxu0 0
        %2229 = vmatmul.mubr.bf16.gmra.mxu0 %v1096
        %v2230 = vpop.f32.mrf.mxu0
        %v2231 = vadd.f32 %v2191, %v2230
        %v2232 = vpop.f32.mrf.mxu0
        %v2233 = vpop.f32.mrf.mxu0
        %v2234 = vpop.f32.mrf.mxu0
        %2235 = vdwg.mxu0
        %v2236 = vmax.f32 %v2231, 0.0
        %v2237 = vld [vmem:[%s12] sm:$0xf]
        %v2238 = vld [vmem:[%s12 + $0x4] sm:$0xf]
        %v2239 = vld [vmem:[%s12 + $0x8] sm:$0xf]
        %v2240 = vld [vmem:[%s12 + $0xc] sm:$0xf]
        %v2241 = vld [vmem:[%s12 + $0x10] sm:$0xf]
        %v2242 = vld [vmem:[%s12 + $0x14] sm:$0xf]
        %v2243 = vld [vmem:[%s12 + $0x18] sm:$0xf]
        %v2244 = vld [vmem:[%s12 + $0x1c] sm:$0xf]
        %v2245 = vld [vmem:[%s12 + $0x20] sm:$0xf]
        %v2246 = vld [vmem:[%s12 + $0x24] sm:$0xf]
        %v2247 = vld [vmem:[%s12 + $0x28] sm:$0xf]
        %v2248 = vld [vmem:[%s12 + $0x2c] sm:$0xf]
        %v2249 = vld [vmem:[%s12 + $0x30] sm:$0xf]
        %v2250 = vld [vmem:[%s12 + $0x34] sm:$0xf]
        %v2251 = vld [vmem:[%s12 + $0x38] sm:$0xf]
        %v2252 = vld [vmem:[%s12 + $0x3c] sm:$0xf]
        %v2253 = vld [vmem:[%s12 + $0x40] sm:$0xf]
        %v2254 = vld [vmem:[%s12 + $0x44] sm:$0xf]
        %v2255 = vld [vmem:[%s12 + $0x48] sm:$0xf]
        %v2256 = vld [vmem:[%s12 + $0x4c] sm:$0xf]
        %v2257 = vld [vmem:[%s12 + $0x50] sm:$0xf]
        %v2258 = vld [vmem:[%s12 + $0x54] sm:$0xf]
        %v2259 = vld [vmem:[%s12 + $0x58] sm:$0xf]
        %v2260 = vld [vmem:[%s12 + $0x5c] sm:$0xf]
        %v2261 = vld [vmem:[%s12 + $0x60] sm:$0xf]
        %v2262 = vld [vmem:[%s12 + $0x64] sm:$0xf]
        %v2263 = vld [vmem:[%s12 + $0x68] sm:$0xf]
        %v2264 = vld [vmem:[%s12 + $0x6c] sm:$0xf]
        %v2265 = vld [vmem:[%s12 + $0x70] sm:$0xf]
        %v2266 = vld [vmem:[%s12 + $0x74] sm:$0xf]
        %v2267 = vld [vmem:[%s12 + $0x78] sm:$0xf]
        %v2268 = vld [vmem:[%s12 + $0x7c] sm:$0xf]
        %v2269 = vld [vmem:[%s12 + $0x80] sm:$0xf]
        %v2270 = vld [vmem:[%s12 + $0x84] sm:$0xf]
        %v2271 = vld [vmem:[%s12 + $0x88] sm:$0xf]
        %v2272 = vld [vmem:[%s12 + $0x8c] sm:$0xf]
        %v2309 = vunpack.c.l.b16 %v2237
        %v2310 = vunpack.c.l.b16 %v2238
        %v2311 = vunpack.c.l.b16 %v2239
        %v2312 = vunpack.c.l.b16 %v2240
        %v2313 = vunpack.c.l.b16 %v2241
        %v2314 = vunpack.c.l.b16 %v2242
        %v2315 = vunpack.c.l.b16 %v2243
        %v2316 = vunpack.c.l.b16 %v2244
        %v2317 = vunpack.c.l.b16 %v2245
        %v2318 = vunpack.c.l.b16 %v2246
        %v2319 = vunpack.c.l.b16 %v2247
        %v2320 = vunpack.c.l.b16 %v2248
        %v2321 = vunpack.c.l.b16 %v2249
        %v2322 = vunpack.c.l.b16 %v2250
        %v2323 = vunpack.c.l.b16 %v2251
        %v2324 = vunpack.c.l.b16 %v2252
        %v2325 = vunpack.c.l.b16 %v2253
        %v2326 = vunpack.c.l.b16 %v2254
        %v2327 = vunpack.c.l.b16 %v2255
        %v2328 = vunpack.c.l.b16 %v2256
        %v2329 = vunpack.c.l.b16 %v2257
        %v2330 = vunpack.c.l.b16 %v2258
        %v2331 = vunpack.c.l.b16 %v2259
        %v2332 = vunpack.c.l.b16 %v2260
        %v2333 = vunpack.c.l.b16 %v2261
        %v2334 = vunpack.c.l.b16 %v2262
        %v2335 = vunpack.c.l.b16 %v2263
        %v2336 = vunpack.c.l.b16 %v2264
        %v2337 = vunpack.c.l.b16 %v2265
        %v2338 = vunpack.c.l.b16 %v2266
        %v2339 = vunpack.c.l.b16 %v2267
        %v2340 = vunpack.c.l.b16 %v2268
        %v2341 = vunpack.c.l.b16 %v2269
        %v2342 = vunpack.c.l.b16 %v2270
        %v2343 = vunpack.c.l.b16 %v2271
        %v2344 = vunpack.c.l.b16 %v2272
        %v2345 = vpack.c.b16 %v2310, %v2309
        %v2346 = vpack.c.b16 %v2312, %v2311
        %v2347 = vpack.c.b16 %v2314, %v2313
        %v2348 = vpack.c.b16 %v2316, %v2315
        %v2349 = vpack.c.b16 %v2318, %v2317
        %v2350 = vpack.c.b16 %v2320, %v2319
        %v2351 = vpack.c.b16 %v2322, %v2321
        %v2352 = vpack.c.b16 %v2324, %v2323
        %v2353 = vpack.c.b16 %v2326, %v2325
        %v2354 = vpack.c.b16 %v2328, %v2327
        %v2355 = vpack.c.b16 %v2330, %v2329
        %v2356 = vpack.c.b16 %v2332, %v2331
        %v2357 = vpack.c.b16 %v2334, %v2333
        %v2358 = vpack.c.b16 %v2336, %v2335
        %v2359 = vpack.c.b16 %v2338, %v2337
        %v2360 = vpack.c.b16 %v2340, %v2339
        %v2361 = vpack.c.b16 %v2342, %v2341
        %v2362 = vpack.c.b16 %v2344, %v2343
        %2381 = vmatprep.subr.bf16.mxu0 0
        %2382 = vmatpush1.bf16.msra.mxu0 %v2352
        %2383 = vmatprep.subr.bf16.mxu0 0
        %2384 = vmatpush1.bf16.msra.mxu0 %v2351
        %2385 = vmatprep.subr.bf16.mxu0 0
        %2386 = vmatpush1.bf16.msra.mxu0 %v2350
        %2387 = vmatprep.subr.bf16.mxu0 0
        %2388 = vmatpush1.bf16.msra.mxu0 %v2349
        %2389 = vmatprep.subr.bf16.mxu0 0
        %2390 = vmatpush1.bf16.msra.mxu0 %v2348
        %2391 = vmatprep.subr.bf16.mxu0 0
        %2392 = vmatpush1.bf16.msra.mxu0 %v2347
        %2393 = vmatprep.subr.bf16.mxu0 0
        %2394 = vmatpush1.bf16.msra.mxu0 %v2346
        %2395 = vmatprep.subr.bf16.mxu0 0
        %2396 = vmatpush1.bf16.msra.mxu0 %v2345
        %2397 = vmatprep.subr.bf16.mxu0 0
        %2398 = vmatpush2.bf16.msra.mxu0 %v2360
        %2399 = vmatprep.subr.bf16.mxu0 0
        %2400 = vmatpush2.bf16.msra.mxu0 %v2359
        %2401 = vmatprep.subr.bf16.mxu0 0
        %2402 = vmatpush2.bf16.msra.mxu0 %v2358
        %2403 = vmatprep.subr.bf16.mxu0 0
        %2404 = vmatpush2.bf16.msra.mxu0 %v2357
        %2405 = vmatprep.subr.bf16.mxu0 0
        %2406 = vmatpush2.bf16.msra.mxu0 %v2356
        %2407 = vmatprep.subr.bf16.mxu0 0
        %2408 = vmatpush2.bf16.msra.mxu0 %v2355
        %2409 = vmatprep.subr.bf16.mxu0 0
        %2410 = vmatpush2.bf16.msra.mxu0 %v2354
        %2411 = vmatprep.subr.bf16.mxu0 0
        %2412 = vmatpush2.bf16.msra.mxu0 %v2353
        %2413 = vmatprep.mubr.bf16.mxu0 %v802
        %2414 = vmatmul.mubr.bf16.gmra.mxu0 %v801
        %v2415 = vpop.f32.mrf.mxu0
        %v2416 = vadd.f32 0.0, %v2415
        %v2417 = vpop.f32.mrf.mxu0
        %v2418 = vpop.f32.mrf.mxu0
        %v2419 = vpop.f32.mrf.mxu0
        %2420 = vdwg.mxu0
        %2421 = vmatprep.subr.bf16.mxu0 0
        %2422 = vmatpush1.bf16.msra.mxu0 0
        %2423 = vmatprep.subr.bf16.mxu0 0
        %2424 = vmatpush1.bf16.msra.mxu0 0
        %2425 = vmatprep.subr.bf16.mxu0 0
        %2426 = vmatpush1.bf16.msra.mxu0 0
        %2427 = vmatprep.subr.bf16.mxu0 0
        %2428 = vmatpush1.bf16.msra.mxu0 0
        %2429 = vmatprep.subr.bf16.mxu0 0
        %2430 = vmatpush1.bf16.msra.mxu0 0
        %2431 = vmatprep.subr.bf16.mxu0 0
        %2432 = vmatpush1.bf16.msra.mxu0 0
        %2433 = vmatprep.subr.bf16.mxu0 0
        %2434 = vmatpush1.bf16.msra.mxu0 %v2362
        %2435 = vmatprep.subr.bf16.mxu0 0
        %2436 = vmatpush1.bf16.msra.mxu0 %v2361
        %2437 = vmatprep.subr.bf16.mxu0 0
        %2438 = vmatpush2.bf16.msra.mxu0 0
        %2439 = vmatprep.subr.bf16.mxu0 0
        %2440 = vmatpush2.bf16.msra.mxu0 0
        %2441 = vmatprep.subr.bf16.mxu0 0
        %2442 = vmatpush2.bf16.msra.mxu0 0
        %2443 = vmatprep.subr.bf16.mxu0 0
        %2444 = vmatpush2.bf16.msra.mxu0 0
        %2445 = vmatprep.subr.bf16.mxu0 0
        %2446 = vmatpush2.bf16.msra.mxu0 0
        %2447 = vmatprep.subr.bf16.mxu0 0
        %2448 = vmatpush2.bf16.msra.mxu0 0
        %2449 = vmatprep.subr.bf16.mxu0 0
        %2450 = vmatpush2.bf16.msra.mxu0 0
        %2451 = vmatprep.subr.bf16.mxu0 0
        %2452 = vmatpush2.bf16.msra.mxu0 0
        %2453 = vmatprep.mubr.bf16.mxu0 0
        %2454 = vmatmul.mubr.bf16.gmra.mxu0 %v1096
        %v2455 = vpop.f32.mrf.mxu0
        %v2456 = vadd.f32 %v2416, %v2455
        %v2457 = vpop.f32.mrf.mxu0
        %v2458 = vpop.f32.mrf.mxu0
        %v2459 = vpop.f32.mrf.mxu0
        %2460 = vdwg.mxu0
        %v2461 = vmax.f32 %v2456, 0.0
        %v2462 = vpack.c.bf16 %v1954, %v1954
        %v2463 = vpack.c.bf16 %v2011, %v2011
        %v2465 = vsel %vm1094, %v2462, 0
        %v2468 = vsel %vm1094, %v2463, 0
        %2470 = vmatprep.subr.bf16.mxu0 0
        %2471 = vmatpush1.bf16.xpose.msra.mxu0 0
        %2472 = vmatprep.subr.bf16.mxu0 0
        %2473 = vmatpush1.bf16.xpose.msra.mxu0 0
        %2474 = vmatprep.subr.bf16.mxu0 0
        %2475 = vmatpush1.bf16.xpose.msra.mxu0 0
        %2476 = vmatprep.subr.bf16.mxu0 0
        %2477 = vmatpush1.bf16.xpose.msra.mxu0 0
        %2478 = vmatprep.subr.bf16.mxu0 0
        %2479 = vmatpush1.bf16.xpose.msra.mxu0 0
        %2480 = vmatprep.subr.bf16.mxu0 0
        %2481 = vmatpush1.bf16.xpose.msra.mxu0 0
        %2482 = vmatprep.subr.bf16.mxu0 0
        %2483 = vmatpush1.bf16.xpose.msra.mxu0 0
        %2484 = vmatprep.subr.bf16.mxu0 0
        %2485 = vmatpush1.bf16.xpose.msra.mxu0 %v2468
        %2486 = vmatprep.subr.bf16.mxu0 0
        %2487 = vmatpush2.bf16.xpose.msra.mxu0 0
        %2488 = vmatprep.subr.bf16.mxu0 0
        %2489 = vmatpush2.bf16.xpose.msra.mxu0 0
        %2490 = vmatprep.subr.bf16.mxu0 0
        %2491 = vmatpush2.bf16.xpose.msra.mxu0 0
        %2492 = vmatprep.subr.bf16.mxu0 0
        %2493 = vmatpush2.bf16.xpose.msra.mxu0 0
        %2494 = vmatprep.subr.bf16.mxu0 0
        %2495 = vmatpush2.bf16.xpose.msra.mxu0 0
        %2496 = vmatprep.subr.bf16.mxu0 0
        %2497 = vmatpush2.bf16.xpose.msra.mxu0 0
        %2498 = vmatprep.subr.bf16.mxu0 0
        %2499 = vmatpush2.bf16.xpose.msra.mxu0 0
        %2500 = vmatprep.subr.bf16.mxu0 0
        %2501 = vmatpush2.bf16.xpose.msra.mxu0 0
        %2502 = vmatprep.mubr.bf16.mxu0 0
        %2503 = vmatmul.mubr.bf16.gmra.mxu0 %v2465
        %v2504 = vpop.f32.mrf.mxu0
        %v2505 = vadd.f32 0.0, %v2504
        %v2506 = vpop.f32.mrf.mxu0
        %v2507 = vpop.f32.mrf.mxu0
        %v2508 = vpop.f32.mrf.mxu0
        %2509 = vdwg.mxu0
        %vm2510 = vcmask 64512
        %v2511 = vsel %vm2510, %v2505, -inf
        %2512 = vmax.xlane.f32.xlu0 %v2511
        %v2513 = vpop.xlane.xlu0 %2512
        %v2514 = vsub.f32 %v2505, %v2513
        %v2515 = vmul.f32 %v2514, 1.442695
        %v2516 = vpow.pop %v2515
        %v2517 = vsel %vm2510, %v2516, 0.0
        %2518 = vadd.xlane.f32.xlu0 %v2517
        %v2519 = vpop.xlane.xlu0 %2518
        %v2520 = vrcp.pop %v2519
        %v2521 = vmul.f32 %v2516, %v2520
        %v2522 = vld [vmem:[%s1] sm:$0xff]
        %v2523 = vadd.f32 %v2521, %v2522
        %v2524 = vsel %vm2510, %v2523, -inf
        %2525 = vmax.xlane.f32.xlu0 %v2524
        %v2526 = vpop.xlane.xlu0 %2525
        %v2527 = vsub.f32 %v2523, %v2526
        %v2528 = vmul.f32 %v2527, 1.442695
        %v2529 = vpow.pop %v2528
        %v2530 = vsel %vm2510, %v2529, 0.0
        %2531 = vadd.xlane.f32.xlu0 %v2530
        %v2532 = vpop.xlane.xlu0 %2531
        %v2533 = vrcp.pop %v2532
        %v2534 = vmul.f32 %v2529, %v2533
        %v2535 = vpack.c.bf16 %v2534, %v2534
        %v2536 = vpack.c.bf16 %v2236, %v2236
        %v2538 = vsel %vm2510, %v2535, 0
        %vm2540 = vcmask 1043456
        %v2542 = vsel %vm2540, %v2536, 0
        %2544 = vmatprep.subr.bf16.mxu0 0
        %2545 = vmatpush1.bf16.msra.mxu0 0
        %2546 = vmatprep.subr.bf16.mxu0 0
        %2547 = vmatpush1.bf16.msra.mxu0 0
        %2548 = vmatprep.subr.bf16.mxu0 0
        %2549 = vmatpush1.bf16.msra.mxu0 0
        %2550 = vmatprep.subr.bf16.mxu0 0
        %2551 = vmatpush1.bf16.msra.mxu0 0
        %2552 = vmatprep.subr.bf16.mxu0 0
        %2553 = vmatpush1.bf16.msra.mxu0 0
        %2554 = vmatprep.subr.bf16.mxu0 0
        %2555 = vmatpush1.bf16.msra.mxu0 0
        %2556 = vmatprep.subr.bf16.mxu0 0
        %2557 = vmatpush1.bf16.msra.mxu0 0
        %2558 = vmatprep.subr.bf16.mxu0 0
        %2559 = vmatpush1.bf16.msra.mxu0 %v2542
        %2560 = vmatprep.subr.bf16.mxu0 0
        %2561 = vmatpush2.bf16.msra.mxu0 0
        %2562 = vmatprep.subr.bf16.mxu0 0
        %2563 = vmatpush2.bf16.msra.mxu0 0
        %2564 = vmatprep.subr.bf16.mxu0 0
        %2565 = vmatpush2.bf16.msra.mxu0 0
        %2566 = vmatprep.subr.bf16.mxu0 0
        %2567 = vmatpush2.bf16.msra.mxu0 0
        %2568 = vmatprep.subr.bf16.mxu0 0
        %2569 = vmatpush2.bf16.msra.mxu0 0
        %2570 = vmatprep.subr.bf16.mxu0 0
        %2571 = vmatpush2.bf16.msra.mxu0 0
        %2572 = vmatprep.subr.bf16.mxu0 0
        %2573 = vmatpush2.bf16.msra.mxu0 0
        %2574 = vmatprep.subr.bf16.mxu0 0
        %2575 = vmatpush2.bf16.msra.mxu0 0
        %2576 = vmatprep.mubr.bf16.mxu0 0
        %2577 = vmatmul.mubr.bf16.gmra.mxu0 %v2538
        %v2578 = vpop.f32.mrf.mxu0
        %v2579 = vadd.f32 0.0, %v2578
        %v2580 = vpop.f32.mrf.mxu0
        %v2581 = vpop.f32.mrf.mxu0
        %v2582 = vpop.f32.mrf.mxu0
        %2583 = vdwg.mxu0
        %v2584 = vld [vmem:[%s11] sm:$0xf]
        %v2585 = vld [vmem:[%s11 + $0x4] sm:$0xf]
        %v2586 = vld [vmem:[%s11 + $0x8] sm:$0xf]
        %v2587 = vld [vmem:[%s11 + $0xc] sm:$0xf]
        %v2588 = vpack.c.bf16 %v2579, %v2579
        %v2593 = vunpack.c.l.b16 %v2584
        %v2594 = vunpack.c.l.b16 %v2585
        %v2595 = vunpack.c.l.b16 %v2586
        %v2596 = vunpack.c.l.b16 %v2587
        %v2597 = vpack.c.b16 %v2594, %v2593
        %v2598 = vpack.c.b16 %v2596, %v2595
        %v2602 = vsel %vm1094, %v2588, 0
        %2604 = vmatprep.subr.bf16.mxu0 0
        %2605 = vmatpush1.bf16.msra.mxu0 0
        %2606 = vmatprep.subr.bf16.mxu0 0
        %2607 = vmatpush1.bf16.msra.mxu0 0
        %2608 = vmatprep.subr.bf16.mxu0 0
        %2609 = vmatpush1.bf16.msra.mxu0 0
        %2610 = vmatprep.subr.bf16.mxu0 0
        %2611 = vmatpush1.bf16.msra.mxu0 0
        %2612 = vmatprep.subr.bf16.mxu0 0
        %2613 = vmatpush1.bf16.msra.mxu0 0
        %2614 = vmatprep.subr.bf16.mxu0 0
        %2615 = vmatpush1.bf16.msra.mxu0 0
        %2616 = vmatprep.subr.bf16.mxu0 0
        %2617 = vmatpush1.bf16.msra.mxu0 %v2598
        %2618 = vmatprep.subr.bf16.mxu0 0
        %2619 = vmatpush1.bf16.msra.mxu0 %v2597
        %2620 = vmatprep.subr.bf16.mxu0 0
        %2621 = vmatpush2.bf16.msra.mxu0 0
        %2622 = vmatprep.subr.bf16.mxu0 0
        %2623 = vmatpush2.bf16.msra.mxu0 0
        %2624 = vmatprep.subr.bf16.mxu0 0
        %2625 = vmatpush2.bf16.msra.mxu0 0
        %2626 = vmatprep.subr.bf16.mxu0 0
        %2627 = vmatpush2.bf16.msra.mxu0 0
        %2628 = vmatprep.subr.bf16.mxu0 0
        %2629 = vmatpush2.bf16.msra.mxu0 0
        %2630 = vmatprep.subr.bf16.mxu0 0
        %2631 = vmatpush2.bf16.msra.mxu0 0
        %2632 = vmatprep.subr.bf16.mxu0 0
        %2633 = vmatpush2.bf16.msra.mxu0 0
        %2634 = vmatprep.subr.bf16.mxu0 0
        %2635 = vmatpush2.bf16.msra.mxu0 0
        %2636 = vmatprep.mubr.bf16.mxu0 0
        %2637 = vmatmul.mubr.bf16.gmra.mxu0 %v2602
        %v2638 = vpop.f32.mrf.mxu0
        %v2639 = vadd.f32 0.0, %v2638
        %v2640 = vpop.f32.mrf.mxu0
        %v2641 = vpop.f32.mrf.mxu0
        %v2642 = vpop.f32.mrf.mxu0
        %2643 = vdwg.mxu0
        %v2644 = vmax.f32 %v2639, 0.0
        %v2645 = vpack.c.bf16 %v2461, %v2461
        %v2647 = vsel %vm2540, %v2645, 0
        %2649 = vmatprep.subr.bf16.mxu0 0
        %2650 = vmatpush1.bf16.msra.mxu0 0
        %2651 = vmatprep.subr.bf16.mxu0 0
        %2652 = vmatpush1.bf16.msra.mxu0 0
        %2653 = vmatprep.subr.bf16.mxu0 0
        %2654 = vmatpush1.bf16.msra.mxu0 0
        %2655 = vmatprep.subr.bf16.mxu0 0
        %2656 = vmatpush1.bf16.msra.mxu0 0
        %2657 = vmatprep.subr.bf16.mxu0 0
        %2658 = vmatpush1.bf16.msra.mxu0 0
        %2659 = vmatprep.subr.bf16.mxu0 0
        %2660 = vmatpush1.bf16.msra.mxu0 0
        %2661 = vmatprep.subr.bf16.mxu0 0
        %2662 = vmatpush1.bf16.msra.mxu0 0
        %2663 = vmatprep.subr.bf16.mxu0 0
        %2664 = vmatpush1.bf16.msra.mxu0 %v2647
        %2665 = vmatprep.subr.bf16.mxu0 0
        %2666 = vmatpush2.bf16.msra.mxu0 0
        %2667 = vmatprep.subr.bf16.mxu0 0
        %2668 = vmatpush2.bf16.msra.mxu0 0
        %2669 = vmatprep.subr.bf16.mxu0 0
        %2670 = vmatpush2.bf16.msra.mxu0 0
        %2671 = vmatprep.subr.bf16.mxu0 0
        %2672 = vmatpush2.bf16.msra.mxu0 0
        %2673 = vmatprep.subr.bf16.mxu0 0
        %2674 = vmatpush2.bf16.msra.mxu0 0
        %2675 = vmatprep.subr.bf16.mxu0 0
        %2676 = vmatpush2.bf16.msra.mxu0 0
        %2677 = vmatprep.subr.bf16.mxu0 0
        %2678 = vmatpush2.bf16.msra.mxu0 0
        %2679 = vmatprep.subr.bf16.mxu0 0
        %2680 = vmatpush2.bf16.msra.mxu0 0
        %2681 = vmatprep.mubr.bf16.mxu0 0
        %2682 = vmatmul.mubr.bf16.gmra.mxu0 %v2538
        %v2683 = vpop.f32.mrf.mxu0
        %v2684 = vadd.f32 0.0, %v2683
        %v2685 = vpop.f32.mrf.mxu0
        %v2686 = vpop.f32.mrf.mxu0
        %v2687 = vpop.f32.mrf.mxu0
        %2688 = vdwg.mxu0
        %2689 = vxpose.xlu0.c.b16.start [1/8] %v2535, 128
        %2690 = vxpose.xlu0.c.b16.cont [2/8] 0, 128
        %2691 = vxpose.xlu0.c.b16.cont [3/8] 0, 128
        %2692 = vxpose.xlu0.c.b16.cont [4/8] 0, 128
        %2693 = vxpose.xlu0.c.b16.cont [5/8] 0, 128
        %2694 = vxpose.xlu0.c.b16.cont [6/8] 0, 128
        %2695 = vxpose.xlu0.c.b16.cont [7/8] 0, 128
        %2696 = vxpose.xlu0.c.b16.end [8/8] 0, 128
        %v2697 = vpop.trf.xlu0
        %v2698 = vpop.trf.xlu0
        %v2699 = vpop.trf.xlu0
        %v2700 = vpop.trf.xlu0
        %v2701 = vpop.trf.xlu0
        %v2702 = vpop.trf.xlu0
        %v2703 = vpop.trf.xlu0
        %v2704 = vpop.trf.xlu0
        %v2706 = vsel %vm2510, %v2697, 0
        %2708 = vmatprep.subr.bf16.mxu0 0
        %2709 = vmatpush1.bf16.msra.mxu0 0
        %2710 = vmatprep.subr.bf16.mxu0 0
        %2711 = vmatpush1.bf16.msra.mxu0 0
        %2712 = vmatprep.subr.bf16.mxu0 0
        %2713 = vmatpush1.bf16.msra.mxu0 0
        %2714 = vmatprep.subr.bf16.mxu0 0
        %2715 = vmatpush1.bf16.msra.mxu0 0
        %2716 = vmatprep.subr.bf16.mxu0 0
        %2717 = vmatpush1.bf16.msra.mxu0 0
        %2718 = vmatprep.subr.bf16.mxu0 0
        %2719 = vmatpush1.bf16.msra.mxu0 0
        %2720 = vmatprep.subr.bf16.mxu0 0
        %2721 = vmatpush1.bf16.msra.mxu0 0
        %2722 = vmatprep.subr.bf16.mxu0 0
        %2723 = vmatpush1.bf16.msra.mxu0 %v2647
        %2724 = vmatprep.subr.bf16.mxu0 0
        %2725 = vmatpush2.bf16.msra.mxu0 0
        %2726 = vmatprep.subr.bf16.mxu0 0
        %2727 = vmatpush2.bf16.msra.mxu0 0
        %2728 = vmatprep.subr.bf16.mxu0 0
        %2729 = vmatpush2.bf16.msra.mxu0 0
        %2730 = vmatprep.subr.bf16.mxu0 0
        %2731 = vmatpush2.bf16.msra.mxu0 0
        %2732 = vmatprep.subr.bf16.mxu0 0
        %2733 = vmatpush2.bf16.msra.mxu0 0
        %2734 = vmatprep.subr.bf16.mxu0 0
        %2735 = vmatpush2.bf16.msra.mxu0 0
        %2736 = vmatprep.subr.bf16.mxu0 0
        %2737 = vmatpush2.bf16.msra.mxu0 0
        %2738 = vmatprep.subr.bf16.mxu0 0
        %2739 = vmatpush2.bf16.msra.mxu0 0
        %2740 = vmatprep.mubr.bf16.mxu0 0
        %2741 = vmatmul.mubr.bf16.gmra.mxu0 %v2706
        %v2742 = vpop.f32.mrf.mxu0
        %v2743 = vadd.f32 0.0, %v2742
        %v2744 = vpop.f32.mrf.mxu0
        %v2745 = vpop.f32.mrf.mxu0
        %v2746 = vpop.f32.mrf.mxu0
        %2747 = vdwg.mxu0
        %v2748 = vld [vmem:[%s13] sm:$0xf]
        %v2749 = vld [vmem:[%s13 + $0x4] sm:$0xf]
        %v2750 = vld [vmem:[%s13 + $0x8] sm:$0xf]
        %v2751 = vld [vmem:[%s13 + $0xc] sm:$0xf]
        %v2752 = vld [vmem:[%s13 + $0x10] sm:$0xf]
        %v2753 = vld [vmem:[%s13 + $0x14] sm:$0xf]
        %v2754 = vld [vmem:[%s13 + $0x18] sm:$0xf]
        %v2755 = vld [vmem:[%s13 + $0x1c] sm:$0xf]
        %v2756 = vld [vmem:[%s13 + $0x20] sm:$0xf]
        %v2757 = vld [vmem:[%s13 + $0x24] sm:$0xf]
        %v2758 = vld [vmem:[%s13 + $0x28] sm:$0xf]
        %v2759 = vld [vmem:[%s13 + $0x2c] sm:$0xf]
        %v2760 = vld [vmem:[%s13 + $0x30] sm:$0xf]
        %v2761 = vld [vmem:[%s13 + $0x34] sm:$0xf]
        %v2762 = vld [vmem:[%s13 + $0x38] sm:$0xf]
        %v2763 = vld [vmem:[%s13 + $0x3c] sm:$0xf]
        %v2764 = vpack.c.bf16 %v2684, %v2684
        %v2765 = vld [vmem:[%s14] sm:$0xf]
        %v2766 = vld [vmem:[%s14 + $0x4] sm:$0xf]
        %v2767 = vld [vmem:[%s14 + $0x8] sm:$0xf]
        %v2768 = vld [vmem:[%s14 + $0xc] sm:$0xf]
        %v2769 = vld [vmem:[%s14 + $0x10] sm:$0xf]
        %v2770 = vld [vmem:[%s14 + $0x14] sm:$0xf]
        %v2771 = vld [vmem:[%s14 + $0x18] sm:$0xf]
        %v2772 = vld [vmem:[%s14 + $0x1c] sm:$0xf]
        %v2773 = vld [vmem:[%s14 + $0x20] sm:$0xf]
        %v2774 = vld [vmem:[%s14 + $0x24] sm:$0xf]
        %v2775 = vld [vmem:[%s14 + $0x28] sm:$0xf]
        %v2776 = vld [vmem:[%s14 + $0x2c] sm:$0xf]
        %v2777 = vld [vmem:[%s14 + $0x30] sm:$0xf]
        %v2778 = vld [vmem:[%s14 + $0x34] sm:$0xf]
        %v2779 = vld [vmem:[%s14 + $0x38] sm:$0xf]
        %v2780 = vld [vmem:[%s14 + $0x3c] sm:$0xf]
        %v2781 = vpack.c.bf16 %v2743, %v2743
        %v2798 = vunpack.c.l.b16 %v2765
        %v2799 = vunpack.c.l.b16 %v2766
        %v2800 = vunpack.c.l.b16 %v2767
        %v2801 = vunpack.c.l.b16 %v2768
        %v2802 = vunpack.c.l.b16 %v2769
        %v2803 = vunpack.c.l.b16 %v2770
        %v2804 = vunpack.c.l.b16 %v2771
        %v2805 = vunpack.c.l.b16 %v2772
        %v2806 = vunpack.c.l.b16 %v2773
        %v2807 = vunpack.c.l.b16 %v2774
        %v2808 = vunpack.c.l.b16 %v2775
        %v2809 = vunpack.c.l.b16 %v2776
        %v2810 = vunpack.c.l.b16 %v2777
        %v2811 = vunpack.c.l.b16 %v2778
        %v2812 = vunpack.c.l.b16 %v2779
        %v2813 = vunpack.c.l.b16 %v2780
        %v2814 = vpack.c.b16 %v2799, %v2798
        %v2815 = vpack.c.b16 %v2801, %v2800
        %v2816 = vpack.c.b16 %v2803, %v2802
        %v2817 = vpack.c.b16 %v2805, %v2804
        %v2818 = vpack.c.b16 %v2807, %v2806
        %v2819 = vpack.c.b16 %v2809, %v2808
        %v2820 = vpack.c.b16 %v2811, %v2810
        %v2821 = vpack.c.b16 %v2813, %v2812
        %2830 = vmatprep.subr.bf16.mxu0 0
        %2831 = vmatpush1.bf16.msra.mxu0 %v2821
        %2832 = vmatprep.subr.bf16.mxu0 0
        %2833 = vmatpush1.bf16.msra.mxu0 %v2820
        %2834 = vmatprep.subr.bf16.mxu0 0
        %2835 = vmatpush1.bf16.msra.mxu0 %v2819
        %2836 = vmatprep.subr.bf16.mxu0 0
        %2837 = vmatpush1.bf16.msra.mxu0 %v2818
        %2838 = vmatprep.subr.bf16.mxu0 0
        %2839 = vmatpush1.bf16.msra.mxu0 %v2817
        %2840 = vmatprep.subr.bf16.mxu0 0
        %2841 = vmatpush1.bf16.msra.mxu0 %v2816
        %2842 = vmatprep.subr.bf16.mxu0 0
        %2843 = vmatpush1.bf16.msra.mxu0 %v2815
        %2844 = vmatprep.subr.bf16.mxu0 0
        %2845 = vmatpush1.bf16.msra.mxu0 %v2814
        %2846 = vmatprep.subr.bf16.mxu0 0
        %2847 = vmatpush2.bf16.msra.mxu0 0
        %2848 = vmatprep.subr.bf16.mxu0 0
        %2849 = vmatpush2.bf16.msra.mxu0 0
        %2850 = vmatprep.subr.bf16.mxu0 0
        %2851 = vmatpush2.bf16.msra.mxu0 0
        %2852 = vmatprep.subr.bf16.mxu0 0
        %2853 = vmatpush2.bf16.msra.mxu0 0
        %2854 = vmatprep.subr.bf16.mxu0 0
        %2855 = vmatpush2.bf16.msra.mxu0 0
        %2856 = vmatprep.subr.bf16.mxu0 0
        %2857 = vmatpush2.bf16.msra.mxu0 0
        %2858 = vmatprep.subr.bf16.mxu0 0
        %2859 = vmatpush2.bf16.msra.mxu0 0
        %2860 = vmatprep.subr.bf16.mxu0 0
        %2861 = vmatpush2.bf16.msra.mxu0 0
        %2862 = vmatprep.mubr.bf16.mxu0 0
        %2863 = vmatmul.mubr.bf16.gmra.mxu0 %v2781
        %v2864 = vpop.f32.mrf.mxu0
        %v2865 = vadd.f32 0.0, %v2864
        %v2866 = vpop.f32.mrf.mxu0
        %v2867 = vpop.f32.mrf.mxu0
        %v2868 = vpop.f32.mrf.mxu0
        %2869 = vdwg.mxu0
        %v2886 = vunpack.c.l.b16 %v2748
        %v2887 = vunpack.c.l.b16 %v2749
        %v2888 = vunpack.c.l.b16 %v2750
        %v2889 = vunpack.c.l.b16 %v2751
        %v2890 = vunpack.c.l.b16 %v2752
        %v2891 = vunpack.c.l.b16 %v2753
        %v2892 = vunpack.c.l.b16 %v2754
        %v2893 = vunpack.c.l.b16 %v2755
        %v2894 = vunpack.c.l.b16 %v2756
        %v2895 = vunpack.c.l.b16 %v2757
        %v2896 = vunpack.c.l.b16 %v2758
        %v2897 = vunpack.c.l.b16 %v2759
        %v2898 = vunpack.c.l.b16 %v2760
        %v2899 = vunpack.c.l.b16 %v2761
        %v2900 = vunpack.c.l.b16 %v2762
        %v2901 = vunpack.c.l.b16 %v2763
        %v2902 = vpack.c.b16 %v2887, %v2886
        %v2903 = vpack.c.b16 %v2889, %v2888
        %v2904 = vpack.c.b16 %v2891, %v2890
        %v2905 = vpack.c.b16 %v2893, %v2892
        %v2906 = vpack.c.b16 %v2895, %v2894
        %v2907 = vpack.c.b16 %v2897, %v2896
        %v2908 = vpack.c.b16 %v2899, %v2898
        %v2909 = vpack.c.b16 %v2901, %v2900
        %2918 = vmatprep.subr.bf16.mxu0 0
        %2919 = vmatpush1.bf16.msra.mxu0 %v2909
        %2920 = vmatprep.subr.bf16.mxu0 0
        %2921 = vmatpush1.bf16.msra.mxu0 %v2908
        %2922 = vmatprep.subr.bf16.mxu0 0
        %2923 = vmatpush1.bf16.msra.mxu0 %v2907
        %2924 = vmatprep.subr.bf16.mxu0 0
        %2925 = vmatpush1.bf16.msra.mxu0 %v2906
        %2926 = vmatprep.subr.bf16.mxu0 0
        %2927 = vmatpush1.bf16.msra.mxu0 %v2905
        %2928 = vmatprep.subr.bf16.mxu0 0
        %2929 = vmatpush1.bf16.msra.mxu0 %v2904
        %2930 = vmatprep.subr.bf16.mxu0 0
        %2931 = vmatpush1.bf16.msra.mxu0 %v2903
        %2932 = vmatprep.subr.bf16.mxu0 0
        %2933 = vmatpush1.bf16.msra.mxu0 %v2902
        %2934 = vmatprep.subr.bf16.mxu0 0
        %2935 = vmatpush2.bf16.msra.mxu0 0
        %2936 = vmatprep.subr.bf16.mxu0 0
        %2937 = vmatpush2.bf16.msra.mxu0 0
        %2938 = vmatprep.subr.bf16.mxu0 0
        %2939 = vmatpush2.bf16.msra.mxu0 0
        %2940 = vmatprep.subr.bf16.mxu0 0
        %2941 = vmatpush2.bf16.msra.mxu0 0
        %2942 = vmatprep.subr.bf16.mxu0 0
        %2943 = vmatpush2.bf16.msra.mxu0 0
        %2944 = vmatprep.subr.bf16.mxu0 0
        %2945 = vmatpush2.bf16.msra.mxu0 0
        %2946 = vmatprep.subr.bf16.mxu0 0
        %2947 = vmatpush2.bf16.msra.mxu0 0
        %2948 = vmatprep.subr.bf16.mxu0 0
        %2949 = vmatpush2.bf16.msra.mxu0 0
        %2950 = vmatprep.mubr.bf16.mxu0 0
        %2951 = vmatmul.mubr.bf16.gmra.mxu0 %v2764
        %v2952 = vpop.f32.mrf.mxu0
        %v2953 = vadd.f32 %v2865, %v2952
        %v2954 = vpop.f32.mrf.mxu0
        %v2955 = vpop.f32.mrf.mxu0
        %v2956 = vpop.f32.mrf.mxu0
        %2957 = vdwg.mxu0
        %v2958 = vadd.f32 %v2953, %v2461
        %v2959 = vmax.f32 %v2958, 0.0
        %v2960 = vld [vmem:[%s15] sm:$0xff]
        %v2961 = vld [vmem:[%s15 + $0x8] sm:$0xff]
        %v2962 = vld [vmem:[%s15 + $0x10] sm:$0xff]
        %v2963 = vld [vmem:[%s15 + $0x18] sm:$0xff]
        %v2964 = vld [vmem:[%s15 + $0x20] sm:$0xff]
        %v2965 = vld [vmem:[%s15 + $0x28] sm:$0xff]
        %v2966 = vld [vmem:[%s15 + $0x30] sm:$0xff]
        %v2967 = vld [vmem:[%s15 + $0x38] sm:$0xff]
        %v2968 = vld [vmem:[%s15 + $0x40] sm:$0xff]
        %v2969 = vld [vmem:[%s15 + $0x48] sm:$0xff]
        %v2970 = vld [vmem:[%s15 + $0x50] sm:$0xff]
        %v2971 = vld [vmem:[%s15 + $0x58] sm:$0xff]
        %v2972 = vld [vmem:[%s15 + $0x60] sm:$0xff]
        %v2973 = vld [vmem:[%s15 + $0x68] sm:$0xff]
        %v2974 = vld [vmem:[%s15 + $0x70] sm:$0xff]
        %v2975 = vld [vmem:[%s15 + $0x78] sm:$0xff]
        %v2976 = vpack.c.bf16 %v2959, %v2959
        %v2977 = vld [vmem:[%s16] sm:$0xff]
        %v2978 = vld [vmem:[%s16 + $0x8] sm:$0xff]
        %v2979 = vld [vmem:[%s16 + $0x10] sm:$0xff]
        %v2980 = vld [vmem:[%s16 + $0x18] sm:$0xff]
        %v2985 = vunpack.c.l.b16 %v2977
        %v2986 = vunpack.c.h.b16 %v2977
        %v2987 = vunpack.c.l.b16 %v2978
        %v2988 = vunpack.c.h.b16 %v2978
        %v2989 = vunpack.c.l.b16 %v2979
        %v2990 = vunpack.c.h.b16 %v2979
        %v2991 = vunpack.c.l.b16 %v2980
        %v2992 = vunpack.c.h.b16 %v2980
        %v2993 = vpack.c.b16 %v2987, %v2985
        %v2994 = vpack.c.b16 %v2988, %v2986
        %v2995 = vpack.c.b16 %v2991, %v2989
        %v2996 = vpack.c.b16 %v2992, %v2990
        %3001 = vmatprep.subr.bf16.mxu0 0
        %3002 = vmatpush1.bf16.msra.mxu0 0
        %3003 = vmatprep.subr.bf16.mxu0 0
        %3004 = vmatpush1.bf16.msra.mxu0 0
        %3005 = vmatprep.subr.bf16.mxu0 0
        %3006 = vmatpush1.bf16.msra.mxu0 0
        %3007 = vmatprep.subr.bf16.mxu0 0
        %3008 = vmatpush1.bf16.msra.mxu0 0
        %3009 = vmatprep.subr.bf16.mxu0 0
        %3010 = vmatpush1.bf16.msra.mxu0 0
        %3011 = vmatprep.subr.bf16.mxu0 0
        %3012 = vmatpush1.bf16.msra.mxu0 0
        %3013 = vmatprep.subr.bf16.mxu0 %v2996
        %3014 = vmatpush1.bf16.msra.mxu0 %v2995
        %3015 = vmatprep.subr.bf16.mxu0 %v2994
        %3016 = vmatpush1.bf16.msra.mxu0 %v2993
        %3017 = vmatprep.subr.bf16.mxu0 0
        %3018 = vmatpush2.bf16.msra.mxu0 0
        %3019 = vmatprep.subr.bf16.mxu0 0
        %3020 = vmatpush2.bf16.msra.mxu0 0
        %3021 = vmatprep.subr.bf16.mxu0 0
        %3022 = vmatpush2.bf16.msra.mxu0 0
        %3023 = vmatprep.subr.bf16.mxu0 0
        %3024 = vmatpush2.bf16.msra.mxu0 0
        %3025 = vmatprep.subr.bf16.mxu0 0
        %3026 = vmatpush2.bf16.msra.mxu0 0
        %3027 = vmatprep.subr.bf16.mxu0 0
        %3028 = vmatpush2.bf16.msra.mxu0 0
        %3029 = vmatprep.subr.bf16.mxu0 0
        %3030 = vmatpush2.bf16.msra.mxu0 0
        %3031 = vmatprep.subr.bf16.mxu0 0
        %3032 = vmatpush2.bf16.msra.mxu0 0
        %3033 = vmatprep.mubr.bf16.mxu0 0
        %3034 = vmatmul.mubr.bf16.gmra.mxu0 %v1912
        %v3035 = vpop.f32.mrf.mxu0
        %v3036 = vadd.f32 0.0, %v3035
        %v3037 = vpop.f32.mrf.mxu0
        %v3038 = vadd.f32 0.0, %v3037
        %v3039 = vpop.f32.mrf.mxu0
        %v3040 = vpop.f32.mrf.mxu0
        %3041 = vdwg.mxu0
        %v3058 = vunpack.c.l.b16 %v2960
        %v3059 = vunpack.c.h.b16 %v2960
        %v3060 = vunpack.c.l.b16 %v2961
        %v3061 = vunpack.c.h.b16 %v2961
        %v3062 = vunpack.c.l.b16 %v2962
        %v3063 = vunpack.c.h.b16 %v2962
        %v3064 = vunpack.c.l.b16 %v2963
        %v3065 = vunpack.c.h.b16 %v2963
        %v3066 = vunpack.c.l.b16 %v2964
        %v3067 = vunpack.c.h.b16 %v2964
        %v3068 = vunpack.c.l.b16 %v2965
        %v3069 = vunpack.c.h.b16 %v2965
        %v3070 = vunpack.c.l.b16 %v2966
        %v3071 = vunpack.c.h.b16 %v2966
        %v3072 = vunpack.c.l.b16 %v2967
        %v3073 = vunpack.c.h.b16 %v2967
        %v3074 = vunpack.c.l.b16 %v2968
        %v3075 = vunpack.c.h.b16 %v2968
        %v3076 = vunpack.c.l.b16 %v2969
        %v3077 = vunpack.c.h.b16 %v2969
        %v3078 = vunpack.c.l.b16 %v2970
        %v3079 = vunpack.c.h.b16 %v2970
        %v3080 = vunpack.c.l.b16 %v2971
        %v3081 = vunpack.c.h.b16 %v2971
        %v3082 = vunpack.c.l.b16 %v2972
        %v3083 = vunpack.c.h.b16 %v2972
        %v3084 = vunpack.c.l.b16 %v2973
        %v3085 = vunpack.c.h.b16 %v2973
        %v3086 = vunpack.c.l.b16 %v2974
        %v3087 = vunpack.c.h.b16 %v2974
        %v3088 = vunpack.c.l.b16 %v2975
        %v3089 = vunpack.c.h.b16 %v2975
        %v3090 = vpack.c.b16 %v3060, %v3058
        %v3091 = vpack.c.b16 %v3061, %v3059
        %v3092 = vpack.c.b16 %v3064, %v3062
        %v3093 = vpack.c.b16 %v3065, %v3063
        %v3094 = vpack.c.b16 %v3068, %v3066
        %v3095 = vpack.c.b16 %v3069, %v3067
        %v3096 = vpack.c.b16 %v3072, %v3070
        %v3097 = vpack.c.b16 %v3073, %v3071
        %v3098 = vpack.c.b16 %v3076, %v3074
        %v3099 = vpack.c.b16 %v3077, %v3075
        %v3100 = vpack.c.b16 %v3080, %v3078
        %v3101 = vpack.c.b16 %v3081, %v3079
        %v3102 = vpack.c.b16 %v3084, %v3082
        %v3103 = vpack.c.b16 %v3085, %v3083
        %v3104 = vpack.c.b16 %v3088, %v3086
        %v3105 = vpack.c.b16 %v3089, %v3087
        %3122 = vmatprep.subr.bf16.mxu0 %v3105
        %3123 = vmatpush1.bf16.msra.mxu0 %v3104
        %3124 = vmatprep.subr.bf16.mxu0 %v3103
        %3125 = vmatpush1.bf16.msra.mxu0 %v3102
        %3126 = vmatprep.subr.bf16.mxu0 %v3101
        %3127 = vmatpush1.bf16.msra.mxu0 %v3100
        %3128 = vmatprep.subr.bf16.mxu0 %v3099
        %3129 = vmatpush1.bf16.msra.mxu0 %v3098
        %3130 = vmatprep.subr.bf16.mxu0 %v3097
        %3131 = vmatpush1.bf16.msra.mxu0 %v3096
        %3132 = vmatprep.subr.bf16.mxu0 %v3095
        %3133 = vmatpush1.bf16.msra.mxu0 %v3094
        %3134 = vmatprep.subr.bf16.mxu0 %v3093
        %3135 = vmatpush1.bf16.msra.mxu0 %v3092
        %3136 = vmatprep.subr.bf16.mxu0 %v3091
        %3137 = vmatpush1.bf16.msra.mxu0 %v3090
        %3138 = vmatprep.subr.bf16.mxu0 0
        %3139 = vmatpush2.bf16.msra.mxu0 0
        %3140 = vmatprep.subr.bf16.mxu0 0
        %3141 = vmatpush2.bf16.msra.mxu0 0
        %3142 = vmatprep.subr.bf16.mxu0 0
        %3143 = vmatpush2.bf16.msra.mxu0 0
        %3144 = vmatprep.subr.bf16.mxu0 0
        %3145 = vmatpush2.bf16.msra.mxu0 0
        %3146 = vmatprep.subr.bf16.mxu0 0
        %3147 = vmatpush2.bf16.msra.mxu0 0
        %3148 = vmatprep.subr.bf16.mxu0 0
        %3149 = vmatpush2.bf16.msra.mxu0 0
        %3150 = vmatprep.subr.bf16.mxu0 0
        %3151 = vmatpush2.bf16.msra.mxu0 0
        %3152 = vmatprep.subr.bf16.mxu0 0
        %3153 = vmatpush2.bf16.msra.mxu0 0
        %3154 = vmatprep.mubr.bf16.mxu0 0
        %3155 = vmatmul.mubr.bf16.gmra.mxu0 %v2976
        %v3156 = vpop.f32.mrf.mxu0
        %v3157 = vadd.f32 %v3036, %v3156
        %v3158 = vpop.f32.mrf.mxu0
        %v3159 = vadd.f32 %v3038, %v3158
        %v3160 = vpop.f32.mrf.mxu0
        %v3161 = vpop.f32.mrf.mxu0
        %3162 = vdwg.mxu0
        %v3163 = vld [vmem:[%s17] sm:$0xff]
        %v3164 = vld [vmem:[%s17 + $0x8] sm:$0xff]
        %v3165 = vld [vmem:[%s17 + $0x10] sm:$0xff]
        %v3166 = vld [vmem:[%s17 + $0x18] sm:$0xff]
        %v3167 = vpack.c.bf16 %v2644, %v2644
        %v3172 = vunpack.c.l.b16 %v3163
        %v3173 = vunpack.c.h.b16 %v3163
        %v3174 = vunpack.c.l.b16 %v3164
        %v3175 = vunpack.c.h.b16 %v3164
        %v3176 = vunpack.c.l.b16 %v3165
        %v3177 = vunpack.c.h.b16 %v3165
        %v3178 = vunpack.c.l.b16 %v3166
        %v3179 = vunpack.c.h.b16 %v3166
        %v3180 = vpack.c.b16 %v3174, %v3172
        %v3181 = vpack.c.b16 %v3175, %v3173
        %v3182 = vpack.c.b16 %v3178, %v3176
        %v3183 = vpack.c.b16 %v3179, %v3177
        %v3189 = vsel %vm1094, %v3167, 0
        %3191 = vmatprep.subr.bf16.mxu0 0
        %3192 = vmatpush1.bf16.msra.mxu0 0
        %3193 = vmatprep.subr.bf16.mxu0 0
        %3194 = vmatpush1.bf16.msra.mxu0 0
        %3195 = vmatprep.subr.bf16.mxu0 0
        %3196 = vmatpush1.bf16.msra.mxu0 0
        %3197 = vmatprep.subr.bf16.mxu0 0
        %3198 = vmatpush1.bf16.msra.mxu0 0
        %3199 = vmatprep.subr.bf16.mxu0 0
        %3200 = vmatpush1.bf16.msra.mxu0 0
        %3201 = vmatprep.subr.bf16.mxu0 0
        %3202 = vmatpush1.bf16.msra.mxu0 0
        %3203 = vmatprep.subr.bf16.mxu0 %v3183
        %3204 = vmatpush1.bf16.msra.mxu0 %v3182
        %3205 = vmatprep.subr.bf16.mxu0 %v3181
        %3206 = vmatpush1.bf16.msra.mxu0 %v3180
        %3207 = vmatprep.subr.bf16.mxu0 0
        %3208 = vmatpush2.bf16.msra.mxu0 0
        %3209 = vmatprep.subr.bf16.mxu0 0
        %3210 = vmatpush2.bf16.msra.mxu0 0
        %3211 = vmatprep.subr.bf16.mxu0 0
        %3212 = vmatpush2.bf16.msra.mxu0 0
        %3213 = vmatprep.subr.bf16.mxu0 0
        %3214 = vmatpush2.bf16.msra.mxu0 0
        %3215 = vmatprep.subr.bf16.mxu0 0
        %3216 = vmatpush2.bf16.msra.mxu0 0
        %3217 = vmatprep.subr.bf16.mxu0 0
        %3218 = vmatpush2.bf16.msra.mxu0 0
        %3219 = vmatprep.subr.bf16.mxu0 0
        %3220 = vmatpush2.bf16.msra.mxu0 0
        %3221 = vmatprep.subr.bf16.mxu0 0
        %3222 = vmatpush2.bf16.msra.mxu0 0
        %3223 = vmatprep.mubr.bf16.mxu0 0
        %3224 = vmatmul.mubr.bf16.gmra.mxu0 %v3189
        %v3225 = vpop.f32.mrf.mxu0
        %v3226 = vadd.f32 0.0, %v3225
        %v3227 = vpop.f32.mrf.mxu0
        %v3228 = vadd.f32 0.0, %v3227
        %v3229 = vpop.f32.mrf.mxu0
        %v3230 = vpop.f32.mrf.mxu0
        %3231 = vdwg.mxu0
        %v3232 = vadd.f32 %v3157, %v3226
        %v3233 = vadd.f32 %v3159, %v3228
        %v3234 = vld [vmem:[%s18] sm:$0x3]
        %v3236 = vlaneseq
        %v3237 = vshrl.u32 %v3236, 7
        %v3238 = vsub.s32 0, %v3237
        %v3239 = vrot.slane %v3234, %v3238
        %v3240 = vlaneseq
        %v3241 = vshrl.u32 %v3240, 7
        %v3242 = vsub.s32 1, %v3241
        %v3243 = vrot.slane %v3234, %v3242
        %v3246 = vadd.f32 %v3232, %v3239
        %v3247 = vadd.f32 %v3233, %v3243
        %v3248 = vmax.f32 %v3246, 0.0
        %v3249 = vmax.f32 %v3247, 0.0
        %v3250 = vld [vmem:[%s19] sm:$0xf]
        %v3251 = vld [vmem:[%s19 + $0x4] sm:$0xf]
        %v3252 = vld [vmem:[%s19 + $0x8] sm:$0xf]
        %v3253 = vld [vmem:[%s19 + $0xc] sm:$0xf]
        %v3254 = vld [vmem:[%s19 + $0x10] sm:$0xf]
        %v3255 = vld [vmem:[%s19 + $0x14] sm:$0xf]
        %v3256 = vld [vmem:[%s19 + $0x18] sm:$0xf]
        %v3257 = vld [vmem:[%s19 + $0x1c] sm:$0xf]
        %v3258 = vld [vmem:[%s19 + $0x20] sm:$0xf]
        %v3259 = vld [vmem:[%s19 + $0x24] sm:$0xf]
        %v3260 = vld [vmem:[%s19 + $0x28] sm:$0xf]
        %v3261 = vld [vmem:[%s19 + $0x2c] sm:$0xf]
        %v3262 = vld [vmem:[%s19 + $0x30] sm:$0xf]
        %v3263 = vld [vmem:[%s19 + $0x34] sm:$0xf]
        %v3264 = vld [vmem:[%s19 + $0x38] sm:$0xf]
        %v3265 = vld [vmem:[%s19 + $0x3c] sm:$0xf]
        %v3266 = vld [vmem:[%s19 + $0x40] sm:$0xf]
        %v3267 = vld [vmem:[%s19 + $0x44] sm:$0xf]
        %v3268 = vld [vmem:[%s19 + $0x48] sm:$0xf]
        %v3269 = vld [vmem:[%s19 + $0x4c] sm:$0xf]
        %v3270 = vld [vmem:[%s19 + $0x50] sm:$0xf]
        %v3271 = vld [vmem:[%s19 + $0x54] sm:$0xf]
        %v3272 = vld [vmem:[%s19 + $0x58] sm:$0xf]
        %v3273 = vld [vmem:[%s19 + $0x5c] sm:$0xf]
        %v3274 = vpack.c.bf16 %v3248, %v3248
        %v3275 = vpack.c.bf16 %v3249, %v3249
        %v3276 = vld [vmem:[%s20] sm:$0x1]
        %v3278 = vlaneseq
        %v3279 = vshrl.u32 %v3278, 7
        %v3280 = vsub.s32 0, %v3279
        %v3281 = vrot.slane %v3276, %v3280
        %v3307 = vunpack.c.l.b16 %v3250
        %v3308 = vunpack.c.l.b16 %v3251
        %v3309 = vunpack.c.l.b16 %v3252
        %v3310 = vunpack.c.l.b16 %v3253
        %v3311 = vunpack.c.l.b16 %v3254
        %v3312 = vunpack.c.l.b16 %v3255
        %v3313 = vunpack.c.l.b16 %v3256
        %v3314 = vunpack.c.l.b16 %v3257
        %v3315 = vunpack.c.l.b16 %v3258
        %v3316 = vunpack.c.l.b16 %v3259
        %v3317 = vunpack.c.l.b16 %v3260
        %v3318 = vunpack.c.l.b16 %v3261
        %v3319 = vunpack.c.l.b16 %v3262
        %v3320 = vunpack.c.l.b16 %v3263
        %v3321 = vunpack.c.l.b16 %v3264
        %v3322 = vunpack.c.l.b16 %v3265
        %v3323 = vunpack.c.l.b16 %v3266
        %v3324 = vunpack.c.l.b16 %v3267
        %v3325 = vunpack.c.l.b16 %v3268
        %v3326 = vunpack.c.l.b16 %v3269
        %v3327 = vunpack.c.l.b16 %v3270
        %v3328 = vunpack.c.l.b16 %v3271
        %v3329 = vunpack.c.l.b16 %v3272
        %v3330 = vunpack.c.l.b16 %v3273
        %v3331 = vpack.c.b16 %v3308, %v3307
        %v3332 = vpack.c.b16 %v3310, %v3309
        %v3333 = vpack.c.b16 %v3312, %v3311
        %v3334 = vpack.c.b16 %v3314, %v3313
        %v3335 = vpack.c.b16 %v3316, %v3315
        %v3336 = vpack.c.b16 %v3318, %v3317
        %v3337 = vpack.c.b16 %v3320, %v3319
        %v3338 = vpack.c.b16 %v3322, %v3321
        %v3339 = vpack.c.b16 %v3324, %v3323
        %v3340 = vpack.c.b16 %v3326, %v3325
        %v3341 = vpack.c.b16 %v3328, %v3327
        %v3342 = vpack.c.b16 %v3330, %v3329
        %vm3355 = vcmask 523264
        %v3357 = vsel %vm3355, %v3275, 0
        %3359 = vmatprep.subr.bf16.mxu0 0
        %3360 = vmatpush1.bf16.msra.mxu0 %v3338
        %3361 = vmatprep.subr.bf16.mxu0 0
        %3362 = vmatpush1.bf16.msra.mxu0 %v3337
        %3363 = vmatprep.subr.bf16.mxu0 0
        %3364 = vmatpush1.bf16.msra.mxu0 %v3336
        %3365 = vmatprep.subr.bf16.mxu0 0
        %3366 = vmatpush1.bf16.msra.mxu0 %v3335
        %3367 = vmatprep.subr.bf16.mxu0 0
        %3368 = vmatpush1.bf16.msra.mxu0 %v3334
        %3369 = vmatprep.subr.bf16.mxu0 0
        %3370 = vmatpush1.bf16.msra.mxu0 %v3333
        %3371 = vmatprep.subr.bf16.mxu0 0
        %3372 = vmatpush1.bf16.msra.mxu0 %v3332
        %3373 = vmatprep.subr.bf16.mxu0 0
        %3374 = vmatpush1.bf16.msra.mxu0 %v3331
        %3375 = vmatprep.subr.bf16.mxu0 0
        %3376 = vmatpush2.bf16.msra.mxu0 0
        %3377 = vmatprep.subr.bf16.mxu0 0
        %3378 = vmatpush2.bf16.msra.mxu0 0
        %3379 = vmatprep.subr.bf16.mxu0 0
        %3380 = vmatpush2.bf16.msra.mxu0 0
        %3381 = vmatprep.subr.bf16.mxu0 0
        %3382 = vmatpush2.bf16.msra.mxu0 0
        %3383 = vmatprep.subr.bf16.mxu0 0
        %3384 = vmatpush2.bf16.msra.mxu0 %v3342
        %3385 = vmatprep.subr.bf16.mxu0 0
        %3386 = vmatpush2.bf16.msra.mxu0 %v3341
        %3387 = vmatprep.subr.bf16.mxu0 0
        %3388 = vmatpush2.bf16.msra.mxu0 %v3340
        %3389 = vmatprep.subr.bf16.mxu0 0
        %3390 = vmatpush2.bf16.msra.mxu0 %v3339
        %3391 = vmatprep.mubr.bf16.mxu0 %v3357
        %3392 = vmatmul.mubr.bf16.gmra.mxu0 %v3274
        %v3393 = vpop.f32.mrf.mxu0
        %v3394 = vadd.f32 %v3281, %v3393
        %v3395 = vpop.f32.mrf.mxu0
        %v3396 = vpop.f32.mrf.mxu0
        %v3397 = vpop.f32.mrf.mxu0
        %3398 = vdwg.mxu0
        %v3399 = vld [vmem:[%s720] sm:$0x1]
        %v3401 = vlaneseq
        %v3402 = vshrl.u32 %v3401, 7
        %v3403 = vsub.s32 0, %v3402
        %v3404 = vrot.slane %v3399, %v3403
        %v3406 = vmul.f32 %v3394, %v3404
        %v3407 = vld [vmem:[%s717] sm:$0x1]
        %v3409 = vlaneseq
        %v3410 = vshrl.u32 %v3409, 7
        %v3411 = vsub.s32 0, %v3410
        %v3412 = vrot.slane %v3407, %v3411
        %v3414 = vadd.f32 %v3406, %v3412
        %3415 = vst [vmem:[%s702] sm:$0xff] %v3414
        %3416 = vst [vmem:[%s709] sm:$0xff] %v2684
        %s3417 = sand.u32 %s504, 1
        %s3418 = scalar_lea.sflag [#allocation3], %s3417
        %s3419 = sand.u32 %s504, 1
        %s3420 = smul.addr %s3419, 8
        %s3421 = scalar_lea.vmem [#allocation2], %s3420
        %s3422 = sand.u32 %s530, 1
        %s3423 = scalar_lea.sflag [#allocation5], %s3422
        %s3424 = sand.u32 %s530, 1
        %s3425 = smul.addr %s3424, 8
        %s3426 = scalar_lea.vmem [#allocation4], %s3425
        // Predicated region
        $region105: #{patchfsl_forward.1} parent=103 // pred_check
          %p3427 = pneg %p514
        $region106: #{patchfsl_forward.1} parent=103 // pred_check_branch
          %3429 = sbr.rel (%p3427) target = $region108
        $region107: #{patchfsl_forward.1} parent=103 // pred_region
          %s3431 = ssub.s32 128, 128
          %3432 = vsyncadd %s3418, %s3431
          %s3433 = smul.addr %s40, 128
          %s3434 = scalar_lea.hbm %s21, %s3433
          %s3436 = sshll.u32 %s3421, 4
          %s3437 = int_to_ptr.vmem [resolvable:$true] %s3436
          %3439 = dma.vmem_to_hbm [thread:$0]  %s3437, 128, %s3434, %s3418
        $region108: #{patchfsl_forward.1} parent=103 // pred_fallthru
          _
        // Predicated region
        $region109: #{patchfsl_forward.1} parent=103 // pred_check
          %p3440 = pneg %p540
        $region110: #{patchfsl_forward.1} parent=103 // pred_check_branch
          %3442 = sbr.rel (%p3440) target = $region112
        $region111: #{patchfsl_forward.1} parent=103 // pred_region
          %s3444 = ssub.s32 128, 128
          %3445 = vsyncadd %s3423, %s3444
          %s3446 = smul.addr %s40, 128
          %s3447 = scalar_lea.hbm %s22, %s3446
          %s3449 = sshll.u32 %s3426, 4
          %s3450 = int_to_ptr.vmem [resolvable:$true] %s3449
          %3452 = dma.vmem_to_hbm [thread:$0]  %s3450, 128, %s3447, %s3423
        $region112: #{patchfsl_forward.1} parent=103 // pred_fallthru
          _
      $region104: #{patchfsl_forward.1} parent=5 // pred_fallthru
        _
      %p3453 = scmp.le.s32.totalorder 2, %s35
      // Predicated region
      $region113: #{patchfsl_forward.1} parent=5 // pred_check
        %p3454 = pneg %p3453
      $region114: #{patchfsl_forward.1} parent=5 // pred_check_branch
        %3456 = sbr.rel (%p3454) target = $region116
      $region115: #{patchfsl_forward.1} parent=5 // pred_region
        %s3457 = ssub.s32 %s35, 2
        // Predicated region
        $region117: #{patchfsl_forward.1} parent=115 // pred_check
          %p3458 = pneg %p520
        $region118: #{patchfsl_forward.1} parent=115 // pred_check_branch
          %3460 = sbr.rel (%p3458) target = $region120
        $region119: #{patchfsl_forward.1} parent=115 // pred_region
          %s3461 = sand.u32 %s505, 1
          %s3462 = scalar_lea.sflag [#allocation3], %s3461
          %s3463 = sand.u32 %s505, 1
          %s3464 = smul.addr %s3463, 8
          %s3465 = scalar_lea.vmem [#allocation2], %s3464
          %3466 = dma.done %s3462, 128
        $region120: #{patchfsl_forward.1} parent=115 // pred_fallthru
          _
        // Predicated region
        $region121: #{patchfsl_forward.1} parent=115 // pred_check
          %p3467 = pneg %p546
        $region122: #{patchfsl_forward.1} parent=115 // pred_check_branch
          %3469 = sbr.rel (%p3467) target = $region124
        $region123: #{patchfsl_forward.1} parent=115 // pred_region
          %s3470 = sand.u32 %s531, 1
          %s3471 = scalar_lea.sflag [#allocation5], %s3470
          %s3472 = sand.u32 %s531, 1
          %s3473 = smul.addr %s3472, 8
          %s3474 = scalar_lea.vmem [#allocation4], %s3473
          %3475 = dma.done %s3471, 128
        $region124: #{patchfsl_forward.1} parent=115 // pred_fallthru
          _
      $region116: #{patchfsl_forward.1} parent=5 // pred_fallthru
        _
    $region6: #{patchfsl_forward.1} parent=1 // loop_footer
      %s39 = sadd.s32 1, %s35
    $region7: #{patchfsl_forward.1} parent=1 // loop_footer_branch
      %34 = sbr.rel target = $region3
    $region8: #{patchfsl_forward.1} parent=1 // loop_exit
      _
    %3476 = vsyncpa [#allocation3], 1
    %s3477 = scalar_lea.sflag [#allocation3], 1
    %3478 = vsyncpa %s3477, 1
    %3479 = vsyncpa [#allocation5], 1
    %s3480 = scalar_lea.sflag [#allocation5], 1
    %3481 = vsyncpa %s3480, 1

</llo_original>
